<compile_context>
chip_gen: v7x
topology: tpu7x:2x2x1
jax: 0.10.0
libtpu: 0.0.40
codegen_flags: <defaults>
</compile_context>

<pallas_src>
import math

import jax
import jax.numpy as jnp
from jax.experimental import pallas as pl
from jax.experimental.pallas import tpu as pltpu

# ---- model hyperparameters (small, but non-trivial) ----
N_HEAD = 4
N_FEAT = 32
SEQ = 16
EPS = 1e-6

BATCH = 32    # total sequences processed per pallas_call
TILE_B = 8    # sequences per grid step


def mha_kernel(q_in_ref, k_in_ref, v_in_ref, mask_ref,
               wq_ref, wk_ref, wv_ref, wp_ref, bp_ref,
               gamma_ref, beta_ref, out_ref):
    TB, S, F = q_in_ref.shape
    H = N_HEAD
    d = F // H

    x_q = q_in_ref[...].reshape(TB * S, F)   # f32, kept for the residual
    x_k = k_in_ref[...].reshape(TB * S, F)
    x_v = v_in_ref[...].reshape(TB * S, F)

    # Projections. Weights were pre-transposed (and w_q pre-scaled by 1/sqrt(d))
    # once at init and stored in bf16; accumulate in f32 on the MXU.
    q = jnp.dot(x_q.astype(jnp.bfloat16), wq_ref[...],
                preferred_element_type=jnp.float32)              # [TB*S, F]
    k = jnp.dot(x_k.astype(jnp.bfloat16), wk_ref[...],
                preferred_element_type=jnp.float32)
    v = jnp.dot(x_v.astype(jnp.bfloat16), wv_ref[...],
                preferred_element_type=jnp.float32)

    def to_heads(x):
        # [TB*S, F] -> [H*TB, S, d]  (head-major batch; leading-axis concat only)
        return jnp.concatenate(
            [x[:, h * d:(h + 1) * d].reshape(TB, S, d) for h in range(H)],
            axis=0).astype(jnp.bfloat16)

    qh, kh, vh = to_heads(q), to_heads(k), to_heads(v)

    # One batched contraction + ONE softmax over all (head, sequence) pairs.
    s = jnp.einsum("bqd,bkd->bqk", qh, kh,
                   preferred_element_type=jnp.float32)           # [H*TB, S, S]
    s = s + mask_ref[...]                                        # [S,S] broadcast
    m = jnp.max(s, axis=-1, keepdims=True)
    p = jnp.exp(s - m)
    p = p * pl.reciprocal(jnp.sum(p, axis=-1, keepdims=True), approx=True)

    head = jnp.einsum("bqk,bkd->bqd", p.astype(jnp.bfloat16), vh,
                      preferred_element_type=jnp.float32)        # [H*TB, S, d]

    # interleave: concatenate heads back along the feature axis -> [TB*S, F]
    head = jnp.concatenate(
        [head[h * TB:(h + 1) * TB] for h in range(H)],
        axis=-1).reshape(TB * S, F)

    # output projection (with bias)
    proj = jnp.dot(head.astype(jnp.bfloat16), wp_ref[...],
                   preferred_element_type=jnp.float32) + bp_ref[...]

    # residual + LayerNorm (biased variance, eps=1e-6), all in f32
    y = x_q + proj
    mean = jnp.mean(y, axis=-1, keepdims=True)
    var = jnp.mean((y - mean) ** 2, axis=-1, keepdims=True)
    y_norm = (y - mean) * jax.lax.rsqrt(var + EPS)
    out = y_norm * gamma_ref[...] + beta_ref[...]
    out_ref[...] = out.reshape(TB, S, F)


def prepare_params(params):
    """One-time parameter transform (not per-call work): transpose for x @ W.T,
    fold the 1/sqrt(d) softmax scale into w_q, cast matmul weights to bf16."""
    d = N_FEAT // N_HEAD
    scale = 1.0 / math.sqrt(d)
    return {
        "wq_t": (params["w_q"].T * scale).astype(jnp.bfloat16),
        "wk_t": params["w_k"].T.astype(jnp.bfloat16),
        "wv_t": params["w_v"].T.astype(jnp.bfloat16),
        "wp_t": params["w_proj"].T.astype(jnp.bfloat16),
        "b_proj": params["b_proj"],
        "gamma": params["gamma"],
        "beta": params["beta"],
    }


def multi_head_attention(query, key, value, attn_mask, kparams, *, tile_b=TILE_B):
    B, S, F = query.shape
    assert B % tile_b == 0, "batch must be a multiple of the tile size"

    seq_spec = pl.BlockSpec((tile_b, S, F), lambda i: (i, 0, 0))

    def resident(shape):
        # constant index_map -> the block stays resident in VMEM across grid steps
        return pl.BlockSpec(shape, lambda i: (0, 0))

    return pl.pallas_call(
        mha_kernel,
        out_shape=jax.ShapeDtypeStruct((B, S, F), jnp.float32),
        grid=(B // tile_b,),
        in_specs=[
            seq_spec, seq_spec, seq_spec,            # query, key, value tiles
            resident((S, S)),                        # additive attention mask
            resident((F, F)), resident((F, F)),      # w_q^T (pre-scaled), w_k^T
            resident((F, F)), resident((F, F)),      # w_v^T, w_proj^T
            resident((1, F)),                        # proj bias
            resident((1, F)), resident((1, F)),      # LayerNorm gamma, beta
        ],
        out_specs=seq_spec,
        compiler_params=pltpu.CompilerParams(
            dimension_semantics=("parallel",)),      # shard batch tiles across TCs (v7x)
    )(query, key, value, attn_mask,
      kparams["wq_t"], kparams["wk_t"], kparams["wv_t"], kparams["wp_t"],
      kparams["b_proj"], kparams["gamma"], kparams["beta"])


def reference(query, key, value, attn_mask, params):
    """Plain-JAX f32 reference mirroring the PyTorch forward."""
    B, S, F = query.shape
    H, d = N_HEAD, N_FEAT // N_HEAD
    q = query @ params["w_q"].T
    k = key @ params["w_k"].T
    v = value @ params["w_v"].T

    def split(x):  # [B, S, F] -> [B, H, S, d]
        return jnp.transpose(x.reshape(B, S, H, d), (0, 2, 1, 3))

    qh, kh, vh = split(q), split(k), split(v)
    s = jnp.einsum("bhqd,bhkd->bhqk", qh, kh) / math.sqrt(d) + attn_mask
    p = jax.nn.softmax(s, axis=-1)
    head = jnp.einsum("bhqk,bhkd->bhqd", p, vh)
    head = jnp.transpose(head, (0, 2, 1, 3)).reshape(B, S, F)
    proj = head @ params["w_proj"].T + params["b_proj"][0]
    y = query + proj
    mean = jnp.mean(y, axis=-1, keepdims=True)
    var = jnp.mean((y - mean) ** 2, axis=-1, keepdims=True)
    return (y - mean) / jnp.sqrt(var + EPS) * params["gamma"][0] + params["beta"][0]


if __name__ == "__main__":
    key_root = jax.random.PRNGKey(0)
    keys = jax.random.split(key_root, 10)

    # deterministic parameter init (synthetic, not a checkpoint)
    bound = 1.0 / math.sqrt(N_FEAT)
    params = {
        "w_q": jax.random.uniform(keys[0], (N_FEAT, N_FEAT), jnp.float32, -bound, bound),
        "w_k": jax.random.uniform(keys[1], (N_FEAT, N_FEAT), jnp.float32, -bound, bound),
        "w_v": jax.random.uniform(keys[2], (N_FEAT, N_FEAT), jnp.float32, -bound, bound),
        "w_proj": jax.random.uniform(keys[3], (N_FEAT, N_FEAT), jnp.float32, -bound, bound),
        "b_proj": jax.random.uniform(keys[4], (1, N_FEAT), jnp.float32, -bound, bound),
        "gamma": jnp.ones((1, N_FEAT), jnp.float32),
        "beta": jnp.zeros((1, N_FEAT), jnp.float32),
    }
    kparams = prepare_params(params)   # one-time transpose / scale-fold / bf16 cast

    # deterministic example inputs: a batch of sequences
    query = jax.random.normal(keys[5], (BATCH, SEQ, N_FEAT), jnp.float32)
    key_in = jax.random.normal(keys[6], (BATCH, SEQ, N_FEAT), jnp.float32)
    value = jax.random.normal(keys[7], (BATCH, SEQ, N_FEAT), jnp.float32)
    # additive attention mask shared by all heads (and here all sequences)
    attn_mask = 0.1 * jax.random.normal(keys[8], (SEQ, SEQ), jnp.float32)

    out = multi_head_attention(query, key_in, value, attn_mask, kparams)
    out = jax.block_until_ready(out)

    ref = reference(query, key_in, value, attn_mask, params)
    assert out.shape == (BATCH, SEQ, N_FEAT)
    # bf16 matmul operands + approx reciprocal -> slightly looser tolerance than pure f32
    assert jnp.allclose(out, ref, atol=2e-2, rtol=2e-2), "mismatch vs reference"

    # TODO(synk): fused single [F,3F] QKV matmul skipped because query/key/value are
    # distinct inputs here (only valid for self-attention call sites).
    print("KERNEL_OK")
</pallas_src>

<mosaic_0001>
module attributes {stable_mosaic.version = 11 : i64} {
  func.func @mha_kernel(%arg0: i32, %arg1: memref<8x16x32xf32, #tpu.memory_space<vmem>>, %arg2: memref<8x16x32xf32, #tpu.memory_space<vmem>>, %arg3: memref<8x16x32xf32, #tpu.memory_space<vmem>>, %arg4: memref<16x16xf32, #tpu.memory_space<vmem>>, %arg5: memref<32x32xbf16, #tpu.memory_space<vmem>>, %arg6: memref<32x32xbf16, #tpu.memory_space<vmem>>, %arg7: memref<32x32xbf16, #tpu.memory_space<vmem>>, %arg8: memref<32x32xbf16, #tpu.memory_space<vmem>>, %arg9: memref<1x32xf32, #tpu.memory_space<vmem>>, %arg10: memref<1x32xf32, #tpu.memory_space<vmem>>, %arg11: memref<1x32xf32, #tpu.memory_space<vmem>>, %arg12: memref<8x16x32xf32, #tpu.memory_space<vmem>>) attributes {dimension_semantics = [#tpu.dimension_semantics<parallel>], iteration_bounds = array<i64: 4>, scalar_prefetch = 0 : i64, scratch_operands = 0 : i64, tpu.core_type = #tpu.core_type<tc>, window_params = [{transform_indices = @transform_0, window_bounds = array<i64: 8, 16, 32>}, {transform_indices = @transform_1, window_bounds = array<i64: 8, 16, 32>}, {transform_indices = @transform_2, window_bounds = array<i64: 8, 16, 32>}, {pipeline_mode = #tpu.pipeline_mode<synchronous>, transform_indices = @transform_3, window_bounds = array<i64: 16, 16>}, {pipeline_mode = #tpu.pipeline_mode<synchronous>, transform_indices = @transform_4, window_bounds = array<i64: 32, 32>}, {pipeline_mode = #tpu.pipeline_mode<synchronous>, transform_indices = @transform_5, window_bounds = array<i64: 32, 32>}, {pipeline_mode = #tpu.pipeline_mode<synchronous>, transform_indices = @transform_6, window_bounds = array<i64: 32, 32>}, {pipeline_mode = #tpu.pipeline_mode<synchronous>, transform_indices = @transform_7, window_bounds = array<i64: 32, 32>}, {pipeline_mode = #tpu.pipeline_mode<synchronous>, transform_indices = @transform_8, window_bounds = array<i64: 1, 32>}, {pipeline_mode = #tpu.pipeline_mode<synchronous>, transform_indices = @transform_9, window_bounds = array<i64: 1, 32>}, {pipeline_mode = #tpu.pipeline_mode<synchronous>, transform_indices = @transform_10, window_bounds = array<i64: 1, 32>}, {transform_indices = @transform_11, window_bounds = array<i64: 8, 16, 32>}]} {
    %c0 = arith.constant 0 : index
    %c0_0 = arith.constant 0 : index
    %c0_1 = arith.constant 0 : index
    %0 = vector.load %arg1[%c0, %c0_0, %c0_1] : memref<8x16x32xf32, #tpu.memory_space<vmem>>, vector<8x16x32xf32>
    %1 = vector.shape_cast %0 : vector<8x16x32xf32> to vector<128x32xf32>
    %c0_2 = arith.constant 0 : index
    %c0_3 = arith.constant 0 : index
    %c0_4 = arith.constant 0 : index
    %2 = vector.load %arg2[%c0_2, %c0_3, %c0_4] : memref<8x16x32xf32, #tpu.memory_space<vmem>>, vector<8x16x32xf32>
    %3 = vector.shape_cast %2 : vector<8x16x32xf32> to vector<128x32xf32>
    %c0_5 = arith.constant 0 : index
    %c0_6 = arith.constant 0 : index
    %c0_7 = arith.constant 0 : index
    %4 = vector.load %arg3[%c0_5, %c0_6, %c0_7] : memref<8x16x32xf32, #tpu.memory_space<vmem>>, vector<8x16x32xf32>
    %5 = vector.shape_cast %4 : vector<8x16x32xf32> to vector<128x32xf32>
    %6 = arith.truncf %1 : vector<128x32xf32> to vector<128x32xbf16>
    %c0_8 = arith.constant 0 : index
    %c0_9 = arith.constant 0 : index
    %7 = vector.load %arg5[%c0_8, %c0_9] : memref<32x32xbf16, #tpu.memory_space<vmem>>, vector<32x32xbf16>
    %cst = arith.constant dense<0.000000e+00> : vector<128x32xf32>
    %8 = tpu.matmul %6, %7, %cst {dimension_numbers = #tpu.dot_dimension_numbers<[1], [0], [0], [1], [0, 0, 1, 1], [], []>} : vector<128x32xbf16>, vector<32x32xbf16>, vector<128x32xf32> -> vector<128x32xf32>
    %9 = arith.truncf %3 : vector<128x32xf32> to vector<128x32xbf16>
    %c0_10 = arith.constant 0 : index
    %c0_11 = arith.constant 0 : index
    %10 = vector.load %arg6[%c0_10, %c0_11] : memref<32x32xbf16, #tpu.memory_space<vmem>>, vector<32x32xbf16>
    %cst_12 = arith.constant dense<0.000000e+00> : vector<128x32xf32>
    %11 = tpu.matmul %9, %10, %cst_12 {dimension_numbers = #tpu.dot_dimension_numbers<[1], [0], [0], [1], [0, 0, 1, 1], [], []>} : vector<128x32xbf16>, vector<32x32xbf16>, vector<128x32xf32> -> vector<128x32xf32>
    %12 = arith.truncf %5 : vector<128x32xf32> to vector<128x32xbf16>
    %c0_13 = arith.constant 0 : index
    %c0_14 = arith.constant 0 : index
    %13 = vector.load %arg7[%c0_13, %c0_14] : memref<32x32xbf16, #tpu.memory_space<vmem>>, vector<32x32xbf16>
    %cst_15 = arith.constant dense<0.000000e+00> : vector<128x32xf32>
    %14 = tpu.matmul %12, %13, %cst_15 {dimension_numbers = #tpu.dot_dimension_numbers<[1], [0], [0], [1], [0, 0, 1, 1], [], []>} : vector<128x32xbf16>, vector<32x32xbf16>, vector<128x32xf32> -> vector<128x32xf32>
    %15 = vector.extract_strided_slice %8 {offsets = [0, 0], sizes = [128, 8], strides = [1, 1]} : vector<128x32xf32> to vector<128x8xf32>
    %16 = vector.shape_cast %15 : vector<128x8xf32> to vector<8x16x8xf32>
    %17 = vector.extract_strided_slice %8 {offsets = [0, 8], sizes = [128, 8], strides = [1, 1]} : vector<128x32xf32> to vector<128x8xf32>
    %18 = vector.shape_cast %17 : vector<128x8xf32> to vector<8x16x8xf32>
    %19 = vector.extract_strided_slice %8 {offsets = [0, 16], sizes = [128, 8], strides = [1, 1]} : vector<128x32xf32> to vector<128x8xf32>
    %20 = vector.shape_cast %19 : vector<128x8xf32> to vector<8x16x8xf32>
    %21 = vector.extract_strided_slice %8 {offsets = [0, 24], sizes = [128, 8], strides = [1, 1]} : vector<128x32xf32> to vector<128x8xf32>
    %22 = vector.shape_cast %21 : vector<128x8xf32> to vector<8x16x8xf32>
    %23 = tpu.concatenate %16, %18, %20, %22 in 0 : vector<8x16x8xf32>, vector<8x16x8xf32>, vector<8x16x8xf32>, vector<8x16x8xf32> -> vector<32x16x8xf32>
    %24 = arith.truncf %23 : vector<32x16x8xf32> to vector<32x16x8xbf16>
    %25 = vector.extract_strided_slice %11 {offsets = [0, 0], sizes = [128, 8], strides = [1, 1]} : vector<128x32xf32> to vector<128x8xf32>
    %26 = vector.shape_cast %25 : vector<128x8xf32> to vector<8x16x8xf32>
    %27 = vector.extract_strided_slice %11 {offsets = [0, 8], sizes = [128, 8], strides = [1, 1]} : vector<128x32xf32> to vector<128x8xf32>
    %28 = vector.shape_cast %27 : vector<128x8xf32> to vector<8x16x8xf32>
    %29 = vector.extract_strided_slice %11 {offsets = [0, 16], sizes = [128, 8], strides = [1, 1]} : vector<128x32xf32> to vector<128x8xf32>
    %30 = vector.shape_cast %29 : vector<128x8xf32> to vector<8x16x8xf32>
    %31 = vector.extract_strided_slice %11 {offsets = [0, 24], sizes = [128, 8], strides = [1, 1]} : vector<128x32xf32> to vector<128x8xf32>
    %32 = vector.shape_cast %31 : vector<128x8xf32> to vector<8x16x8xf32>
    %33 = tpu.concatenate %26, %28, %30, %32 in 0 : vector<8x16x8xf32>, vector<8x16x8xf32>, vector<8x16x8xf32>, vector<8x16x8xf32> -> vector<32x16x8xf32>
    %34 = arith.truncf %33 : vector<32x16x8xf32> to vector<32x16x8xbf16>
    %35 = vector.extract_strided_slice %14 {offsets = [0, 0], sizes = [128, 8], strides = [1, 1]} : vector<128x32xf32> to vector<128x8xf32>
    %36 = vector.shape_cast %35 : vector<128x8xf32> to vector<8x16x8xf32>
    %37 = vector.extract_strided_slice %14 {offsets = [0, 8], sizes = [128, 8], strides = [1, 1]} : vector<128x32xf32> to vector<128x8xf32>
    %38 = vector.shape_cast %37 : vector<128x8xf32> to vector<8x16x8xf32>
    %39 = vector.extract_strided_slice %14 {offsets = [0, 16], sizes = [128, 8], strides = [1, 1]} : vector<128x32xf32> to vector<128x8xf32>
    %40 = vector.shape_cast %39 : vector<128x8xf32> to vector<8x16x8xf32>
    %41 = vector.extract_strided_slice %14 {offsets = [0, 24], sizes = [128, 8], strides = [1, 1]} : vector<128x32xf32> to vector<128x8xf32>
    %42 = vector.shape_cast %41 : vector<128x8xf32> to vector<8x16x8xf32>
    %43 = tpu.concatenate %36, %38, %40, %42 in 0 : vector<8x16x8xf32>, vector<8x16x8xf32>, vector<8x16x8xf32>, vector<8x16x8xf32> -> vector<32x16x8xf32>
    %44 = arith.truncf %43 : vector<32x16x8xf32> to vector<32x16x8xbf16>
    "tpu.trace_start"() <{level = 10 : i32, message = "bqd,bkd->bqk"}> : () -> ()
    %cst_16 = arith.constant dense<0.000000e+00> : vector<32x16x16xf32>
    %45 = tpu.matmul %24, %34, %cst_16 {dimension_numbers = #tpu.dot_dimension_numbers<[2], [2], [1], [1], [0, 0, 0, 1, 1, 1], [0], [0]>} : vector<32x16x8xbf16>, vector<32x16x8xbf16>, vector<32x16x16xf32> -> vector<32x16x16xf32>
    "tpu.trace_stop"() : () -> ()
    %c0_17 = arith.constant 0 : index
    %c0_18 = arith.constant 0 : index
    %46 = vector.load %arg4[%c0_17, %c0_18] : memref<16x16xf32, #tpu.memory_space<vmem>>, vector<16x16xf32>
    %47 = vector.shape_cast %46 : vector<16x16xf32> to vector<1x16x16xf32>
    %48 = vector.broadcast %47 : vector<1x16x16xf32> to vector<32x16x16xf32>
    %49 = arith.addf %45, %48 : vector<32x16x16xf32>
    %cst_19 = arith.constant dense<0xFF800000> : vector<32x16xf32>
    %50 = vector.multi_reduction <maximumf>, %49, %cst_19 [2] : vector<32x16x16xf32> to vector<32x16xf32>
    %51 = vector.shape_cast %50 : vector<32x16xf32> to vector<32x16x1xf32>
    %52 = vector.broadcast %51 : vector<32x16x1xf32> to vector<32x16x16xf32>
    %53 = arith.subf %49, %52 : vector<32x16x16xf32>
    %54 = math.exp %53 : vector<32x16x16xf32>
    %cst_20 = arith.constant dense<0.000000e+00> : vector<32x16xf32>
    %55 = vector.multi_reduction <add>, %54, %cst_20 [2] : vector<32x16x16xf32> to vector<32x16xf32>
    %56 = vector.shape_cast %55 : vector<32x16xf32> to vector<32x16x1xf32>
    %57 = tpu.reciprocal %56 {approx = true} : vector<32x16x1xf32> -> vector<32x16x1xf32>
    %58 = vector.broadcast %57 : vector<32x16x1xf32> to vector<32x16x16xf32>
    %59 = arith.mulf %54, %58 : vector<32x16x16xf32>
    %60 = arith.truncf %59 : vector<32x16x16xf32> to vector<32x16x16xbf16>
    "tpu.trace_start"() <{level = 10 : i32, message = "bqk,bkd->bqd"}> : () -> ()
    %cst_21 = arith.constant dense<0.000000e+00> : vector<32x16x8xf32>
    %61 = tpu.matmul %60, %44, %cst_21 {dimension_numbers = #tpu.dot_dimension_numbers<[2], [1], [1], [2], [0, 0, 0, 1, 1, 2], [0], [0]>} : vector<32x16x16xbf16>, vector<32x16x8xbf16>, vector<32x16x8xf32> -> vector<32x16x8xf32>
    "tpu.trace_stop"() : () -> ()
    %62 = vector.extract_strided_slice %61 {offsets = [0, 0, 0], sizes = [8, 16, 8], strides = [1, 1, 1]} : vector<32x16x8xf32> to vector<8x16x8xf32>
    %63 = vector.extract_strided_slice %61 {offsets = [8, 0, 0], sizes = [8, 16, 8], strides = [1, 1, 1]} : vector<32x16x8xf32> to vector<8x16x8xf32>
    %64 = vector.extract_strided_slice %61 {offsets = [16, 0, 0], sizes = [8, 16, 8], strides = [1, 1, 1]} : vector<32x16x8xf32> to vector<8x16x8xf32>
    %65 = vector.extract_strided_slice %61 {offsets = [24, 0, 0], sizes = [8, 16, 8], strides = [1, 1, 1]} : vector<32x16x8xf32> to vector<8x16x8xf32>
    %66 = tpu.concatenate %62, %63, %64, %65 in 2 : vector<8x16x8xf32>, vector<8x16x8xf32>, vector<8x16x8xf32>, vector<8x16x8xf32> -> vector<8x16x32xf32>
    %67 = vector.shape_cast %66 : vector<8x16x32xf32> to vector<128x32xf32>
    %68 = arith.truncf %67 : vector<128x32xf32> to vector<128x32xbf16>
    %c0_22 = arith.constant 0 : index
    %c0_23 = arith.constant 0 : index
    %69 = vector.load %arg8[%c0_22, %c0_23] : memref<32x32xbf16, #tpu.memory_space<vmem>>, vector<32x32xbf16>
    %cst_24 = arith.constant dense<0.000000e+00> : vector<128x32xf32>
    %70 = tpu.matmul %68, %69, %cst_24 {dimension_numbers = #tpu.dot_dimension_numbers<[1], [0], [0], [1], [0, 0, 1, 1], [], []>} : vector<128x32xbf16>, vector<32x32xbf16>, vector<128x32xf32> -> vector<128x32xf32>
    %c0_25 = arith.constant 0 : index
    %c0_26 = arith.constant 0 : index
    %71 = vector.load %arg9[%c0_25, %c0_26] : memref<1x32xf32, #tpu.memory_space<vmem>>, vector<1x32xf32>
    %72 = vector.broadcast %71 : vector<1x32xf32> to vector<128x32xf32>
    %73 = arith.addf %70, %72 : vector<128x32xf32>
    %74 = arith.addf %1, %73 : vector<128x32xf32>
    %cst_27 = arith.constant dense<0.000000e+00> : vector<128xf32>
    %75 = vector.multi_reduction <add>, %74, %cst_27 [1] : vector<128x32xf32> to vector<128xf32>
    %76 = vector.shape_cast %75 : vector<128xf32> to vector<128x1xf32>
    %cst_28 = arith.constant 3.200000e+01 : f32
    %77 = vector.broadcast %cst_28 : f32 to vector<128x1xf32>
    %78 = arith.divf %76, %77 : vector<128x1xf32>
    %79 = vector.broadcast %78 : vector<128x1xf32> to vector<128x32xf32>
    %80 = arith.subf %74, %79 : vector<128x32xf32>
    %81 = arith.mulf %80, %80 : vector<128x32xf32>
    %cst_29 = arith.constant dense<0.000000e+00> : vector<128xf32>
    %82 = vector.multi_reduction <add>, %81, %cst_29 [1] : vector<128x32xf32> to vector<128xf32>
    %83 = vector.shape_cast %82 : vector<128xf32> to vector<128x1xf32>
    %cst_30 = arith.constant 3.200000e+01 : f32
    %84 = vector.broadcast %cst_30 : f32 to vector<128x1xf32>
    %85 = arith.divf %83, %84 : vector<128x1xf32>
    %86 = vector.broadcast %78 : vector<128x1xf32> to vector<128x32xf32>
    %87 = arith.subf %74, %86 : vector<128x32xf32>
    %cst_31 = arith.constant 9.99999997E-7 : f32
    %88 = vector.broadcast %cst_31 : f32 to vector<128x1xf32>
    %89 = arith.addf %85, %88 : vector<128x1xf32>
    %90 = math.rsqrt %89 : vector<128x1xf32>
    %91 = vector.broadcast %90 : vector<128x1xf32> to vector<128x32xf32>
    %92 = arith.mulf %87, %91 : vector<128x32xf32>
    %c0_32 = arith.constant 0 : index
    %c0_33 = arith.constant 0 : index
    %93 = vector.load %arg10[%c0_32, %c0_33] : memref<1x32xf32, #tpu.memory_space<vmem>>, vector<1x32xf32>
    %94 = vector.broadcast %93 : vector<1x32xf32> to vector<128x32xf32>
    %95 = arith.mulf %92, %94 : vector<128x32xf32>
    %c0_34 = arith.constant 0 : index
    %c0_35 = arith.constant 0 : index
    %96 = vector.load %arg11[%c0_34, %c0_35] : memref<1x32xf32, #tpu.memory_space<vmem>>, vector<1x32xf32>
    %97 = vector.broadcast %96 : vector<1x32xf32> to vector<128x32xf32>
    %98 = arith.addf %95, %97 : vector<128x32xf32>
    %99 = vector.shape_cast %98 : vector<128x32xf32> to vector<8x16x32xf32>
    %c0_36 = arith.constant 0 : index
    %c0_37 = arith.constant 0 : index
    %c0_38 = arith.constant 0 : index
    %100 = vector.load %arg12[%c0_36, %c0_37, %c0_38] : memref<8x16x32xf32, #tpu.memory_space<vmem>>, vector<8x16x32xf32>
    tpu.vector_store %arg12[%c0_36, %c0_37, %c0_38], %99 {strides = array<i32>} : memref<8x16x32xf32, #tpu.memory_space<vmem>>, vector<8x16x32xf32>,
    return
  }
  func.func @transform_0(%arg0: i32) -> (i32, i32, i32) {
    %c0_i32 = arith.constant 0 : i32
    %c0_i32_0 = arith.constant 0 : i32
    %c0_i32_1 = arith.constant 0 : i32
    return %arg0, %c0_i32, %c0_i32_0 : i32, i32, i32
  }
  func.func @transform_1(%arg0: i32) -> (i32, i32, i32) {
    %c0_i32 = arith.constant 0 : i32
    %c0_i32_0 = arith.constant 0 : i32
    %c0_i32_1 = arith.constant 0 : i32
    return %arg0, %c0_i32, %c0_i32_0 : i32, i32, i32
  }
  func.func @transform_2(%arg0: i32) -> (i32, i32, i32) {
    %c0_i32 = arith.constant 0 : i32
    %c0_i32_0 = arith.constant 0 : i32
    %c0_i32_1 = arith.constant 0 : i32
    return %arg0, %c0_i32, %c0_i32_0 : i32, i32, i32
  }
  func.func @transform_3(%arg0: i32) -> (i32, i32) {
    %c0_i32 = arith.constant 0 : i32
    %c0_i32_0 = arith.constant 0 : i32
    %c0_i32_1 = arith.constant 0 : i32
    return %c0_i32, %c0_i32_0 : i32, i32
  }
  func.func @transform_4(%arg0: i32) -> (i32, i32) {
    %c0_i32 = arith.constant 0 : i32
    %c0_i32_0 = arith.constant 0 : i32
    %c0_i32_1 = arith.constant 0 : i32
    return %c0_i32, %c0_i32_0 : i32, i32
  }
  func.func @transform_5(%arg0: i32) -> (i32, i32) {
    %c0_i32 = arith.constant 0 : i32
    %c0_i32_0 = arith.constant 0 : i32
    %c0_i32_1 = arith.constant 0 : i32
    return %c0_i32, %c0_i32_0 : i32, i32
  }
  func.func @transform_6(%arg0: i32) -> (i32, i32) {
    %c0_i32 = arith.constant 0 : i32
    %c0_i32_0 = arith.constant 0 : i32
    %c0_i32_1 = arith.constant 0 : i32
    return %c0_i32, %c0_i32_0 : i32, i32
  }
  func.func @transform_7(%arg0: i32) -> (i32, i32) {
    %c0_i32 = arith.constant 0 : i32
    %c0_i32_0 = arith.constant 0 : i32
    %c0_i32_1 = arith.constant 0 : i32
    return %c0_i32, %c0_i32_0 : i32, i32
  }
  func.func @transform_8(%arg0: i32) -> (i32, i32) {
    %c0_i32 = arith.constant 0 : i32
    %c0_i32_0 = arith.constant 0 : i32
    %c0_i32_1 = arith.constant 0 : i32
    return %c0_i32, %c0_i32_0 : i32, i32
  }
  func.func @transform_9(%arg0: i32) -> (i32, i32) {
    %c0_i32 = arith.constant 0 : i32
    %c0_i32_0 = arith.constant 0 : i32
    %c0_i32_1 = arith.constant 0 : i32
    return %c0_i32, %c0_i32_0 : i32, i32
  }
  func.func @transform_10(%arg0: i32) -> (i32, i32) {
    %c0_i32 = arith.constant 0 : i32
    %c0_i32_0 = arith.constant 0 : i32
    %c0_i32_1 = arith.constant 0 : i32
    return %c0_i32, %c0_i32_0 : i32, i32
  }
  func.func @transform_11(%arg0: i32) -> (i32, i32, i32) {
    %c0_i32 = arith.constant 0 : i32
    %c0_i32_0 = arith.constant 0 : i32
    %c0_i32_1 = arith.constant 0 : i32
    return %arg0, %c0_i32, %c0_i32_0 : i32, i32, i32
  }
}

</mosaic_0001>

<llo_original>
// kernel: tpu_custom_call.1
$region0: #{tpu_custom_call.1}
  #allocation0 [shape = 'u32[]', space=smem, size = 0x4, offset = 0x4, fixed_abs, tag = 'smem constant byte address 0x4 - core index']
  #allocation1 [shape = 'u32[144,128]{1,0:T(1,128)}', space=vmem, size = 0x12000, scoped, tag = 'internal scratch']
  %s0 = inlined_call_operand.hbm [shape: f32[32,16,32], index: 0, kind: input, shape index: {}]
  %s1 = inlined_call_operand.hbm [shape: f32[32,16,32], index: 1, kind: input, shape index: {}]
  %s2 = inlined_call_operand.hbm [shape: f32[32,16,32], index: 2, kind: input, shape index: {}]
  %s3 = inlined_call_operand.hbm [shape: f32[16,16], index: 3, kind: input, shape index: {}]
  %s4 = inlined_call_operand.hbm [shape: bf16[32,32], index: 4, kind: input, shape index: {}]
  %s5 = inlined_call_operand.vmem [shape: bf16[32,32], index: 5, kind: input, shape index: {}]
  %s6 = inlined_call_operand.hbm [shape: bf16[32,32], index: 6, kind: input, shape index: {}]
  %s7 = inlined_call_operand.hbm [shape: bf16[32,32], index: 7, kind: input, shape index: {}]
  %s8 = inlined_call_operand.vmem [shape: f32[1,32], index: 8, kind: input, shape index: {}]
  %s9 = inlined_call_operand.vmem [shape: f32[1,32], index: 9, kind: input, shape index: {}]
  %s10 = inlined_call_operand.vmem [shape: f32[1,32], index: 10, kind: input, shape index: {}]
  %s11 = inlined_call_operand.hbm [shape: f32[32,16,32], index: 11, kind: output, shape index: {}]
  %s12 = sld [smem:[#allocation0]]
  $region105: #{tpu_custom_call.1} parent=0
    _
  %s14 = ssub.s32 1, %s12
  %s15 = scalar_select 0, %s14, %s12
  $region1: #{tpu_custom_call.1} parent=0
    #allocation2 [shape = 'u8[131072]{0}', space=vmem, size = 0x20000, scoped, tag = 'input window, operand 0']
    #allocation3 [shape = 's32[2]{0}', space=sflag, size = 0x8, scoped, tag = 'scoped memory for tpu_custom_call.1']
    #allocation4 [shape = 's32[2]{0}', space=sflag, size = 0x8, scoped, tag = 'scoped memory for tpu_custom_call.1']
    #allocation5 [shape = 'u8[131072]{0}', space=vmem, size = 0x20000, scoped, tag = 'input window, operand 1']
    #allocation6 [shape = 's32[2]{0}', space=sflag, size = 0x8, scoped, tag = 'scoped memory for tpu_custom_call.1']
    #allocation7 [shape = 'u8[131072]{0}', space=vmem, size = 0x20000, scoped, tag = 'input window, operand 2']
    #allocation8 [shape = 'u8[8192]{0}', space=vmem, size = 0x2000, scoped, tag = 'input window, operand 3, single buffered']
    #allocation9 [shape = 's32[1]{0}', space=sflag, size = 0x4, scoped, tag = 'scoped memory for tpu_custom_call.1']
    #allocation10 [shape = 'u8[8192]{0}', space=vmem, size = 0x2000, scoped, tag = 'input window, operand 4, single buffered']
    #allocation11 [shape = 'u8[8192]{0}', space=vmem, size = 0x2000, scoped, tag = 'input window, operand 6, single buffered']
    #allocation12 [shape = 's32[1]{0}', space=sflag, size = 0x4, scoped, tag = 'scoped memory for tpu_custom_call.1']
    #allocation13 [shape = 'u8[8192]{0}', space=vmem, size = 0x2000, scoped, tag = 'input window, operand 7, single buffered']
    #allocation14 [shape = 'u8[131072]{0}', space=vmem, size = 0x20000, scoped, tag = 'output window, operand 0']
    %16 = vsyncpa [#allocation3], 0
    %s17 = scalar_lea.sflag [#allocation3], 1
    %18 = vsyncpa %s17, 0
    %19 = vsyncpa [#allocation6], 0
    %s20 = scalar_lea.sflag [#allocation6], 1
    %21 = vsyncpa %s20, 0
    %22 = vsyncpa [#allocation9], 0
    %23 = vsyncpa [#allocation12], 0
    %24 = vsyncpa [#allocation4], 0
    %s25 = scalar_lea.sflag [#allocation4], 1
    %26 = vsyncpa %s25, 0
    loop: start=0, step=1, limit=6
    $region2: #{tpu_custom_call.1} parent=1 // loop_pre_header
      _
    $region3: #{tpu_custom_call.1} parent=1 // loop_header
      %s28 = sphi 0, %s32
      %p29 = scmp.ge.s32.totalorder %s28, 6
      %s38 = sphi 0, %s40
      %s41 = sphi 0, %s38
      %s42 = sphi 0, %s41
      %s58 = sphi 0, %s42
      %s64 = sphi 0, %s66
      %s67 = sphi 0, %s64
      %s68 = sphi 0, %s67
      %s84 = sphi 0, %s68
      %s90 = sphi 0, %s92
      %s93 = sphi 0, %s90
      %s94 = sphi 0, %s93
      %s110 = sphi 0, %s94
      %s114 = sphi 0, %s114
      %s116 = sphi 0, %s114
      %s117 = sphi 0, %s116
      %s131 = sphi 0, %s117
      %s135 = sphi 0, %s135
      %s137 = sphi 0, %s135
      %s138 = sphi 0, %s137
      %s152 = sphi 0, %s138
      %s156 = sphi 0, %s156
      %s158 = sphi 0, %s156
      %s159 = sphi 0, %s158
      %s173 = sphi 0, %s159
      %s177 = sphi 0, %s177
      %s179 = sphi 0, %s177
      %s180 = sphi 0, %s179
      %s194 = sphi 0, %s180
      %s198 = sphi 0, %s198
      %s200 = sphi 0, %s198
      %s201 = sphi 0, %s200
      %s215 = sphi 0, %s201
      %s219 = sphi 0, %s219
      %s221 = sphi 0, %s219
      %s222 = sphi 0, %s221
      %s236 = sphi 0, %s222
      %s240 = sphi 0, %s240
      %s242 = sphi 0, %s240
      %s243 = sphi 0, %s242
      %s257 = sphi 0, %s243
      %s261 = sphi 0, %s261
      %s263 = sphi 0, %s261
      %s264 = sphi 0, %s263
      %s278 = sphi 0, %s264
      %s284 = sphi 0, %s286
      %s287 = sphi 0, %s284
      %s288 = sphi 0, %s287
      %s304 = sphi 0, %s288
    $region4: #{tpu_custom_call.1} parent=1 // loop_header_branch
      %31 = sbr.rel (%p29) target = $region8
    $region5: #{tpu_custom_call.1} parent=1 // loop_body
      %s33 = ssub.s32 %s28, 1
      %s34 = ssub.s32 %s28, 2
      %s35 = sadd.s32 %s28, 1
      %s36 = ssub.s32 %s28, %s35
      %p37 = scmp.eq.s32.totalorder %s36, 0
      %s39 = sadd.s32 %s38, 1
      %s40 = scalar_select %p37, %s38, %s39
      %p43 = pneg %p37
      %p44 = scmp.eq.s32.totalorder %s28, 3
      %p45 = por %p43, %p44
      %p46 = scmp.ne.s32.totalorder %s38, %s41
      %p47 = scmp.eq.s32.totalorder %s28, 0
      %p48 = por %p46, %p47
      %p49 = scmp.ne.s32.totalorder %s38, %s41
      %p50 = scmp.eq.s32.totalorder %s33, 3
      %p51 = por %p49, %p50
      %p52 = scmp.ne.s32.totalorder %s41, %s42
      %p53 = scmp.eq.s32.totalorder %s33, 0
      %p54 = por %p52, %p53
      %p55 = scmp.ne.s32.totalorder %s41, %s42
      %p56 = scmp.eq.s32.totalorder %s34, 3
      %p57 = por %p55, %p56
      %p59 = scmp.ne.s32.totalorder %s42, %s58
      %p60 = scmp.eq.s32.totalorder %s34, 0
      %p61 = por %p59, %p60
      %s62 = ssub.s32 %s28, %s35
      %p63 = scmp.eq.s32.totalorder %s62, 0
      %s65 = sadd.s32 %s64, 1
      %s66 = scalar_select %p63, %s64, %s65
      %p69 = pneg %p63
      %p70 = scmp.eq.s32.totalorder %s28, 3
      %p71 = por %p69, %p70
      %p72 = scmp.ne.s32.totalorder %s64, %s67
      %p73 = scmp.eq.s32.totalorder %s28, 0
      %p74 = por %p72, %p73
      %p75 = scmp.ne.s32.totalorder %s64, %s67
      %p76 = scmp.eq.s32.totalorder %s33, 3
      %p77 = por %p75, %p76
      %p78 = scmp.ne.s32.totalorder %s67, %s68
      %p79 = scmp.eq.s32.totalorder %s33, 0
      %p80 = por %p78, %p79
      %p81 = scmp.ne.s32.totalorder %s67, %s68
      %p82 = scmp.eq.s32.totalorder %s34, 3
      %p83 = por %p81, %p82
      %p85 = scmp.ne.s32.totalorder %s68, %s84
      %p86 = scmp.eq.s32.totalorder %s34, 0
      %p87 = por %p85, %p86
      %s88 = ssub.s32 %s28, %s35
      %p89 = scmp.eq.s32.totalorder %s88, 0
      %s91 = sadd.s32 %s90, 1
      %s92 = scalar_select %p89, %s90, %s91
      %p95 = pneg %p89
      %p96 = scmp.eq.s32.totalorder %s28, 3
      %p97 = por %p95, %p96
      %p98 = scmp.ne.s32.totalorder %s90, %s93
      %p99 = scmp.eq.s32.totalorder %s28, 0
      %p100 = por %p98, %p99
      %p101 = scmp.ne.s32.totalorder %s90, %s93
      %p102 = scmp.eq.s32.totalorder %s33, 3
      %p103 = por %p101, %p102
      %p104 = scmp.ne.s32.totalorder %s93, %s94
      %p105 = scmp.eq.s32.totalorder %s33, 0
      %p106 = por %p104, %p105
      %p107 = scmp.ne.s32.totalorder %s93, %s94
      %p108 = scmp.eq.s32.totalorder %s34, 3
      %p109 = por %p107, %p108
      %p111 = scmp.ne.s32.totalorder %s94, %s110
      %p112 = scmp.eq.s32.totalorder %s34, 0
      %p113 = por %p111, %p112
      %s115 = sadd.s32 %s114, 1
      %p118 = scmp.eq.s32.totalorder %s28, 3
      %p119 = scmp.ne.s32.totalorder %s114, %s116
      %p120 = scmp.eq.s32.totalorder %s28, 0
      %p121 = por %p119, %p120
      %p122 = scmp.ne.s32.totalorder %s114, %s116
      %p123 = scmp.eq.s32.totalorder %s33, 3
      %p124 = por %p122, %p123
      %p125 = scmp.ne.s32.totalorder %s116, %s117
      %p126 = scmp.eq.s32.totalorder %s33, 0
      %p127 = por %p125, %p126
      %p128 = scmp.ne.s32.totalorder %s116, %s117
      %p129 = scmp.eq.s32.totalorder %s34, 3
      %p130 = por %p128, %p129
      %p132 = scmp.ne.s32.totalorder %s117, %s131
      %p133 = scmp.eq.s32.totalorder %s34, 0
      %p134 = por %p132, %p133
      %s136 = sadd.s32 %s135, 1
      %p139 = scmp.eq.s32.totalorder %s28, 3
      %p140 = scmp.ne.s32.totalorder %s135, %s137
      %p141 = scmp.eq.s32.totalorder %s28, 0
      %p142 = por %p140, %p141
      %p143 = scmp.ne.s32.totalorder %s135, %s137
      %p144 = scmp.eq.s32.totalorder %s33, 3
      %p145 = por %p143, %p144
      %p146 = scmp.ne.s32.totalorder %s137, %s138
      %p147 = scmp.eq.s32.totalorder %s33, 0
      %p148 = por %p146, %p147
      %p149 = scmp.ne.s32.totalorder %s137, %s138
      %p150 = scmp.eq.s32.totalorder %s34, 3
      %p151 = por %p149, %p150
      %p153 = scmp.ne.s32.totalorder %s138, %s152
      %p154 = scmp.eq.s32.totalorder %s34, 0
      %p155 = por %p153, %p154
      %s157 = sadd.s32 %s156, 1
      %p160 = scmp.eq.s32.totalorder %s28, 3
      %p161 = scmp.ne.s32.totalorder %s156, %s158
      %p162 = scmp.eq.s32.totalorder %s28, 0
      %p163 = por %p161, %p162
      %p164 = scmp.ne.s32.totalorder %s156, %s158
      %p165 = scmp.eq.s32.totalorder %s33, 3
      %p166 = por %p164, %p165
      %p167 = scmp.ne.s32.totalorder %s158, %s159
      %p168 = scmp.eq.s32.totalorder %s33, 0
      %p169 = por %p167, %p168
      %p170 = scmp.ne.s32.totalorder %s158, %s159
      %p171 = scmp.eq.s32.totalorder %s34, 3
      %p172 = por %p170, %p171
      %p174 = scmp.ne.s32.totalorder %s159, %s173
      %p175 = scmp.eq.s32.totalorder %s34, 0
      %p176 = por %p174, %p175
      %s178 = sadd.s32 %s177, 1
      %p181 = scmp.eq.s32.totalorder %s28, 3
      %p182 = scmp.ne.s32.totalorder %s177, %s179
      %p183 = scmp.eq.s32.totalorder %s28, 0
      %p184 = por %p182, %p183
      %p185 = scmp.ne.s32.totalorder %s177, %s179
      %p186 = scmp.eq.s32.totalorder %s33, 3
      %p187 = por %p185, %p186
      %p188 = scmp.ne.s32.totalorder %s179, %s180
      %p189 = scmp.eq.s32.totalorder %s33, 0
      %p190 = por %p188, %p189
      %p191 = scmp.ne.s32.totalorder %s179, %s180
      %p192 = scmp.eq.s32.totalorder %s34, 3
      %p193 = por %p191, %p192
      %p195 = scmp.ne.s32.totalorder %s180, %s194
      %p196 = scmp.eq.s32.totalorder %s34, 0
      %p197 = por %p195, %p196
      %s199 = sadd.s32 %s198, 1
      %p202 = scmp.eq.s32.totalorder %s28, 3
      %p203 = scmp.ne.s32.totalorder %s198, %s200
      %p204 = scmp.eq.s32.totalorder %s28, 0
      %p205 = por %p203, %p204
      %p206 = scmp.ne.s32.totalorder %s198, %s200
      %p207 = scmp.eq.s32.totalorder %s33, 3
      %p208 = por %p206, %p207
      %p209 = scmp.ne.s32.totalorder %s200, %s201
      %p210 = scmp.eq.s32.totalorder %s33, 0
      %p211 = por %p209, %p210
      %p212 = scmp.ne.s32.totalorder %s200, %s201
      %p213 = scmp.eq.s32.totalorder %s34, 3
      %p214 = por %p212, %p213
      %p216 = scmp.ne.s32.totalorder %s201, %s215
      %p217 = scmp.eq.s32.totalorder %s34, 0
      %p218 = por %p216, %p217
      %s220 = sadd.s32 %s219, 1
      %p223 = scmp.eq.s32.totalorder %s28, 3
      %p224 = scmp.ne.s32.totalorder %s219, %s221
      %p225 = scmp.eq.s32.totalorder %s28, 0
      %p226 = por %p224, %p225
      %p227 = scmp.ne.s32.totalorder %s219, %s221
      %p228 = scmp.eq.s32.totalorder %s33, 3
      %p229 = por %p227, %p228
      %p230 = scmp.ne.s32.totalorder %s221, %s222
      %p231 = scmp.eq.s32.totalorder %s33, 0
      %p232 = por %p230, %p231
      %p233 = scmp.ne.s32.totalorder %s221, %s222
      %p234 = scmp.eq.s32.totalorder %s34, 3
      %p235 = por %p233, %p234
      %p237 = scmp.ne.s32.totalorder %s222, %s236
      %p238 = scmp.eq.s32.totalorder %s34, 0
      %p239 = por %p237, %p238
      %s241 = sadd.s32 %s240, 1
      %p244 = scmp.eq.s32.totalorder %s28, 3
      %p245 = scmp.ne.s32.totalorder %s240, %s242
      %p246 = scmp.eq.s32.totalorder %s28, 0
      %p247 = por %p245, %p246
      %p248 = scmp.ne.s32.totalorder %s240, %s242
      %p249 = scmp.eq.s32.totalorder %s33, 3
      %p250 = por %p248, %p249
      %p251 = scmp.ne.s32.totalorder %s242, %s243
      %p252 = scmp.eq.s32.totalorder %s33, 0
      %p253 = por %p251, %p252
      %p254 = scmp.ne.s32.totalorder %s242, %s243
      %p255 = scmp.eq.s32.totalorder %s34, 3
      %p256 = por %p254, %p255
      %p258 = scmp.ne.s32.totalorder %s243, %s257
      %p259 = scmp.eq.s32.totalorder %s34, 0
      %p260 = por %p258, %p259
      %s262 = sadd.s32 %s261, 1
      %p265 = scmp.eq.s32.totalorder %s28, 3
      %p266 = scmp.ne.s32.totalorder %s261, %s263
      %p267 = scmp.eq.s32.totalorder %s28, 0
      %p268 = por %p266, %p267
      %p269 = scmp.ne.s32.totalorder %s261, %s263
      %p270 = scmp.eq.s32.totalorder %s33, 3
      %p271 = por %p269, %p270
      %p272 = scmp.ne.s32.totalorder %s263, %s264
      %p273 = scmp.eq.s32.totalorder %s33, 0
      %p274 = por %p272, %p273
      %p275 = scmp.ne.s32.totalorder %s263, %s264
      %p276 = scmp.eq.s32.totalorder %s34, 3
      %p277 = por %p275, %p276
      %p279 = scmp.ne.s32.totalorder %s264, %s278
      %p280 = scmp.eq.s32.totalorder %s34, 0
      %p281 = por %p279, %p280
      %s282 = ssub.s32 %s28, %s35
      %p283 = scmp.eq.s32.totalorder %s282, 0
      %s285 = sadd.s32 %s284, 1
      %s286 = scalar_select %p283, %s284, %s285
      %p289 = pneg %p283
      %p290 = scmp.eq.s32.totalorder %s28, 3
      %p291 = por %p289, %p290
      %p292 = scmp.ne.s32.totalorder %s284, %s287
      %p293 = scmp.eq.s32.totalorder %s28, 0
      %p294 = por %p292, %p293
      %p295 = scmp.ne.s32.totalorder %s284, %s287
      %p296 = scmp.eq.s32.totalorder %s33, 3
      %p297 = por %p295, %p296
      %p298 = scmp.ne.s32.totalorder %s287, %s288
      %p299 = scmp.eq.s32.totalorder %s33, 0
      %p300 = por %p298, %p299
      %p301 = scmp.ne.s32.totalorder %s287, %s288
      %p302 = scmp.eq.s32.totalorder %s34, 3
      %p303 = por %p301, %p302
      %p305 = scmp.ne.s32.totalorder %s288, %s304
      %p306 = scmp.eq.s32.totalorder %s34, 0
      %p307 = por %p305, %p306
      %p308 = scmp.le.s32.totalorder 1, %s28
      %p309 = scmp.lt.s32.totalorder %s28, 5
      %p310 = pnand %p308, %p309
      %p311 = pneg %p310
      // Predicated region
      $region9: #{tpu_custom_call.1} parent=5 // pred_check
        _
      $region10: #{tpu_custom_call.1} parent=5 // pred_check_branch
        %313 = sbr.rel (%p310) target = $region12
      $region11: #{tpu_custom_call.1} parent=5 // pred_region
        %s314 = ssub.s32 %s28, 1
        // Predicated region
        $region13: #{tpu_custom_call.1} parent=11 // pred_check
          %p315 = pneg %p127
        $region14: #{tpu_custom_call.1} parent=11 // pred_check_branch
          %317 = sbr.rel (%p315) target = $region16
        $region15: #{tpu_custom_call.1} parent=11 // pred_region
          %s319 = ssub.s32 256, 256
          %320 = vsyncadd [#allocation9], %s319
          %s321 = sshll.u32 [#allocation8], 4
          %s322 = int_to_ptr.vmem [resolvable:$true] %s321
          %327 = dma.hbm_to_vmem [thread:$0]  %s3, 256, %s322, [#allocation9], 128, 128, 8
        $region16: #{tpu_custom_call.1} parent=11 // pred_fallthru
          _
        // Predicated region
        $region17: #{tpu_custom_call.1} parent=11 // pred_check
          %p328 = pneg %p148
        $region18: #{tpu_custom_call.1} parent=11 // pred_check_branch
          %330 = sbr.rel (%p328) target = $region20
        $region19: #{tpu_custom_call.1} parent=11 // pred_region
          %s332 = ssub.s32 256, 256
          %333 = vsyncadd [#allocation9], %s332
          %s334 = sshll.u32 [#allocation10], 4
          %s335 = int_to_ptr.vmem [resolvable:$true] %s334
          %340 = dma.hbm_to_vmem [thread:$0]  %s4, 256, %s335, [#allocation9], 64, 64, 4
        $region20: #{tpu_custom_call.1} parent=11 // pred_fallthru
          _
        // Predicated region
        $region21: #{tpu_custom_call.1} parent=11 // pred_check
          %p341 = pneg %p169
        $region22: #{tpu_custom_call.1} parent=11 // pred_check_branch
          %343 = sbr.rel (%p341) target = $region24
        $region23: #{tpu_custom_call.1} parent=11 // pred_region
          _
        $region24: #{tpu_custom_call.1} parent=11 // pred_fallthru
          _
        // Predicated region
        $region25: #{tpu_custom_call.1} parent=11 // pred_check
          %p344 = pneg %p190
        $region26: #{tpu_custom_call.1} parent=11 // pred_check_branch
          %346 = sbr.rel (%p344) target = $region28
        $region27: #{tpu_custom_call.1} parent=11 // pred_region
          %s348 = ssub.s32 256, 256
          %349 = vsyncadd [#allocation12], %s348
          %s350 = sshll.u32 [#allocation11], 4
          %s351 = int_to_ptr.vmem [resolvable:$true] %s350
          %356 = dma.hbm_to_vmem [thread:$0]  %s6, 256, %s351, [#allocation12], 64, 64, 4
        $region28: #{tpu_custom_call.1} parent=11 // pred_fallthru
          _
        // Predicated region
        $region29: #{tpu_custom_call.1} parent=11 // pred_check
          %p357 = pneg %p211
        $region30: #{tpu_custom_call.1} parent=11 // pred_check_branch
          %359 = sbr.rel (%p357) target = $region32
        $region31: #{tpu_custom_call.1} parent=11 // pred_region
          %s361 = ssub.s32 256, 256
          %362 = vsyncadd [#allocation12], %s361
          %s363 = sshll.u32 [#allocation13], 4
          %s364 = int_to_ptr.vmem [resolvable:$true] %s363
          %369 = dma.hbm_to_vmem [thread:$0]  %s7, 256, %s364, [#allocation12], 64, 64, 4
        $region32: #{tpu_custom_call.1} parent=11 // pred_fallthru
          _
        // Predicated region
        $region33: #{tpu_custom_call.1} parent=11 // pred_check
          %p370 = pneg %p232
        $region34: #{tpu_custom_call.1} parent=11 // pred_check_branch
          %372 = sbr.rel (%p370) target = $region36
        $region35: #{tpu_custom_call.1} parent=11 // pred_region
          _
        $region36: #{tpu_custom_call.1} parent=11 // pred_fallthru
          _
        // Predicated region
        $region37: #{tpu_custom_call.1} parent=11 // pred_check
          %p373 = pneg %p253
        $region38: #{tpu_custom_call.1} parent=11 // pred_check_branch
          %375 = sbr.rel (%p373) target = $region40
        $region39: #{tpu_custom_call.1} parent=11 // pred_region
          _
        $region40: #{tpu_custom_call.1} parent=11 // pred_fallthru
          _
        // Predicated region
        $region41: #{tpu_custom_call.1} parent=11 // pred_check
          %p376 = pneg %p274
        $region42: #{tpu_custom_call.1} parent=11 // pred_check_branch
          %378 = sbr.rel (%p376) target = $region44
        $region43: #{tpu_custom_call.1} parent=11 // pred_region
          _
        $region44: #{tpu_custom_call.1} parent=11 // pred_fallthru
          _
      $region12: #{tpu_custom_call.1} parent=5 // pred_fallthru
        _
      %p379 = scmp.lt.s32.totalorder %s28, 4
      // Predicated region
      $region45: #{tpu_custom_call.1} parent=5 // pred_check
        %p380 = pneg %p379
      $region46: #{tpu_custom_call.1} parent=5 // pred_check_branch
        %382 = sbr.rel (%p380) target = $region48
      $region47: #{tpu_custom_call.1} parent=5 // pred_region
        // Predicated region
        $region49: #{tpu_custom_call.1} parent=47 // pred_check
          %p383 = pneg %p48
        $region50: #{tpu_custom_call.1} parent=47 // pred_check_branch
          %385 = sbr.rel (%p383) target = $region52
        $region51: #{tpu_custom_call.1} parent=47 // pred_region
          %s386 = sand.u32 %s38, 1
          %s387 = scalar_lea.sflag [#allocation3], %s386
          %s388 = sand.u32 %s38, 1
          %s389 = smul.addr %s388, 128
          %s390 = scalar_lea.vmem [#allocation2], %s389
          %s391 = smul.u32 8, %s28
          %s393 = ssub.s32 2048, 2048
          %394 = vsyncadd %s387, %s393
          %s395 = smul.addr %s391, 2
          %s396 = smul.addr %s395, 128
          %s397 = scalar_lea.hbm %s0, %s396
          %s398 = sshll.u32 %s390, 4
          %s399 = int_to_ptr.vmem [resolvable:$true] %s398
          %404 = dma.hbm_to_vmem [thread:$0]  %s397, 2048, %s399, %s387, 128, 128, 8
        $region52: #{tpu_custom_call.1} parent=47 // pred_fallthru
          _
        // Predicated region
        $region53: #{tpu_custom_call.1} parent=47 // pred_check
          %p405 = pneg %p74
        $region54: #{tpu_custom_call.1} parent=47 // pred_check_branch
          %407 = sbr.rel (%p405) target = $region56
        $region55: #{tpu_custom_call.1} parent=47 // pred_region
          %s408 = sand.u32 %s28, 1
          %s409 = scalar_lea.sflag [#allocation6], %s408
          %s410 = sand.u32 %s64, 1
          %s411 = smul.addr %s410, 128
          %s412 = scalar_lea.vmem [#allocation5], %s411
          %s413 = smul.u32 8, %s28
          %s415 = ssub.s32 2048, 2048
          %416 = vsyncadd %s409, %s415
          %s417 = smul.addr %s413, 2
          %s418 = smul.addr %s417, 128
          %s419 = scalar_lea.hbm %s1, %s418
          %s420 = sshll.u32 %s412, 4
          %s421 = int_to_ptr.vmem [resolvable:$true] %s420
          %426 = dma.hbm_to_vmem [thread:$0]  %s419, 2048, %s421, %s409, 128, 128, 8
        $region56: #{tpu_custom_call.1} parent=47 // pred_fallthru
          _
        // Predicated region
        $region57: #{tpu_custom_call.1} parent=47 // pred_check
          %p427 = pneg %p100
        $region58: #{tpu_custom_call.1} parent=47 // pred_check_branch
          %429 = sbr.rel (%p427) target = $region60
        $region59: #{tpu_custom_call.1} parent=47 // pred_region
          %s430 = sand.u32 %s28, 1
          %s431 = scalar_lea.sflag [#allocation6], %s430
          %s432 = sand.u32 %s90, 1
          %s433 = smul.addr %s432, 128
          %s434 = scalar_lea.vmem [#allocation7], %s433
          %s435 = smul.u32 8, %s28
          %s437 = ssub.s32 2048, 2048
          %438 = vsyncadd %s431, %s437
          %s439 = smul.addr %s435, 2
          %s440 = smul.addr %s439, 128
          %s441 = scalar_lea.hbm %s2, %s440
          %s442 = sshll.u32 %s434, 4
          %s443 = int_to_ptr.vmem [resolvable:$true] %s442
          %448 = dma.hbm_to_vmem [thread:$0]  %s441, 2048, %s443, %s431, 128, 128, 8
        $region60: #{tpu_custom_call.1} parent=47 // pred_fallthru
          _
      $region48: #{tpu_custom_call.1} parent=5 // pred_fallthru
        _
      %p449 = scmp.le.s32.totalorder 1, %s28
      %p450 = scmp.lt.s32.totalorder %s28, 5
      %p451 = pnand %p449, %p450
      %p452 = pneg %p451
      // Predicated region
      $region61: #{tpu_custom_call.1} parent=5 // pred_check
        _
      $region62: #{tpu_custom_call.1} parent=5 // pred_check_branch
        %454 = sbr.rel (%p451) target = $region64
      $region63: #{tpu_custom_call.1} parent=5 // pred_region
        %s455 = ssub.s32 %s28, 1
        %s456 = sand.u32 %s41, 1
        %s457 = scalar_lea.sflag [#allocation3], %s456
        %s458 = sand.u32 %s41, 1
        %s459 = smul.addr %s458, 128
        %s460 = scalar_lea.vmem [#allocation2], %s459
        // Predicated region
        $region65: #{tpu_custom_call.1} parent=63 // pred_check
          %p461 = pneg %p54
        $region66: #{tpu_custom_call.1} parent=63 // pred_check_branch
          %463 = sbr.rel (%p461) target = $region68
        $region67: #{tpu_custom_call.1} parent=63 // pred_region
          %464 = dma.done %s457, 2048
        $region68: #{tpu_custom_call.1} parent=63 // pred_fallthru
          _
        %s465 = sand.u32 %s33, 1
        %s466 = scalar_lea.sflag [#allocation6], %s465
        %s467 = sand.u32 %s67, 1
        %s468 = smul.addr %s467, 128
        %s469 = scalar_lea.vmem [#allocation5], %s468
        // Predicated region
        $region69: #{tpu_custom_call.1} parent=63 // pred_check
          %p470 = pneg %p80
        $region70: #{tpu_custom_call.1} parent=63 // pred_check_branch
          %472 = sbr.rel (%p470) target = $region72
        $region71: #{tpu_custom_call.1} parent=63 // pred_region
          %473 = dma.done %s466, 2048
        $region72: #{tpu_custom_call.1} parent=63 // pred_fallthru
          _
        %s474 = sand.u32 %s33, 1
        %s475 = scalar_lea.sflag [#allocation6], %s474
        %s476 = sand.u32 %s93, 1
        %s477 = smul.addr %s476, 128
        %s478 = scalar_lea.vmem [#allocation7], %s477
        // Predicated region
        $region73: #{tpu_custom_call.1} parent=63 // pred_check
          %p479 = pneg %p106
        $region74: #{tpu_custom_call.1} parent=63 // pred_check_branch
          %481 = sbr.rel (%p479) target = $region76
        $region75: #{tpu_custom_call.1} parent=63 // pred_region
          %482 = dma.done %s475, 2048
        $region76: #{tpu_custom_call.1} parent=63 // pred_fallthru
          _
        // Predicated region
        $region77: #{tpu_custom_call.1} parent=63 // pred_check
          %p483 = pneg %p127
        $region78: #{tpu_custom_call.1} parent=63 // pred_check_branch
          %485 = sbr.rel (%p483) target = $region80
        $region79: #{tpu_custom_call.1} parent=63 // pred_region
          %486 = dma.done [#allocation9], 256
        $region80: #{tpu_custom_call.1} parent=63 // pred_fallthru
          _
        // Predicated region
        $region81: #{tpu_custom_call.1} parent=63 // pred_check
          %p487 = pneg %p148
        $region82: #{tpu_custom_call.1} parent=63 // pred_check_branch
          %489 = sbr.rel (%p487) target = $region84
        $region83: #{tpu_custom_call.1} parent=63 // pred_region
          %490 = dma.done [#allocation9], 256
        $region84: #{tpu_custom_call.1} parent=63 // pred_fallthru
          _
        // Predicated region
        $region85: #{tpu_custom_call.1} parent=63 // pred_check
          %p491 = pneg %p190
        $region86: #{tpu_custom_call.1} parent=63 // pred_check_branch
          %493 = sbr.rel (%p491) target = $region88
        $region87: #{tpu_custom_call.1} parent=63 // pred_region
          %494 = dma.done [#allocation12], 256
        $region88: #{tpu_custom_call.1} parent=63 // pred_fallthru
          _
        // Predicated region
        $region89: #{tpu_custom_call.1} parent=63 // pred_check
          %p495 = pneg %p211
        $region90: #{tpu_custom_call.1} parent=63 // pred_check_branch
          %497 = sbr.rel (%p495) target = $region92
        $region91: #{tpu_custom_call.1} parent=63 // pred_region
          %498 = dma.done [#allocation12], 256
        $region92: #{tpu_custom_call.1} parent=63 // pred_fallthru
          _
        %s499 = sand.u32 %s41, 1
        %s500 = scalar_lea.sflag [#allocation3], %s499
        %s501 = sand.u32 %s41, 1
        %s502 = smul.addr %s501, 128
        %s503 = scalar_lea.vmem [#allocation2], %s502
        %p504 = pneg %p54
        %p505 = pneg %p51
        %s506 = sand.u32 %s33, 1
        %s507 = scalar_lea.sflag [#allocation6], %s506
        %s508 = sand.u32 %s67, 1
        %s509 = smul.addr %s508, 128
        %s510 = scalar_lea.vmem [#allocation5], %s509
        %p511 = pneg %p80
        %p512 = pneg %p77
        %s513 = sand.u32 %s33, 1
        %s514 = scalar_lea.sflag [#allocation6], %s513
        %s515 = sand.u32 %s93, 1
        %s516 = smul.addr %s515, 128
        %s517 = scalar_lea.vmem [#allocation7], %s516
        %p518 = pneg %p106
        %p519 = pneg %p103
        %p520 = pneg %p127
        %p521 = pneg %p124
        %p522 = pneg %p148
        %p523 = pneg %p145
        %p524 = pneg %p169
        %p525 = pneg %p166
        %p526 = pneg %p190
        %p527 = pneg %p187
        %p528 = pneg %p211
        %p529 = pneg %p208
        %p530 = pneg %p232
        %p531 = pneg %p229
        %p532 = pneg %p253
        %p533 = pneg %p250
        %p534 = pneg %p274
        %p535 = pneg %p271
        %p536 = pneg %p300
        %p537 = pneg %p297
        %s538 = sand.u32 %s287, 1
        %s539 = scalar_lea.sflag [#allocation4], %s538
        %s540 = sand.u32 %s287, 1
        %s541 = smul.addr %s540, 128
        %s542 = scalar_lea.vmem [#allocation14], %s541
        %s543 = smul.u32 8, %s33
        %s544 = smul.u32 8, %s33
        %s545 = smul.u32 8, %s33
        %s546 = smul.u32 8, %s33
        %v548 = vld [vmem:[%s460] sm:$0xff]
        %v549 = vld [vmem:[%s460 + $0x8] sm:$0xff]
        %v550 = vld [vmem:[%s460 + $0x10] sm:$0xff]
        %v551 = vld [vmem:[%s460 + $0x18] sm:$0xff]
        %v552 = vld [vmem:[%s460 + $0x20] sm:$0xff]
        %v553 = vld [vmem:[%s460 + $0x28] sm:$0xff]
        %v554 = vld [vmem:[%s460 + $0x30] sm:$0xff]
        %v555 = vld [vmem:[%s460 + $0x38] sm:$0xff]
        %v556 = vld [vmem:[%s460 + $0x40] sm:$0xff]
        %v557 = vld [vmem:[%s460 + $0x48] sm:$0xff]
        %v558 = vld [vmem:[%s460 + $0x50] sm:$0xff]
        %v559 = vld [vmem:[%s460 + $0x58] sm:$0xff]
        %v560 = vld [vmem:[%s460 + $0x60] sm:$0xff]
        %v561 = vld [vmem:[%s460 + $0x68] sm:$0xff]
        %v562 = vld [vmem:[%s460 + $0x70] sm:$0xff]
        %v563 = vld [vmem:[%s460 + $0x78] sm:$0xff]
        %v564 = vld [vmem:[%s469] sm:$0xff]
        %v565 = vld [vmem:[%s469 + $0x8] sm:$0xff]
        %v566 = vld [vmem:[%s469 + $0x10] sm:$0xff]
        %v567 = vld [vmem:[%s469 + $0x18] sm:$0xff]
        %v568 = vld [vmem:[%s469 + $0x20] sm:$0xff]
        %v569 = vld [vmem:[%s469 + $0x28] sm:$0xff]
        %v570 = vld [vmem:[%s469 + $0x30] sm:$0xff]
        %v571 = vld [vmem:[%s469 + $0x38] sm:$0xff]
        %v572 = vld [vmem:[%s469 + $0x40] sm:$0xff]
        %v573 = vld [vmem:[%s469 + $0x48] sm:$0xff]
        %v574 = vld [vmem:[%s469 + $0x50] sm:$0xff]
        %v575 = vld [vmem:[%s469 + $0x58] sm:$0xff]
        %v576 = vld [vmem:[%s469 + $0x60] sm:$0xff]
        %v577 = vld [vmem:[%s469 + $0x68] sm:$0xff]
        %v578 = vld [vmem:[%s469 + $0x70] sm:$0xff]
        %v579 = vld [vmem:[%s469 + $0x78] sm:$0xff]
        %v580 = vld [vmem:[%s478] sm:$0xff]
        %v581 = vld [vmem:[%s478 + $0x8] sm:$0xff]
        %v582 = vld [vmem:[%s478 + $0x10] sm:$0xff]
        %v583 = vld [vmem:[%s478 + $0x18] sm:$0xff]
        %v584 = vld [vmem:[%s478 + $0x20] sm:$0xff]
        %v585 = vld [vmem:[%s478 + $0x28] sm:$0xff]
        %v586 = vld [vmem:[%s478 + $0x30] sm:$0xff]
        %v587 = vld [vmem:[%s478 + $0x38] sm:$0xff]
        %v588 = vld [vmem:[%s478 + $0x40] sm:$0xff]
        %v589 = vld [vmem:[%s478 + $0x48] sm:$0xff]
        %v590 = vld [vmem:[%s478 + $0x50] sm:$0xff]
        %v591 = vld [vmem:[%s478 + $0x58] sm:$0xff]
        %v592 = vld [vmem:[%s478 + $0x60] sm:$0xff]
        %v593 = vld [vmem:[%s478 + $0x68] sm:$0xff]
        %v594 = vld [vmem:[%s478 + $0x70] sm:$0xff]
        %v595 = vld [vmem:[%s478 + $0x78] sm:$0xff]
        %v596 = vpack.c.bf16 %v549, %v548
        %v597 = vpack.c.bf16 %v551, %v550
        %v598 = vpack.c.bf16 %v553, %v552
        %v599 = vpack.c.bf16 %v555, %v554
        %v600 = vpack.c.bf16 %v557, %v556
        %v601 = vpack.c.bf16 %v559, %v558
        %v602 = vpack.c.bf16 %v561, %v560
        %v603 = vpack.c.bf16 %v563, %v562
        %v604 = vld [vmem:[#allocation10] sm:$0xf]
        %v605 = vld [vmem:[#allocation10 + $0x4] sm:$0xf]
        %v606 = vld [vmem:[#allocation10 + $0x8] sm:$0xf]
        %v607 = vld [vmem:[#allocation10 + $0xc] sm:$0xf]
        %v612 = vunpack.c.l.b16 %v604
        %v613 = vunpack.c.l.b16 %v605
        %v614 = vunpack.c.l.b16 %v606
        %v615 = vunpack.c.l.b16 %v607
        %v616 = vpack.c.b16 %v613, %v612
        %v617 = vpack.c.b16 %v615, %v614
        %vm620 = vcmask 261120
        %v622 = vsel %vm620, %v596, 0
        %v625 = vsel %vm620, %v597, 0
        %v628 = vsel %vm620, %v598, 0
        %v631 = vsel %vm620, %v599, 0
        %v634 = vsel %vm620, %v600, 0
        %v637 = vsel %vm620, %v601, 0
        %v640 = vsel %vm620, %v602, 0
        %v643 = vsel %vm620, %v603, 0
        %645 = vmatprep.subr.bf16.mxu0 0
        %646 = vmatpush1.bf16.msra.mxu0 %v616
        %647 = vmatprep.subr.bf16.mxu0 0
        %648 = vmatpush1.bf16.msra.mxu0 %v617
        %649 = vmatprep.subr.bf16.mxu0 0
        %650 = vmatpush1.bf16.msra.mxu0 0
        %651 = vmatprep.subr.bf16.mxu0 0
        %652 = vmatpush1.bf16.msra.mxu0 0
        %653 = vmatprep.subr.bf16.mxu0 0
        %654 = vmatpush1.bf16.msra.mxu0 0
        %655 = vmatprep.subr.bf16.mxu0 0
        %656 = vmatpush1.bf16.msra.mxu0 0
        %657 = vmatprep.subr.bf16.mxu0 0
        %658 = vmatpush1.bf16.msra.mxu0 0
        %659 = vmatprep.subr.bf16.mxu0 0
        %660 = vmatpush1.bf16.msra.mxu0 0
        %661 = vmatprep.subr.bf16.mxu0 0
        %662 = vmatpush1.bf16.msra.mxu0 0
        %663 = vmatprep.subr.bf16.mxu0 0
        %664 = vmatpush1.bf16.msra.mxu0 0
        %665 = vmatprep.subr.bf16.mxu0 0
        %666 = vmatpush1.bf16.msra.mxu0 0
        %667 = vmatprep.subr.bf16.mxu0 0
        %668 = vmatpush1.bf16.msra.mxu0 0
        %669 = vmatprep.subr.bf16.mxu0 0
        %670 = vmatpush1.bf16.msra.mxu0 0
        %671 = vmatprep.subr.bf16.mxu0 0
        %672 = vmatpush1.bf16.msra.mxu0 0
        %673 = vmatprep.subr.bf16.mxu0 0
        %674 = vmatpush1.bf16.msra.mxu0 0
        %675 = vmatprep.subr.bf16.mxu0 0
        %676 = vmatpush1.bf16.msra.mxu0 0
        %677 = vmatprep.mubr.bf16.mxu0 0
        %678 = vmatmul.mubr.bf16.gmra.mrb[0].mxu0 %v622
        %v679 = vpop.f32.mrb[0].mxu0
        %v680 = vadd.f32 0.0, %v679
        %v681 = vpop.f32.mrb[0].mxu0
        %v682 = vpop.f32.mrb[0].mxu0
        %v683 = vadd.f32 0.0, %v682
        %v684 = vpop.f32.mrb[0].mxu0
        %685 = vmatprep.mubr.bf16.mxu0 0
        %686 = vmatmul.mubr.bf16.gmra.mrb[0].mxu0 %v625
        %v687 = vpop.f32.mrb[0].mxu0
        %v688 = vadd.f32 0.0, %v687
        %v689 = vpop.f32.mrb[0].mxu0
        %v690 = vpop.f32.mrb[0].mxu0
        %v691 = vadd.f32 0.0, %v690
        %v692 = vpop.f32.mrb[0].mxu0
        %693 = vmatprep.mubr.bf16.mxu0 0
        %694 = vmatmul.mubr.bf16.gmra.mrb[0].mxu0 %v628
        %v695 = vpop.f32.mrb[0].mxu0
        %v696 = vadd.f32 0.0, %v695
        %v697 = vpop.f32.mrb[0].mxu0
        %v698 = vpop.f32.mrb[0].mxu0
        %v699 = vadd.f32 0.0, %v698
        %v700 = vpop.f32.mrb[0].mxu0
        %701 = vmatprep.mubr.bf16.mxu0 0
        %702 = vmatmul.mubr.bf16.gmra.mrb[0].mxu0 %v631
        %v703 = vpop.f32.mrb[0].mxu0
        %v704 = vadd.f32 0.0, %v703
        %v705 = vpop.f32.mrb[0].mxu0
        %v706 = vpop.f32.mrb[0].mxu0
        %v707 = vadd.f32 0.0, %v706
        %v708 = vpop.f32.mrb[0].mxu0
        %709 = vmatprep.mubr.bf16.mxu0 0
        %710 = vmatmul.mubr.bf16.gmra.mrb[0].mxu0 %v634
        %v711 = vpop.f32.mrb[0].mxu0
        %v712 = vadd.f32 0.0, %v711
        %v713 = vpop.f32.mrb[0].mxu0
        %v714 = vpop.f32.mrb[0].mxu0
        %v715 = vadd.f32 0.0, %v714
        %v716 = vpop.f32.mrb[0].mxu0
        %717 = vmatprep.mubr.bf16.mxu0 0
        %718 = vmatmul.mubr.bf16.gmra.mrb[0].mxu0 %v637
        %v719 = vpop.f32.mrb[0].mxu0
        %v720 = vadd.f32 0.0, %v719
        %v721 = vpop.f32.mrb[0].mxu0
        %v722 = vpop.f32.mrb[0].mxu0
        %v723 = vadd.f32 0.0, %v722
        %v724 = vpop.f32.mrb[0].mxu0
        %725 = vmatprep.mubr.bf16.mxu0 0
        %726 = vmatmul.mubr.bf16.gmra.mrb[0].mxu0 %v640
        %v727 = vpop.f32.mrb[0].mxu0
        %v728 = vadd.f32 0.0, %v727
        %v729 = vpop.f32.mrb[0].mxu0
        %v730 = vpop.f32.mrb[0].mxu0
        %v731 = vadd.f32 0.0, %v730
        %v732 = vpop.f32.mrb[0].mxu0
        %733 = vmatprep.mubr.bf16.mxu0 0
        %734 = vmatmul.mubr.bf16.gmra.mrb[0].mxu0 %v643
        %v735 = vpop.f32.mrb[0].mxu0
        %v736 = vadd.f32 0.0, %v735
        %v737 = vpop.f32.mrb[0].mxu0
        %v738 = vpop.f32.mrb[0].mxu0
        %v739 = vadd.f32 0.0, %v738
        %v740 = vpop.f32.mrb[0].mxu0
        %741 = vdwg.mxu0
        %v742 = vpack.c.bf16 %v565, %v564
        %v743 = vpack.c.bf16 %v567, %v566
        %v744 = vpack.c.bf16 %v569, %v568
        %v745 = vpack.c.bf16 %v571, %v570
        %v746 = vpack.c.bf16 %v573, %v572
        %v747 = vpack.c.bf16 %v575, %v574
        %v748 = vpack.c.bf16 %v577, %v576
        %v749 = vpack.c.bf16 %v579, %v578
        %v750 = vld [vmem:[%s5] sm:$0xf]
        %v751 = vld [vmem:[%s5 + $0x4] sm:$0xf]
        %v752 = vld [vmem:[%s5 + $0x8] sm:$0xf]
        %v753 = vld [vmem:[%s5 + $0xc] sm:$0xf]
        %v758 = vunpack.c.l.b16 %v750
        %v759 = vunpack.c.l.b16 %v751
        %v760 = vunpack.c.l.b16 %v752
        %v761 = vunpack.c.l.b16 %v753
        %v762 = vpack.c.b16 %v759, %v758
        %v763 = vpack.c.b16 %v761, %v760
        %v767 = vsel %vm620, %v742, 0
        %v770 = vsel %vm620, %v743, 0
        %v773 = vsel %vm620, %v744, 0
        %v776 = vsel %vm620, %v745, 0
        %v779 = vsel %vm620, %v746, 0
        %v782 = vsel %vm620, %v747, 0
        %v785 = vsel %vm620, %v748, 0
        %v788 = vsel %vm620, %v749, 0
        %790 = vmatprep.subr.bf16.mxu0 0
        %791 = vmatpush1.bf16.msra.mxu0 %v762
        %792 = vmatprep.subr.bf16.mxu0 0
        %793 = vmatpush1.bf16.msra.mxu0 %v763
        %794 = vmatprep.subr.bf16.mxu0 0
        %795 = vmatpush1.bf16.msra.mxu0 0
        %796 = vmatprep.subr.bf16.mxu0 0
        %797 = vmatpush1.bf16.msra.mxu0 0
        %798 = vmatprep.subr.bf16.mxu0 0
        %799 = vmatpush1.bf16.msra.mxu0 0
        %800 = vmatprep.subr.bf16.mxu0 0
        %801 = vmatpush1.bf16.msra.mxu0 0
        %802 = vmatprep.subr.bf16.mxu0 0
        %803 = vmatpush1.bf16.msra.mxu0 0
        %804 = vmatprep.subr.bf16.mxu0 0
        %805 = vmatpush1.bf16.msra.mxu0 0
        %806 = vmatprep.subr.bf16.mxu0 0
        %807 = vmatpush1.bf16.msra.mxu0 0
        %808 = vmatprep.subr.bf16.mxu0 0
        %809 = vmatpush1.bf16.msra.mxu0 0
        %810 = vmatprep.subr.bf16.mxu0 0
        %811 = vmatpush1.bf16.msra.mxu0 0
        %812 = vmatprep.subr.bf16.mxu0 0
        %813 = vmatpush1.bf16.msra.mxu0 0
        %814 = vmatprep.subr.bf16.mxu0 0
        %815 = vmatpush1.bf16.msra.mxu0 0
        %816 = vmatprep.subr.bf16.mxu0 0
        %817 = vmatpush1.bf16.msra.mxu0 0
        %818 = vmatprep.subr.bf16.mxu0 0
        %819 = vmatpush1.bf16.msra.mxu0 0
        %820 = vmatprep.subr.bf16.mxu0 0
        %821 = vmatpush1.bf16.msra.mxu0 0
        %822 = vmatprep.mubr.bf16.mxu0 0
        %823 = vmatmul.mubr.bf16.gmra.mrb[0].mxu0 %v767
        %v824 = vpop.f32.mrb[0].mxu0
        %v825 = vadd.f32 0.0, %v824
        %v826 = vpop.f32.mrb[0].mxu0
        %v827 = vpop.f32.mrb[0].mxu0
        %v828 = vadd.f32 0.0, %v827
        %v829 = vpop.f32.mrb[0].mxu0
        %830 = vmatprep.mubr.bf16.mxu0 0
        %831 = vmatmul.mubr.bf16.gmra.mrb[0].mxu0 %v770
        %v832 = vpop.f32.mrb[0].mxu0
        %v833 = vadd.f32 0.0, %v832
        %v834 = vpop.f32.mrb[0].mxu0
        %v835 = vpop.f32.mrb[0].mxu0
        %v836 = vadd.f32 0.0, %v835
        %v837 = vpop.f32.mrb[0].mxu0
        %838 = vmatprep.mubr.bf16.mxu0 0
        %839 = vmatmul.mubr.bf16.gmra.mrb[0].mxu0 %v773
        %v840 = vpop.f32.mrb[0].mxu0
        %v841 = vadd.f32 0.0, %v840
        %v842 = vpop.f32.mrb[0].mxu0
        %v843 = vpop.f32.mrb[0].mxu0
        %v844 = vadd.f32 0.0, %v843
        %v845 = vpop.f32.mrb[0].mxu0
        %846 = vmatprep.mubr.bf16.mxu0 0
        %847 = vmatmul.mubr.bf16.gmra.mrb[0].mxu0 %v776
        %v848 = vpop.f32.mrb[0].mxu0
        %v849 = vadd.f32 0.0, %v848
        %v850 = vpop.f32.mrb[0].mxu0
        %v851 = vpop.f32.mrb[0].mxu0
        %v852 = vadd.f32 0.0, %v851
        %v853 = vpop.f32.mrb[0].mxu0
        %854 = vmatprep.mubr.bf16.mxu0 0
        %855 = vmatmul.mubr.bf16.gmra.mrb[0].mxu0 %v779
        %v856 = vpop.f32.mrb[0].mxu0
        %v857 = vadd.f32 0.0, %v856
        %v858 = vpop.f32.mrb[0].mxu0
        %v859 = vpop.f32.mrb[0].mxu0
        %v860 = vadd.f32 0.0, %v859
        %v861 = vpop.f32.mrb[0].mxu0
        %862 = vmatprep.mubr.bf16.mxu0 0
        %863 = vmatmul.mubr.bf16.gmra.mrb[0].mxu0 %v782
        %v864 = vpop.f32.mrb[0].mxu0
        %v865 = vadd.f32 0.0, %v864
        %v866 = vpop.f32.mrb[0].mxu0
        %v867 = vpop.f32.mrb[0].mxu0
        %v868 = vadd.f32 0.0, %v867
        %v869 = vpop.f32.mrb[0].mxu0
        %870 = vmatprep.mubr.bf16.mxu0 0
        %871 = vmatmul.mubr.bf16.gmra.mrb[0].mxu0 %v785
        %v872 = vpop.f32.mrb[0].mxu0
        %v873 = vadd.f32 0.0, %v872
        %v874 = vpop.f32.mrb[0].mxu0
        %v875 = vpop.f32.mrb[0].mxu0
        %v876 = vadd.f32 0.0, %v875
        %v877 = vpop.f32.mrb[0].mxu0
        %878 = vmatprep.mubr.bf16.mxu0 0
        %879 = vmatmul.mubr.bf16.gmra.mrb[0].mxu0 %v788
        %v880 = vpop.f32.mrb[0].mxu0
        %v881 = vadd.f32 0.0, %v880
        %v882 = vpop.f32.mrb[0].mxu0
        %v883 = vpop.f32.mrb[0].mxu0
        %v884 = vadd.f32 0.0, %v883
        %v885 = vpop.f32.mrb[0].mxu0
        %886 = vdwg.mxu0
        %v887 = vpack.c.bf16 %v581, %v580
        %v888 = vpack.c.bf16 %v583, %v582
        %v889 = vpack.c.bf16 %v585, %v584
        %v890 = vpack.c.bf16 %v587, %v586
        %v891 = vpack.c.bf16 %v589, %v588
        %v892 = vpack.c.bf16 %v591, %v590
        %v893 = vpack.c.bf16 %v593, %v592
        %v894 = vpack.c.bf16 %v595, %v594
        %v895 = vld [vmem:[#allocation11] sm:$0xf]
        %v896 = vld [vmem:[#allocation11 + $0x4] sm:$0xf]
        %v897 = vld [vmem:[#allocation11 + $0x8] sm:$0xf]
        %v898 = vld [vmem:[#allocation11 + $0xc] sm:$0xf]
        %v903 = vunpack.c.l.b16 %v895
        %v904 = vunpack.c.l.b16 %v896
        %v905 = vunpack.c.l.b16 %v897
        %v906 = vunpack.c.l.b16 %v898
        %v907 = vpack.c.b16 %v904, %v903
        %v908 = vpack.c.b16 %v906, %v905
        %v912 = vsel %vm620, %v887, 0
        %v915 = vsel %vm620, %v888, 0
        %v918 = vsel %vm620, %v889, 0
        %v921 = vsel %vm620, %v890, 0
        %v924 = vsel %vm620, %v891, 0
        %v927 = vsel %vm620, %v892, 0
        %v930 = vsel %vm620, %v893, 0
        %v933 = vsel %vm620, %v894, 0
        %935 = vmatprep.subr.bf16.mxu0 0
        %936 = vmatpush1.bf16.msra.mxu0 %v907
        %937 = vmatprep.subr.bf16.mxu0 0
        %938 = vmatpush1.bf16.msra.mxu0 %v908
        %939 = vmatprep.subr.bf16.mxu0 0
        %940 = vmatpush1.bf16.msra.mxu0 0
        %941 = vmatprep.subr.bf16.mxu0 0
        %942 = vmatpush1.bf16.msra.mxu0 0
        %943 = vmatprep.subr.bf16.mxu0 0
        %944 = vmatpush1.bf16.msra.mxu0 0
        %945 = vmatprep.subr.bf16.mxu0 0
        %946 = vmatpush1.bf16.msra.mxu0 0
        %947 = vmatprep.subr.bf16.mxu0 0
        %948 = vmatpush1.bf16.msra.mxu0 0
        %949 = vmatprep.subr.bf16.mxu0 0
        %950 = vmatpush1.bf16.msra.mxu0 0
        %951 = vmatprep.subr.bf16.mxu0 0
        %952 = vmatpush1.bf16.msra.mxu0 0
        %953 = vmatprep.subr.bf16.mxu0 0
        %954 = vmatpush1.bf16.msra.mxu0 0
        %955 = vmatprep.subr.bf16.mxu0 0
        %956 = vmatpush1.bf16.msra.mxu0 0
        %957 = vmatprep.subr.bf16.mxu0 0
        %958 = vmatpush1.bf16.msra.mxu0 0
        %959 = vmatprep.subr.bf16.mxu0 0
        %960 = vmatpush1.bf16.msra.mxu0 0
        %961 = vmatprep.subr.bf16.mxu0 0
        %962 = vmatpush1.bf16.msra.mxu0 0
        %963 = vmatprep.subr.bf16.mxu0 0
        %964 = vmatpush1.bf16.msra.mxu0 0
        %965 = vmatprep.subr.bf16.mxu0 0
        %966 = vmatpush1.bf16.msra.mxu0 0
        %967 = vmatprep.mubr.bf16.mxu0 0
        %968 = vmatmul.mubr.bf16.gmra.mrb[0].mxu0 %v912
        %v969 = vpop.f32.mrb[0].mxu0
        %v970 = vadd.f32 0.0, %v969
        %v971 = vpop.f32.mrb[0].mxu0
        %v972 = vpop.f32.mrb[0].mxu0
        %v973 = vadd.f32 0.0, %v972
        %v974 = vpop.f32.mrb[0].mxu0
        %975 = vmatprep.mubr.bf16.mxu0 0
        %976 = vmatmul.mubr.bf16.gmra.mrb[0].mxu0 %v915
        %v977 = vpop.f32.mrb[0].mxu0
        %v978 = vadd.f32 0.0, %v977
        %v979 = vpop.f32.mrb[0].mxu0
        %v980 = vpop.f32.mrb[0].mxu0
        %v981 = vadd.f32 0.0, %v980
        %v982 = vpop.f32.mrb[0].mxu0
        %983 = vmatprep.mubr.bf16.mxu0 0
        %984 = vmatmul.mubr.bf16.gmra.mrb[0].mxu0 %v918
        %v985 = vpop.f32.mrb[0].mxu0
        %v986 = vadd.f32 0.0, %v985
        %v987 = vpop.f32.mrb[0].mxu0
        %v988 = vpop.f32.mrb[0].mxu0
        %v989 = vadd.f32 0.0, %v988
        %v990 = vpop.f32.mrb[0].mxu0
        %991 = vmatprep.mubr.bf16.mxu0 0
        %992 = vmatmul.mubr.bf16.gmra.mrb[0].mxu0 %v921
        %v993 = vpop.f32.mrb[0].mxu0
        %v994 = vadd.f32 0.0, %v993
        %v995 = vpop.f32.mrb[0].mxu0
        %v996 = vpop.f32.mrb[0].mxu0
        %v997 = vadd.f32 0.0, %v996
        %v998 = vpop.f32.mrb[0].mxu0
        %999 = vmatprep.mubr.bf16.mxu0 0
        %1000 = vmatmul.mubr.bf16.gmra.mrb[0].mxu0 %v924
        %v1001 = vpop.f32.mrb[0].mxu0
        %v1002 = vadd.f32 0.0, %v1001
        %v1003 = vpop.f32.mrb[0].mxu0
        %v1004 = vpop.f32.mrb[0].mxu0
        %v1005 = vadd.f32 0.0, %v1004
        %v1006 = vpop.f32.mrb[0].mxu0
        %1007 = vmatprep.mubr.bf16.mxu0 0
        %1008 = vmatmul.mubr.bf16.gmra.mrb[0].mxu0 %v927
        %v1009 = vpop.f32.mrb[0].mxu0
        %v1010 = vadd.f32 0.0, %v1009
        %v1011 = vpop.f32.mrb[0].mxu0
        %v1012 = vpop.f32.mrb[0].mxu0
        %v1013 = vadd.f32 0.0, %v1012
        %v1014 = vpop.f32.mrb[0].mxu0
        %1015 = vmatprep.mubr.bf16.mxu0 0
        %1016 = vmatmul.mubr.bf16.gmra.mrb[0].mxu0 %v930
        %v1017 = vpop.f32.mrb[0].mxu0
        %v1018 = vadd.f32 0.0, %v1017
        %v1019 = vpop.f32.mrb[0].mxu0
        %v1020 = vpop.f32.mrb[0].mxu0
        %v1021 = vadd.f32 0.0, %v1020
        %v1022 = vpop.f32.mrb[0].mxu0
        %1023 = vmatprep.mubr.bf16.mxu0 0
        %1024 = vmatmul.mubr.bf16.gmra.mrb[0].mxu0 %v933
        %v1025 = vpop.f32.mrb[0].mxu0
        %v1026 = vadd.f32 0.0, %v1025
        %v1027 = vpop.f32.mrb[0].mxu0
        %v1028 = vpop.f32.mrb[0].mxu0
        %v1029 = vadd.f32 0.0, %v1028
        %v1030 = vpop.f32.mrb[0].mxu0
        %1031 = vdwg.mxu0
        %1048 = vrot.lane.b32.xlu0 %v680, 120
        %v1049 = vpop.permute.xlu0 %1048
        %1050 = vrot.lane.b32.xlu0 %v683, 120
        %v1051 = vpop.permute.xlu0 %1050
        %1052 = vrot.lane.b32.xlu0 %v688, 120
        %v1053 = vpop.permute.xlu0 %1052
        %1054 = vrot.lane.b32.xlu0 %v691, 120
        %v1055 = vpop.permute.xlu0 %1054
        %1056 = vrot.lane.b32.xlu0 %v696, 120
        %v1057 = vpop.permute.xlu0 %1056
        %1058 = vrot.lane.b32.xlu0 %v699, 120
        %v1059 = vpop.permute.xlu0 %1058
        %1060 = vrot.lane.b32.xlu0 %v704, 120
        %v1061 = vpop.permute.xlu0 %1060
        %1062 = vrot.lane.b32.xlu0 %v707, 120
        %v1063 = vpop.permute.xlu0 %1062
        %1064 = vrot.lane.b32.xlu0 %v712, 120
        %v1065 = vpop.permute.xlu0 %1064
        %1066 = vrot.lane.b32.xlu0 %v715, 120
        %v1067 = vpop.permute.xlu0 %1066
        %1068 = vrot.lane.b32.xlu0 %v720, 120
        %v1069 = vpop.permute.xlu0 %1068
        %1070 = vrot.lane.b32.xlu0 %v723, 120
        %v1071 = vpop.permute.xlu0 %1070
        %1072 = vrot.lane.b32.xlu0 %v728, 120
        %v1073 = vpop.permute.xlu0 %1072
        %1074 = vrot.lane.b32.xlu0 %v731, 120
        %v1075 = vpop.permute.xlu0 %1074
        %1076 = vrot.lane.b32.xlu0 %v736, 120
        %v1077 = vpop.permute.xlu0 %1076
        %1078 = vrot.lane.b32.xlu0 %v739, 120
        %v1079 = vpop.permute.xlu0 %1078
        %1096 = vrot.lane.b32.xlu0 %v680, 112
        %v1097 = vpop.permute.xlu0 %1096
        %1098 = vrot.lane.b32.xlu0 %v683, 112
        %v1099 = vpop.permute.xlu0 %1098
        %1100 = vrot.lane.b32.xlu0 %v688, 112
        %v1101 = vpop.permute.xlu0 %1100
        %1102 = vrot.lane.b32.xlu0 %v691, 112
        %v1103 = vpop.permute.xlu0 %1102
        %1104 = vrot.lane.b32.xlu0 %v696, 112
        %v1105 = vpop.permute.xlu0 %1104
        %1106 = vrot.lane.b32.xlu0 %v699, 112
        %v1107 = vpop.permute.xlu0 %1106
        %1108 = vrot.lane.b32.xlu0 %v704, 112
        %v1109 = vpop.permute.xlu0 %1108
        %1110 = vrot.lane.b32.xlu0 %v707, 112
        %v1111 = vpop.permute.xlu0 %1110
        %1112 = vrot.lane.b32.xlu0 %v712, 112
        %v1113 = vpop.permute.xlu0 %1112
        %1114 = vrot.lane.b32.xlu0 %v715, 112
        %v1115 = vpop.permute.xlu0 %1114
        %1116 = vrot.lane.b32.xlu0 %v720, 112
        %v1117 = vpop.permute.xlu0 %1116
        %1118 = vrot.lane.b32.xlu0 %v723, 112
        %v1119 = vpop.permute.xlu0 %1118
        %1120 = vrot.lane.b32.xlu0 %v728, 112
        %v1121 = vpop.permute.xlu0 %1120
        %1122 = vrot.lane.b32.xlu0 %v731, 112
        %v1123 = vpop.permute.xlu0 %1122
        %1124 = vrot.lane.b32.xlu0 %v736, 112
        %v1125 = vpop.permute.xlu0 %1124
        %1126 = vrot.lane.b32.xlu0 %v739, 112
        %v1127 = vpop.permute.xlu0 %1126
        %1144 = vrot.lane.b32.xlu0 %v680, 104
        %v1145 = vpop.permute.xlu0 %1144
        %1146 = vrot.lane.b32.xlu0 %v683, 104
        %v1147 = vpop.permute.xlu0 %1146
        %1148 = vrot.lane.b32.xlu0 %v688, 104
        %v1149 = vpop.permute.xlu0 %1148
        %1150 = vrot.lane.b32.xlu0 %v691, 104
        %v1151 = vpop.permute.xlu0 %1150
        %1152 = vrot.lane.b32.xlu0 %v696, 104
        %v1153 = vpop.permute.xlu0 %1152
        %1154 = vrot.lane.b32.xlu0 %v699, 104
        %v1155 = vpop.permute.xlu0 %1154
        %1156 = vrot.lane.b32.xlu0 %v704, 104
        %v1157 = vpop.permute.xlu0 %1156
        %1158 = vrot.lane.b32.xlu0 %v707, 104
        %v1159 = vpop.permute.xlu0 %1158
        %1160 = vrot.lane.b32.xlu0 %v712, 104
        %v1161 = vpop.permute.xlu0 %1160
        %1162 = vrot.lane.b32.xlu0 %v715, 104
        %v1163 = vpop.permute.xlu0 %1162
        %1164 = vrot.lane.b32.xlu0 %v720, 104
        %v1165 = vpop.permute.xlu0 %1164
        %1166 = vrot.lane.b32.xlu0 %v723, 104
        %v1167 = vpop.permute.xlu0 %1166
        %1168 = vrot.lane.b32.xlu0 %v728, 104
        %v1169 = vpop.permute.xlu0 %1168
        %1170 = vrot.lane.b32.xlu0 %v731, 104
        %v1171 = vpop.permute.xlu0 %1170
        %1172 = vrot.lane.b32.xlu0 %v736, 104
        %v1173 = vpop.permute.xlu0 %1172
        %1174 = vrot.lane.b32.xlu0 %v739, 104
        %v1175 = vpop.permute.xlu0 %1174
        %v1192 = vpack.c.bf16 %v683, %v680
        %v1193 = vpack.c.bf16 %v691, %v688
        %v1194 = vpack.c.bf16 %v699, %v696
        %v1195 = vpack.c.bf16 %v707, %v704
        %v1196 = vpack.c.bf16 %v715, %v712
        %v1197 = vpack.c.bf16 %v723, %v720
        %v1198 = vpack.c.bf16 %v731, %v728
        %v1199 = vpack.c.bf16 %v739, %v736
        %v1200 = vpack.c.bf16 %v1051, %v1049
        %v1201 = vpack.c.bf16 %v1055, %v1053
        %v1202 = vpack.c.bf16 %v1059, %v1057
        %v1203 = vpack.c.bf16 %v1063, %v1061
        %v1204 = vpack.c.bf16 %v1067, %v1065
        %v1205 = vpack.c.bf16 %v1071, %v1069
        %v1206 = vpack.c.bf16 %v1075, %v1073
        %v1207 = vpack.c.bf16 %v1079, %v1077
        %v1208 = vpack.c.bf16 %v1099, %v1097
        %v1209 = vpack.c.bf16 %v1103, %v1101
        %v1210 = vpack.c.bf16 %v1107, %v1105
        %v1211 = vpack.c.bf16 %v1111, %v1109
        %v1212 = vpack.c.bf16 %v1115, %v1113
        %v1213 = vpack.c.bf16 %v1119, %v1117
        %v1214 = vpack.c.bf16 %v1123, %v1121
        %v1215 = vpack.c.bf16 %v1127, %v1125
        %v1216 = vpack.c.bf16 %v1147, %v1145
        %v1217 = vpack.c.bf16 %v1151, %v1149
        %v1218 = vpack.c.bf16 %v1155, %v1153
        %v1219 = vpack.c.bf16 %v1159, %v1157
        %v1220 = vpack.c.bf16 %v1163, %v1161
        %v1221 = vpack.c.bf16 %v1167, %v1165
        %v1222 = vpack.c.bf16 %v1171, %v1169
        %v1223 = vpack.c.bf16 %v1175, %v1173
        %1240 = vrot.lane.b32.xlu0 %v825, 120
        %v1241 = vpop.permute.xlu0 %1240
        %1242 = vrot.lane.b32.xlu0 %v828, 120
        %v1243 = vpop.permute.xlu0 %1242
        %1244 = vrot.lane.b32.xlu0 %v833, 120
        %v1245 = vpop.permute.xlu0 %1244
        %1246 = vrot.lane.b32.xlu0 %v836, 120
        %v1247 = vpop.permute.xlu0 %1246
        %1248 = vrot.lane.b32.xlu0 %v841, 120
        %v1249 = vpop.permute.xlu0 %1248
        %1250 = vrot.lane.b32.xlu0 %v844, 120
        %v1251 = vpop.permute.xlu0 %1250
        %1252 = vrot.lane.b32.xlu0 %v849, 120
        %v1253 = vpop.permute.xlu0 %1252
        %1254 = vrot.lane.b32.xlu0 %v852, 120
        %v1255 = vpop.permute.xlu0 %1254
        %1256 = vrot.lane.b32.xlu0 %v857, 120
        %v1257 = vpop.permute.xlu0 %1256
        %1258 = vrot.lane.b32.xlu0 %v860, 120
        %v1259 = vpop.permute.xlu0 %1258
        %1260 = vrot.lane.b32.xlu0 %v865, 120
        %v1261 = vpop.permute.xlu0 %1260
        %1262 = vrot.lane.b32.xlu0 %v868, 120
        %v1263 = vpop.permute.xlu0 %1262
        %1264 = vrot.lane.b32.xlu0 %v873, 120
        %v1265 = vpop.permute.xlu0 %1264
        %1266 = vrot.lane.b32.xlu0 %v876, 120
        %v1267 = vpop.permute.xlu0 %1266
        %1268 = vrot.lane.b32.xlu0 %v881, 120
        %v1269 = vpop.permute.xlu0 %1268
        %1270 = vrot.lane.b32.xlu0 %v884, 120
        %v1271 = vpop.permute.xlu0 %1270
        %1288 = vrot.lane.b32.xlu0 %v825, 112
        %v1289 = vpop.permute.xlu0 %1288
        %1290 = vrot.lane.b32.xlu0 %v828, 112
        %v1291 = vpop.permute.xlu0 %1290
        %1292 = vrot.lane.b32.xlu0 %v833, 112
        %v1293 = vpop.permute.xlu0 %1292
        %1294 = vrot.lane.b32.xlu0 %v836, 112
        %v1295 = vpop.permute.xlu0 %1294
        %1296 = vrot.lane.b32.xlu0 %v841, 112
        %v1297 = vpop.permute.xlu0 %1296
        %1298 = vrot.lane.b32.xlu0 %v844, 112
        %v1299 = vpop.permute.xlu0 %1298
        %1300 = vrot.lane.b32.xlu0 %v849, 112
        %v1301 = vpop.permute.xlu0 %1300
        %1302 = vrot.lane.b32.xlu0 %v852, 112
        %v1303 = vpop.permute.xlu0 %1302
        %1304 = vrot.lane.b32.xlu0 %v857, 112
        %v1305 = vpop.permute.xlu0 %1304
        %1306 = vrot.lane.b32.xlu0 %v860, 112
        %v1307 = vpop.permute.xlu0 %1306
        %1308 = vrot.lane.b32.xlu0 %v865, 112
        %v1309 = vpop.permute.xlu0 %1308
        %1310 = vrot.lane.b32.xlu0 %v868, 112
        %v1311 = vpop.permute.xlu0 %1310
        %1312 = vrot.lane.b32.xlu0 %v873, 112
        %v1313 = vpop.permute.xlu0 %1312
        %1314 = vrot.lane.b32.xlu0 %v876, 112
        %v1315 = vpop.permute.xlu0 %1314
        %1316 = vrot.lane.b32.xlu0 %v881, 112
        %v1317 = vpop.permute.xlu0 %1316
        %1318 = vrot.lane.b32.xlu0 %v884, 112
        %v1319 = vpop.permute.xlu0 %1318
        %1336 = vrot.lane.b32.xlu0 %v825, 104
        %v1337 = vpop.permute.xlu0 %1336
        %1338 = vrot.lane.b32.xlu0 %v828, 104
        %v1339 = vpop.permute.xlu0 %1338
        %1340 = vrot.lane.b32.xlu0 %v833, 104
        %v1341 = vpop.permute.xlu0 %1340
        %1342 = vrot.lane.b32.xlu0 %v836, 104
        %v1343 = vpop.permute.xlu0 %1342
        %1344 = vrot.lane.b32.xlu0 %v841, 104
        %v1345 = vpop.permute.xlu0 %1344
        %1346 = vrot.lane.b32.xlu0 %v844, 104
        %v1347 = vpop.permute.xlu0 %1346
        %1348 = vrot.lane.b32.xlu0 %v849, 104
        %v1349 = vpop.permute.xlu0 %1348
        %1350 = vrot.lane.b32.xlu0 %v852, 104
        %v1351 = vpop.permute.xlu0 %1350
        %1352 = vrot.lane.b32.xlu0 %v857, 104
        %v1353 = vpop.permute.xlu0 %1352
        %1354 = vrot.lane.b32.xlu0 %v860, 104
        %v1355 = vpop.permute.xlu0 %1354
        %1356 = vrot.lane.b32.xlu0 %v865, 104
        %v1357 = vpop.permute.xlu0 %1356
        %1358 = vrot.lane.b32.xlu0 %v868, 104
        %v1359 = vpop.permute.xlu0 %1358
        %1360 = vrot.lane.b32.xlu0 %v873, 104
        %v1361 = vpop.permute.xlu0 %1360
        %1362 = vrot.lane.b32.xlu0 %v876, 104
        %v1363 = vpop.permute.xlu0 %1362
        %1364 = vrot.lane.b32.xlu0 %v881, 104
        %v1365 = vpop.permute.xlu0 %1364
        %1366 = vrot.lane.b32.xlu0 %v884, 104
        %v1367 = vpop.permute.xlu0 %1366
        %v1384 = vpack.c.bf16 %v828, %v825
        %v1385 = vpack.c.bf16 %v836, %v833
        %v1386 = vpack.c.bf16 %v844, %v841
        %v1387 = vpack.c.bf16 %v852, %v849
        %v1388 = vpack.c.bf16 %v860, %v857
        %v1389 = vpack.c.bf16 %v868, %v865
        %v1390 = vpack.c.bf16 %v876, %v873
        %v1391 = vpack.c.bf16 %v884, %v881
        %v1392 = vpack.c.bf16 %v1243, %v1241
        %v1393 = vpack.c.bf16 %v1247, %v1245
        %v1394 = vpack.c.bf16 %v1251, %v1249
        %v1395 = vpack.c.bf16 %v1255, %v1253
        %v1396 = vpack.c.bf16 %v1259, %v1257
        %v1397 = vpack.c.bf16 %v1263, %v1261
        %v1398 = vpack.c.bf16 %v1267, %v1265
        %v1399 = vpack.c.bf16 %v1271, %v1269
        %v1400 = vpack.c.bf16 %v1291, %v1289
        %v1401 = vpack.c.bf16 %v1295, %v1293
        %v1402 = vpack.c.bf16 %v1299, %v1297
        %v1403 = vpack.c.bf16 %v1303, %v1301
        %v1404 = vpack.c.bf16 %v1307, %v1305
        %v1405 = vpack.c.bf16 %v1311, %v1309
        %v1406 = vpack.c.bf16 %v1315, %v1313
        %v1407 = vpack.c.bf16 %v1319, %v1317
        %v1408 = vpack.c.bf16 %v1339, %v1337
        %v1409 = vpack.c.bf16 %v1343, %v1341
        %v1410 = vpack.c.bf16 %v1347, %v1345
        %v1411 = vpack.c.bf16 %v1351, %v1349
        %v1412 = vpack.c.bf16 %v1355, %v1353
        %v1413 = vpack.c.bf16 %v1359, %v1357
        %v1414 = vpack.c.bf16 %v1363, %v1361
        %v1415 = vpack.c.bf16 %v1367, %v1365
        %1432 = vrot.lane.b32.xlu0 %v970, 120
        %v1433 = vpop.permute.xlu0 %1432
        %1434 = vrot.lane.b32.xlu0 %v973, 120
        %v1435 = vpop.permute.xlu0 %1434
        %1436 = vrot.lane.b32.xlu0 %v978, 120
        %v1437 = vpop.permute.xlu0 %1436
        %1438 = vrot.lane.b32.xlu0 %v981, 120
        %v1439 = vpop.permute.xlu0 %1438
        %1440 = vrot.lane.b32.xlu0 %v986, 120
        %v1441 = vpop.permute.xlu0 %1440
        %1442 = vrot.lane.b32.xlu0 %v989, 120
        %v1443 = vpop.permute.xlu0 %1442
        %1444 = vrot.lane.b32.xlu0 %v994, 120
        %v1445 = vpop.permute.xlu0 %1444
        %1446 = vrot.lane.b32.xlu0 %v997, 120
        %v1447 = vpop.permute.xlu0 %1446
        %1448 = vrot.lane.b32.xlu0 %v1002, 120
        %v1449 = vpop.permute.xlu0 %1448
        %1450 = vrot.lane.b32.xlu0 %v1005, 120
        %v1451 = vpop.permute.xlu0 %1450
        %1452 = vrot.lane.b32.xlu0 %v1010, 120
        %v1453 = vpop.permute.xlu0 %1452
        %1454 = vrot.lane.b32.xlu0 %v1013, 120
        %v1455 = vpop.permute.xlu0 %1454
        %1456 = vrot.lane.b32.xlu0 %v1018, 120
        %v1457 = vpop.permute.xlu0 %1456
        %1458 = vrot.lane.b32.xlu0 %v1021, 120
        %v1459 = vpop.permute.xlu0 %1458
        %1460 = vrot.lane.b32.xlu0 %v1026, 120
        %v1461 = vpop.permute.xlu0 %1460
        %1462 = vrot.lane.b32.xlu0 %v1029, 120
        %v1463 = vpop.permute.xlu0 %1462
        %1480 = vrot.lane.b32.xlu0 %v970, 112
        %v1481 = vpop.permute.xlu0 %1480
        %1482 = vrot.lane.b32.xlu0 %v973, 112
        %v1483 = vpop.permute.xlu0 %1482
        %1484 = vrot.lane.b32.xlu0 %v978, 112
        %v1485 = vpop.permute.xlu0 %1484
        %1486 = vrot.lane.b32.xlu0 %v981, 112
        %v1487 = vpop.permute.xlu0 %1486
        %1488 = vrot.lane.b32.xlu0 %v986, 112
        %v1489 = vpop.permute.xlu0 %1488
        %1490 = vrot.lane.b32.xlu0 %v989, 112
        %v1491 = vpop.permute.xlu0 %1490
        %1492 = vrot.lane.b32.xlu0 %v994, 112
        %v1493 = vpop.permute.xlu0 %1492
        %1494 = vrot.lane.b32.xlu0 %v997, 112
        %v1495 = vpop.permute.xlu0 %1494
        %1496 = vrot.lane.b32.xlu0 %v1002, 112
        %v1497 = vpop.permute.xlu0 %1496
        %1498 = vrot.lane.b32.xlu0 %v1005, 112
        %v1499 = vpop.permute.xlu0 %1498
        %1500 = vrot.lane.b32.xlu0 %v1010, 112
        %v1501 = vpop.permute.xlu0 %1500
        %1502 = vrot.lane.b32.xlu0 %v1013, 112
        %v1503 = vpop.permute.xlu0 %1502
        %1504 = vrot.lane.b32.xlu0 %v1018, 112
        %v1505 = vpop.permute.xlu0 %1504
        %1506 = vrot.lane.b32.xlu0 %v1021, 112
        %v1507 = vpop.permute.xlu0 %1506
        %1508 = vrot.lane.b32.xlu0 %v1026, 112
        %v1509 = vpop.permute.xlu0 %1508
        %1510 = vrot.lane.b32.xlu0 %v1029, 112
        %v1511 = vpop.permute.xlu0 %1510
        %1528 = vrot.lane.b32.xlu0 %v970, 104
        %v1529 = vpop.permute.xlu0 %1528
        %1530 = vrot.lane.b32.xlu0 %v973, 104
        %v1531 = vpop.permute.xlu0 %1530
        %1532 = vrot.lane.b32.xlu0 %v978, 104
        %v1533 = vpop.permute.xlu0 %1532
        %1534 = vrot.lane.b32.xlu0 %v981, 104
        %v1535 = vpop.permute.xlu0 %1534
        %1536 = vrot.lane.b32.xlu0 %v986, 104
        %v1537 = vpop.permute.xlu0 %1536
        %1538 = vrot.lane.b32.xlu0 %v989, 104
        %v1539 = vpop.permute.xlu0 %1538
        %1540 = vrot.lane.b32.xlu0 %v994, 104
        %v1541 = vpop.permute.xlu0 %1540
        %1542 = vrot.lane.b32.xlu0 %v997, 104
        %v1543 = vpop.permute.xlu0 %1542
        %1544 = vrot.lane.b32.xlu0 %v1002, 104
        %v1545 = vpop.permute.xlu0 %1544
        %1546 = vrot.lane.b32.xlu0 %v1005, 104
        %v1547 = vpop.permute.xlu0 %1546
        %1548 = vrot.lane.b32.xlu0 %v1010, 104
        %v1549 = vpop.permute.xlu0 %1548
        %1550 = vrot.lane.b32.xlu0 %v1013, 104
        %v1551 = vpop.permute.xlu0 %1550
        %1552 = vrot.lane.b32.xlu0 %v1018, 104
        %v1553 = vpop.permute.xlu0 %1552
        %1554 = vrot.lane.b32.xlu0 %v1021, 104
        %v1555 = vpop.permute.xlu0 %1554
        %1556 = vrot.lane.b32.xlu0 %v1026, 104
        %v1557 = vpop.permute.xlu0 %1556
        %1558 = vrot.lane.b32.xlu0 %v1029, 104
        %v1559 = vpop.permute.xlu0 %1558
        %v1576 = vpack.c.bf16 %v973, %v970
        %v1577 = vpack.c.bf16 %v981, %v978
        %v1578 = vpack.c.bf16 %v989, %v986
        %v1579 = vpack.c.bf16 %v997, %v994
        %v1580 = vpack.c.bf16 %v1005, %v1002
        %v1581 = vpack.c.bf16 %v1013, %v1010
        %v1582 = vpack.c.bf16 %v1021, %v1018
        %v1583 = vpack.c.bf16 %v1029, %v1026
        %v1584 = vpack.c.bf16 %v1435, %v1433
        %v1585 = vpack.c.bf16 %v1439, %v1437
        %v1586 = vpack.c.bf16 %v1443, %v1441
        %v1587 = vpack.c.bf16 %v1447, %v1445
        %v1588 = vpack.c.bf16 %v1451, %v1449
        %v1589 = vpack.c.bf16 %v1455, %v1453
        %v1590 = vpack.c.bf16 %v1459, %v1457
        %v1591 = vpack.c.bf16 %v1463, %v1461
        %v1592 = vpack.c.bf16 %v1483, %v1481
        %v1593 = vpack.c.bf16 %v1487, %v1485
        %v1594 = vpack.c.bf16 %v1491, %v1489
        %v1595 = vpack.c.bf16 %v1495, %v1493
        %v1596 = vpack.c.bf16 %v1499, %v1497
        %v1597 = vpack.c.bf16 %v1503, %v1501
        %v1598 = vpack.c.bf16 %v1507, %v1505
        %v1599 = vpack.c.bf16 %v1511, %v1509
        %v1600 = vpack.c.bf16 %v1531, %v1529
        %v1601 = vpack.c.bf16 %v1535, %v1533
        %v1602 = vpack.c.bf16 %v1539, %v1537
        %v1603 = vpack.c.bf16 %v1543, %v1541
        %v1604 = vpack.c.bf16 %v1547, %v1545
        %v1605 = vpack.c.bf16 %v1551, %v1549
        %v1606 = vpack.c.bf16 %v1555, %v1553
        %v1607 = vpack.c.bf16 %v1559, %v1557
        %v1608 = vld [vmem:[#allocation8] sm:$0xff]
        %v1609 = vld [vmem:[#allocation8 + $0x8] sm:$0xff]
        %vm1610 = vcmask 64512
        %v1612 = vsel %vm1610, %v1192, 0
        %v1615 = vsel %vm1610, %v1384, 0
        %1617 = vmatprep.subr.bf16.mxu0 0
        %1618 = vmatpush1.bf16.xpose.msra.mxu0 %v1615
        %1619 = vmatprep.subr.bf16.mxu0 0
        %1620 = vmatpush1.bf16.xpose.msra.mxu0 0
        %1621 = vmatprep.subr.bf16.mxu0 0
        %1622 = vmatpush1.bf16.xpose.msra.mxu0 0
        %1623 = vmatprep.subr.bf16.mxu0 0
        %1624 = vmatpush1.bf16.xpose.msra.mxu0 0
        %1625 = vmatprep.subr.bf16.mxu0 0
        %1626 = vmatpush1.bf16.xpose.msra.mxu0 0
        %1627 = vmatprep.subr.bf16.mxu0 0
        %1628 = vmatpush1.bf16.xpose.msra.mxu0 0
        %1629 = vmatprep.subr.bf16.mxu0 0
        %1630 = vmatpush1.bf16.xpose.msra.mxu0 0
        %1631 = vmatprep.subr.bf16.mxu0 0
        %1632 = vmatpush1.bf16.xpose.msra.mxu0 0
        %1633 = vmatprep.subr.bf16.mxu0 0
        %1634 = vmatpush1.bf16.xpose.msra.mxu0 0
        %1635 = vmatprep.subr.bf16.mxu0 0
        %1636 = vmatpush1.bf16.xpose.msra.mxu0 0
        %1637 = vmatprep.subr.bf16.mxu0 0
        %1638 = vmatpush1.bf16.xpose.msra.mxu0 0
        %1639 = vmatprep.subr.bf16.mxu0 0
        %1640 = vmatpush1.bf16.xpose.msra.mxu0 0
        %1641 = vmatprep.subr.bf16.mxu0 0
        %1642 = vmatpush1.bf16.xpose.msra.mxu0 0
        %1643 = vmatprep.subr.bf16.mxu0 0
        %1644 = vmatpush1.bf16.xpose.msra.mxu0 0
        %1645 = vmatprep.subr.bf16.mxu0 0
        %1646 = vmatpush1.bf16.xpose.msra.mxu0 0
        %1647 = vmatprep.subr.bf16.mxu0 0
        %1648 = vmatpush1.bf16.xpose.msra.mxu0 0
        %1649 = vmatprep.mubr.bf16.mxu0 0
        %1650 = vmatmul.mubr.bf16.gmra.mrb[0].mxu0 %v1612
        %v1651 = vpop.f32.mrb[0].mxu0
        %v1652 = vadd.f32 %v1608, %v1651
        %v1653 = vpop.f32.mrb[0].mxu0
        %v1654 = vpop.f32.mrb[0].mxu0
        %v1655 = vadd.f32 %v1609, %v1654
        %v1656 = vpop.f32.mrb[0].mxu0
        %1657 = vdwg.mxu0
        %v1659 = vsel %vm1610, %v1193, 0
        %v1662 = vsel %vm1610, %v1385, 0
        %1664 = vmatprep.subr.bf16.mxu0 0
        %1665 = vmatpush1.bf16.xpose.msra.mxu0 %v1662
        %1666 = vmatprep.subr.bf16.mxu0 0
        %1667 = vmatpush1.bf16.xpose.msra.mxu0 0
        %1668 = vmatprep.subr.bf16.mxu0 0
        %1669 = vmatpush1.bf16.xpose.msra.mxu0 0
        %1670 = vmatprep.subr.bf16.mxu0 0
        %1671 = vmatpush1.bf16.xpose.msra.mxu0 0
        %1672 = vmatprep.subr.bf16.mxu0 0
        %1673 = vmatpush1.bf16.xpose.msra.mxu0 0
        %1674 = vmatprep.subr.bf16.mxu0 0
        %1675 = vmatpush1.bf16.xpose.msra.mxu0 0
        %1676 = vmatprep.subr.bf16.mxu0 0
        %1677 = vmatpush1.bf16.xpose.msra.mxu0 0
        %1678 = vmatprep.subr.bf16.mxu0 0
        %1679 = vmatpush1.bf16.xpose.msra.mxu0 0
        %1680 = vmatprep.subr.bf16.mxu0 0
        %1681 = vmatpush1.bf16.xpose.msra.mxu0 0
        %1682 = vmatprep.subr.bf16.mxu0 0
        %1683 = vmatpush1.bf16.xpose.msra.mxu0 0
        %1684 = vmatprep.subr.bf16.mxu0 0
        %1685 = vmatpush1.bf16.xpose.msra.mxu0 0
        %1686 = vmatprep.subr.bf16.mxu0 0
        %1687 = vmatpush1.bf16.xpose.msra.mxu0 0
        %1688 = vmatprep.subr.bf16.mxu0 0
        %1689 = vmatpush1.bf16.xpose.msra.mxu0 0
        %1690 = vmatprep.subr.bf16.mxu0 0
        %1691 = vmatpush1.bf16.xpose.msra.mxu0 0
        %1692 = vmatprep.subr.bf16.mxu0 0
        %1693 = vmatpush1.bf16.xpose.msra.mxu0 0
        %1694 = vmatprep.subr.bf16.mxu0 0
        %1695 = vmatpush1.bf16.xpose.msra.mxu0 0
        %1696 = vmatprep.mubr.bf16.mxu0 0
        %1697 = vmatmul.mubr.bf16.gmra.mrb[0].mxu0 %v1659
        %v1698 = vpop.f32.mrb[0].mxu0
        %v1699 = vadd.f32 %v1608, %v1698
        %v1700 = vpop.f32.mrb[0].mxu0
        %v1701 = vpop.f32.mrb[0].mxu0
        %v1702 = vadd.f32 %v1609, %v1701
        %v1703 = vpop.f32.mrb[0].mxu0
        %1704 = vdwg.mxu0
        %v1706 = vsel %vm1610, %v1194, 0
        %v1709 = vsel %vm1610, %v1386, 0
        %1711 = vmatprep.subr.bf16.mxu0 0
        %1712 = vmatpush1.bf16.xpose.msra.mxu0 %v1709
        %1713 = vmatprep.subr.bf16.mxu0 0
        %1714 = vmatpush1.bf16.xpose.msra.mxu0 0
        %1715 = vmatprep.subr.bf16.mxu0 0
        %1716 = vmatpush1.bf16.xpose.msra.mxu0 0
        %1717 = vmatprep.subr.bf16.mxu0 0
        %1718 = vmatpush1.bf16.xpose.msra.mxu0 0
        %1719 = vmatprep.subr.bf16.mxu0 0
        %1720 = vmatpush1.bf16.xpose.msra.mxu0 0
        %1721 = vmatprep.subr.bf16.mxu0 0
        %1722 = vmatpush1.bf16.xpose.msra.mxu0 0
        %1723 = vmatprep.subr.bf16.mxu0 0
        %1724 = vmatpush1.bf16.xpose.msra.mxu0 0
        %1725 = vmatprep.subr.bf16.mxu0 0
        %1726 = vmatpush1.bf16.xpose.msra.mxu0 0
        %1727 = vmatprep.subr.bf16.mxu0 0
        %1728 = vmatpush1.bf16.xpose.msra.mxu0 0
        %1729 = vmatprep.subr.bf16.mxu0 0
        %1730 = vmatpush1.bf16.xpose.msra.mxu0 0
        %1731 = vmatprep.subr.bf16.mxu0 0
        %1732 = vmatpush1.bf16.xpose.msra.mxu0 0
        %1733 = vmatprep.subr.bf16.mxu0 0
        %1734 = vmatpush1.bf16.xpose.msra.mxu0 0
        %1735 = vmatprep.subr.bf16.mxu0 0
        %1736 = vmatpush1.bf16.xpose.msra.mxu0 0
        %1737 = vmatprep.subr.bf16.mxu0 0
        %1738 = vmatpush1.bf16.xpose.msra.mxu0 0
        %1739 = vmatprep.subr.bf16.mxu0 0
        %1740 = vmatpush1.bf16.xpose.msra.mxu0 0
        %1741 = vmatprep.subr.bf16.mxu0 0
        %1742 = vmatpush1.bf16.xpose.msra.mxu0 0
        %1743 = vmatprep.mubr.bf16.mxu0 0
        %1744 = vmatmul.mubr.bf16.gmra.mrb[0].mxu0 %v1706
        %v1745 = vpop.f32.mrb[0].mxu0
        %v1746 = vadd.f32 %v1608, %v1745
        %v1747 = vpop.f32.mrb[0].mxu0
        %v1748 = vpop.f32.mrb[0].mxu0
        %v1749 = vadd.f32 %v1609, %v1748
        %v1750 = vpop.f32.mrb[0].mxu0
        %1751 = vdwg.mxu0
        %v1753 = vsel %vm1610, %v1195, 0
        %v1756 = vsel %vm1610, %v1387, 0
        %1758 = vmatprep.subr.bf16.mxu0 0
        %1759 = vmatpush1.bf16.xpose.msra.mxu0 %v1756
        %1760 = vmatprep.subr.bf16.mxu0 0
        %1761 = vmatpush1.bf16.xpose.msra.mxu0 0
        %1762 = vmatprep.subr.bf16.mxu0 0
        %1763 = vmatpush1.bf16.xpose.msra.mxu0 0
        %1764 = vmatprep.subr.bf16.mxu0 0
        %1765 = vmatpush1.bf16.xpose.msra.mxu0 0
        %1766 = vmatprep.subr.bf16.mxu0 0
        %1767 = vmatpush1.bf16.xpose.msra.mxu0 0
        %1768 = vmatprep.subr.bf16.mxu0 0
        %1769 = vmatpush1.bf16.xpose.msra.mxu0 0
        %1770 = vmatprep.subr.bf16.mxu0 0
        %1771 = vmatpush1.bf16.xpose.msra.mxu0 0
        %1772 = vmatprep.subr.bf16.mxu0 0
        %1773 = vmatpush1.bf16.xpose.msra.mxu0 0
        %1774 = vmatprep.subr.bf16.mxu0 0
        %1775 = vmatpush1.bf16.xpose.msra.mxu0 0
        %1776 = vmatprep.subr.bf16.mxu0 0
        %1777 = vmatpush1.bf16.xpose.msra.mxu0 0
        %1778 = vmatprep.subr.bf16.mxu0 0
        %1779 = vmatpush1.bf16.xpose.msra.mxu0 0
        %1780 = vmatprep.subr.bf16.mxu0 0
        %1781 = vmatpush1.bf16.xpose.msra.mxu0 0
        %1782 = vmatprep.subr.bf16.mxu0 0
        %1783 = vmatpush1.bf16.xpose.msra.mxu0 0
        %1784 = vmatprep.subr.bf16.mxu0 0
        %1785 = vmatpush1.bf16.xpose.msra.mxu0 0
        %1786 = vmatprep.subr.bf16.mxu0 0
        %1787 = vmatpush1.bf16.xpose.msra.mxu0 0
        %1788 = vmatprep.subr.bf16.mxu0 0
        %1789 = vmatpush1.bf16.xpose.msra.mxu0 0
        %1790 = vmatprep.mubr.bf16.mxu0 0
        %1791 = vmatmul.mubr.bf16.gmra.mrb[0].mxu0 %v1753
        %v1792 = vpop.f32.mrb[0].mxu0
        %v1793 = vadd.f32 %v1608, %v1792
        %v1794 = vpop.f32.mrb[0].mxu0
        %v1795 = vpop.f32.mrb[0].mxu0
        %v1796 = vadd.f32 %v1609, %v1795
        %v1797 = vpop.f32.mrb[0].mxu0
        %1798 = vdwg.mxu0
        %v1800 = vsel %vm1610, %v1196, 0
        %v1803 = vsel %vm1610, %v1388, 0
        %1805 = vmatprep.subr.bf16.mxu0 0
        %1806 = vmatpush1.bf16.xpose.msra.mxu0 %v1803
        %1807 = vmatprep.subr.bf16.mxu0 0
        %1808 = vmatpush1.bf16.xpose.msra.mxu0 0
        %1809 = vmatprep.subr.bf16.mxu0 0
        %1810 = vmatpush1.bf16.xpose.msra.mxu0 0
        %1811 = vmatprep.subr.bf16.mxu0 0
        %1812 = vmatpush1.bf16.xpose.msra.mxu0 0
        %1813 = vmatprep.subr.bf16.mxu0 0
        %1814 = vmatpush1.bf16.xpose.msra.mxu0 0
        %1815 = vmatprep.subr.bf16.mxu0 0
        %1816 = vmatpush1.bf16.xpose.msra.mxu0 0
        %1817 = vmatprep.subr.bf16.mxu0 0
        %1818 = vmatpush1.bf16.xpose.msra.mxu0 0
        %1819 = vmatprep.subr.bf16.mxu0 0
        %1820 = vmatpush1.bf16.xpose.msra.mxu0 0
        %1821 = vmatprep.subr.bf16.mxu0 0
        %1822 = vmatpush1.bf16.xpose.msra.mxu0 0
        %1823 = vmatprep.subr.bf16.mxu0 0
        %1824 = vmatpush1.bf16.xpose.msra.mxu0 0
        %1825 = vmatprep.subr.bf16.mxu0 0
        %1826 = vmatpush1.bf16.xpose.msra.mxu0 0
        %1827 = vmatprep.subr.bf16.mxu0 0
        %1828 = vmatpush1.bf16.xpose.msra.mxu0 0
        %1829 = vmatprep.subr.bf16.mxu0 0
        %1830 = vmatpush1.bf16.xpose.msra.mxu0 0
        %1831 = vmatprep.subr.bf16.mxu0 0
        %1832 = vmatpush1.bf16.xpose.msra.mxu0 0
        %1833 = vmatprep.subr.bf16.mxu0 0
        %1834 = vmatpush1.bf16.xpose.msra.mxu0 0
        %1835 = vmatprep.subr.bf16.mxu0 0
        %1836 = vmatpush1.bf16.xpose.msra.mxu0 0
        %1837 = vmatprep.mubr.bf16.mxu0 0
        %1838 = vmatmul.mubr.bf16.gmra.mrb[0].mxu0 %v1800
        %v1839 = vpop.f32.mrb[0].mxu0
        %v1840 = vadd.f32 %v1608, %v1839
        %v1841 = vpop.f32.mrb[0].mxu0
        %v1842 = vpop.f32.mrb[0].mxu0
        %v1843 = vadd.f32 %v1609, %v1842
        %v1844 = vpop.f32.mrb[0].mxu0
        %1845 = vdwg.mxu0
        %v1847 = vsel %vm1610, %v1197, 0
        %v1850 = vsel %vm1610, %v1389, 0
        %1852 = vmatprep.subr.bf16.mxu0 0
        %1853 = vmatpush1.bf16.xpose.msra.mxu0 %v1850
        %1854 = vmatprep.subr.bf16.mxu0 0
        %1855 = vmatpush1.bf16.xpose.msra.mxu0 0
        %1856 = vmatprep.subr.bf16.mxu0 0
        %1857 = vmatpush1.bf16.xpose.msra.mxu0 0
        %1858 = vmatprep.subr.bf16.mxu0 0
        %1859 = vmatpush1.bf16.xpose.msra.mxu0 0
        %1860 = vmatprep.subr.bf16.mxu0 0
        %1861 = vmatpush1.bf16.xpose.msra.mxu0 0
        %1862 = vmatprep.subr.bf16.mxu0 0
        %1863 = vmatpush1.bf16.xpose.msra.mxu0 0
        %1864 = vmatprep.subr.bf16.mxu0 0
        %1865 = vmatpush1.bf16.xpose.msra.mxu0 0
        %1866 = vmatprep.subr.bf16.mxu0 0
        %1867 = vmatpush1.bf16.xpose.msra.mxu0 0
        %1868 = vmatprep.subr.bf16.mxu0 0
        %1869 = vmatpush1.bf16.xpose.msra.mxu0 0
        %1870 = vmatprep.subr.bf16.mxu0 0
        %1871 = vmatpush1.bf16.xpose.msra.mxu0 0
        %1872 = vmatprep.subr.bf16.mxu0 0
        %1873 = vmatpush1.bf16.xpose.msra.mxu0 0
        %1874 = vmatprep.subr.bf16.mxu0 0
        %1875 = vmatpush1.bf16.xpose.msra.mxu0 0
        %1876 = vmatprep.subr.bf16.mxu0 0
        %1877 = vmatpush1.bf16.xpose.msra.mxu0 0
        %1878 = vmatprep.subr.bf16.mxu0 0
        %1879 = vmatpush1.bf16.xpose.msra.mxu0 0
        %1880 = vmatprep.subr.bf16.mxu0 0
        %1881 = vmatpush1.bf16.xpose.msra.mxu0 0
        %1882 = vmatprep.subr.bf16.mxu0 0
        %1883 = vmatpush1.bf16.xpose.msra.mxu0 0
        %1884 = vmatprep.mubr.bf16.mxu0 0
        %1885 = vmatmul.mubr.bf16.gmra.mrb[0].mxu0 %v1847
        %v1886 = vpop.f32.mrb[0].mxu0
        %v1887 = vadd.f32 %v1608, %v1886
        %v1888 = vpop.f32.mrb[0].mxu0
        %v1889 = vpop.f32.mrb[0].mxu0
        %v1890 = vadd.f32 %v1609, %v1889
        %v1891 = vpop.f32.mrb[0].mxu0
        %1892 = vdwg.mxu0
        %v1894 = vsel %vm1610, %v1198, 0
        %v1897 = vsel %vm1610, %v1390, 0
        %1899 = vmatprep.subr.bf16.mxu0 0
        %1900 = vmatpush1.bf16.xpose.msra.mxu0 %v1897
        %1901 = vmatprep.subr.bf16.mxu0 0
        %1902 = vmatpush1.bf16.xpose.msra.mxu0 0
        %1903 = vmatprep.subr.bf16.mxu0 0
        %1904 = vmatpush1.bf16.xpose.msra.mxu0 0
        %1905 = vmatprep.subr.bf16.mxu0 0
        %1906 = vmatpush1.bf16.xpose.msra.mxu0 0
        %1907 = vmatprep.subr.bf16.mxu0 0
        %1908 = vmatpush1.bf16.xpose.msra.mxu0 0
        %1909 = vmatprep.subr.bf16.mxu0 0
        %1910 = vmatpush1.bf16.xpose.msra.mxu0 0
        %1911 = vmatprep.subr.bf16.mxu0 0
        %1912 = vmatpush1.bf16.xpose.msra.mxu0 0
        %1913 = vmatprep.subr.bf16.mxu0 0
        %1914 = vmatpush1.bf16.xpose.msra.mxu0 0
        %1915 = vmatprep.subr.bf16.mxu0 0
        %1916 = vmatpush1.bf16.xpose.msra.mxu0 0
        %1917 = vmatprep.subr.bf16.mxu0 0
        %1918 = vmatpush1.bf16.xpose.msra.mxu0 0
        %1919 = vmatprep.subr.bf16.mxu0 0
        %1920 = vmatpush1.bf16.xpose.msra.mxu0 0
        %1921 = vmatprep.subr.bf16.mxu0 0
        %1922 = vmatpush1.bf16.xpose.msra.mxu0 0
        %1923 = vmatprep.subr.bf16.mxu0 0
        %1924 = vmatpush1.bf16.xpose.msra.mxu0 0
        %1925 = vmatprep.subr.bf16.mxu0 0
        %1926 = vmatpush1.bf16.xpose.msra.mxu0 0
        %1927 = vmatprep.subr.bf16.mxu0 0
        %1928 = vmatpush1.bf16.xpose.msra.mxu0 0
        %1929 = vmatprep.subr.bf16.mxu0 0
        %1930 = vmatpush1.bf16.xpose.msra.mxu0 0
        %1931 = vmatprep.mubr.bf16.mxu0 0
        %1932 = vmatmul.mubr.bf16.gmra.mrb[0].mxu0 %v1894
        %v1933 = vpop.f32.mrb[0].mxu0
        %v1934 = vadd.f32 %v1608, %v1933
        %v1935 = vpop.f32.mrb[0].mxu0
        %v1936 = vpop.f32.mrb[0].mxu0
        %v1937 = vadd.f32 %v1609, %v1936
        %v1938 = vpop.f32.mrb[0].mxu0
        %1939 = vdwg.mxu0
        %v1941 = vsel %vm1610, %v1199, 0
        %v1944 = vsel %vm1610, %v1391, 0
        %1946 = vmatprep.subr.bf16.mxu0 0
        %1947 = vmatpush1.bf16.xpose.msra.mxu0 %v1944
        %1948 = vmatprep.subr.bf16.mxu0 0
        %1949 = vmatpush1.bf16.xpose.msra.mxu0 0
        %1950 = vmatprep.subr.bf16.mxu0 0
        %1951 = vmatpush1.bf16.xpose.msra.mxu0 0
        %1952 = vmatprep.subr.bf16.mxu0 0
        %1953 = vmatpush1.bf16.xpose.msra.mxu0 0
        %1954 = vmatprep.subr.bf16.mxu0 0
        %1955 = vmatpush1.bf16.xpose.msra.mxu0 0
        %1956 = vmatprep.subr.bf16.mxu0 0
        %1957 = vmatpush1.bf16.xpose.msra.mxu0 0
        %1958 = vmatprep.subr.bf16.mxu0 0
        %1959 = vmatpush1.bf16.xpose.msra.mxu0 0
        %1960 = vmatprep.subr.bf16.mxu0 0
        %1961 = vmatpush1.bf16.xpose.msra.mxu0 0
        %1962 = vmatprep.subr.bf16.mxu0 0
        %1963 = vmatpush1.bf16.xpose.msra.mxu0 0
        %1964 = vmatprep.subr.bf16.mxu0 0
        %1965 = vmatpush1.bf16.xpose.msra.mxu0 0
        %1966 = vmatprep.subr.bf16.mxu0 0
        %1967 = vmatpush1.bf16.xpose.msra.mxu0 0
        %1968 = vmatprep.subr.bf16.mxu0 0
        %1969 = vmatpush1.bf16.xpose.msra.mxu0 0
        %1970 = vmatprep.subr.bf16.mxu0 0
        %1971 = vmatpush1.bf16.xpose.msra.mxu0 0
        %1972 = vmatprep.subr.bf16.mxu0 0
        %1973 = vmatpush1.bf16.xpose.msra.mxu0 0
        %1974 = vmatprep.subr.bf16.mxu0 0
        %1975 = vmatpush1.bf16.xpose.msra.mxu0 0
        %1976 = vmatprep.subr.bf16.mxu0 0
        %1977 = vmatpush1.bf16.xpose.msra.mxu0 0
        %1978 = vmatprep.mubr.bf16.mxu0 0
        %1979 = vmatmul.mubr.bf16.gmra.mrb[0].mxu0 %v1941
        %v1980 = vpop.f32.mrb[0].mxu0
        %v1981 = vadd.f32 %v1608, %v1980
        %v1982 = vpop.f32.mrb[0].mxu0
        %v1983 = vpop.f32.mrb[0].mxu0
        %v1984 = vadd.f32 %v1609, %v1983
        %v1985 = vpop.f32.mrb[0].mxu0
        %1986 = vdwg.mxu0
        %v1988 = vsel %vm1610, %v1200, 0
        %v1991 = vsel %vm1610, %v1392, 0
        %1993 = vmatprep.subr.bf16.mxu0 0
        %1994 = vmatpush1.bf16.xpose.msra.mxu0 %v1991
        %1995 = vmatprep.subr.bf16.mxu0 0
        %1996 = vmatpush1.bf16.xpose.msra.mxu0 0
        %1997 = vmatprep.subr.bf16.mxu0 0
        %1998 = vmatpush1.bf16.xpose.msra.mxu0 0
        %1999 = vmatprep.subr.bf16.mxu0 0
        %2000 = vmatpush1.bf16.xpose.msra.mxu0 0
        %2001 = vmatprep.subr.bf16.mxu0 0
        %2002 = vmatpush1.bf16.xpose.msra.mxu0 0
        %2003 = vmatprep.subr.bf16.mxu0 0
        %2004 = vmatpush1.bf16.xpose.msra.mxu0 0
        %2005 = vmatprep.subr.bf16.mxu0 0
        %2006 = vmatpush1.bf16.xpose.msra.mxu0 0
        %2007 = vmatprep.subr.bf16.mxu0 0
        %2008 = vmatpush1.bf16.xpose.msra.mxu0 0
        %2009 = vmatprep.subr.bf16.mxu0 0
        %2010 = vmatpush1.bf16.xpose.msra.mxu0 0
        %2011 = vmatprep.subr.bf16.mxu0 0
        %2012 = vmatpush1.bf16.xpose.msra.mxu0 0
        %2013 = vmatprep.subr.bf16.mxu0 0
        %2014 = vmatpush1.bf16.xpose.msra.mxu0 0
        %2015 = vmatprep.subr.bf16.mxu0 0
        %2016 = vmatpush1.bf16.xpose.msra.mxu0 0
        %2017 = vmatprep.subr.bf16.mxu0 0
        %2018 = vmatpush1.bf16.xpose.msra.mxu0 0
        %2019 = vmatprep.subr.bf16.mxu0 0
        %2020 = vmatpush1.bf16.xpose.msra.mxu0 0
        %2021 = vmatprep.subr.bf16.mxu0 0
        %2022 = vmatpush1.bf16.xpose.msra.mxu0 0
        %2023 = vmatprep.subr.bf16.mxu0 0
        %2024 = vmatpush1.bf16.xpose.msra.mxu0 0
        %2025 = vmatprep.mubr.bf16.mxu0 0
        %2026 = vmatmul.mubr.bf16.gmra.mrb[0].mxu0 %v1988
        %v2027 = vpop.f32.mrb[0].mxu0
        %v2028 = vadd.f32 %v1608, %v2027
        %v2029 = vpop.f32.mrb[0].mxu0
        %v2030 = vpop.f32.mrb[0].mxu0
        %v2031 = vadd.f32 %v1609, %v2030
        %v2032 = vpop.f32.mrb[0].mxu0
        %2033 = vdwg.mxu0
        %v2035 = vsel %vm1610, %v1201, 0
        %v2038 = vsel %vm1610, %v1393, 0
        %2040 = vmatprep.subr.bf16.mxu0 0
        %2041 = vmatpush1.bf16.xpose.msra.mxu0 %v2038
        %2042 = vmatprep.subr.bf16.mxu0 0
        %2043 = vmatpush1.bf16.xpose.msra.mxu0 0
        %2044 = vmatprep.subr.bf16.mxu0 0
        %2045 = vmatpush1.bf16.xpose.msra.mxu0 0
        %2046 = vmatprep.subr.bf16.mxu0 0
        %2047 = vmatpush1.bf16.xpose.msra.mxu0 0
        %2048 = vmatprep.subr.bf16.mxu0 0
        %2049 = vmatpush1.bf16.xpose.msra.mxu0 0
        %2050 = vmatprep.subr.bf16.mxu0 0
        %2051 = vmatpush1.bf16.xpose.msra.mxu0 0
        %2052 = vmatprep.subr.bf16.mxu0 0
        %2053 = vmatpush1.bf16.xpose.msra.mxu0 0
        %2054 = vmatprep.subr.bf16.mxu0 0
        %2055 = vmatpush1.bf16.xpose.msra.mxu0 0
        %2056 = vmatprep.subr.bf16.mxu0 0
        %2057 = vmatpush1.bf16.xpose.msra.mxu0 0
        %2058 = vmatprep.subr.bf16.mxu0 0
        %2059 = vmatpush1.bf16.xpose.msra.mxu0 0
        %2060 = vmatprep.subr.bf16.mxu0 0
        %2061 = vmatpush1.bf16.xpose.msra.mxu0 0
        %2062 = vmatprep.subr.bf16.mxu0 0
        %2063 = vmatpush1.bf16.xpose.msra.mxu0 0
        %2064 = vmatprep.subr.bf16.mxu0 0
        %2065 = vmatpush1.bf16.xpose.msra.mxu0 0
        %2066 = vmatprep.subr.bf16.mxu0 0
        %2067 = vmatpush1.bf16.xpose.msra.mxu0 0
        %2068 = vmatprep.subr.bf16.mxu0 0
        %2069 = vmatpush1.bf16.xpose.msra.mxu0 0
        %2070 = vmatprep.subr.bf16.mxu0 0
        %2071 = vmatpush1.bf16.xpose.msra.mxu0 0
        %2072 = vmatprep.mubr.bf16.mxu0 0
        %2073 = vmatmul.mubr.bf16.gmra.mrb[0].mxu0 %v2035
        %v2074 = vpop.f32.mrb[0].mxu0
        %v2075 = vadd.f32 %v1608, %v2074
        %v2076 = vpop.f32.mrb[0].mxu0
        %v2077 = vpop.f32.mrb[0].mxu0
        %v2078 = vadd.f32 %v1609, %v2077
        %v2079 = vpop.f32.mrb[0].mxu0
        %2080 = vdwg.mxu0
        %v2082 = vsel %vm1610, %v1202, 0
        %v2085 = vsel %vm1610, %v1394, 0
        %2087 = vmatprep.subr.bf16.mxu0 0
        %2088 = vmatpush1.bf16.xpose.msra.mxu0 %v2085
        %2089 = vmatprep.subr.bf16.mxu0 0
        %2090 = vmatpush1.bf16.xpose.msra.mxu0 0
        %2091 = vmatprep.subr.bf16.mxu0 0
        %2092 = vmatpush1.bf16.xpose.msra.mxu0 0
        %2093 = vmatprep.subr.bf16.mxu0 0
        %2094 = vmatpush1.bf16.xpose.msra.mxu0 0
        %2095 = vmatprep.subr.bf16.mxu0 0
        %2096 = vmatpush1.bf16.xpose.msra.mxu0 0
        %2097 = vmatprep.subr.bf16.mxu0 0
        %2098 = vmatpush1.bf16.xpose.msra.mxu0 0
        %2099 = vmatprep.subr.bf16.mxu0 0
        %2100 = vmatpush1.bf16.xpose.msra.mxu0 0
        %2101 = vmatprep.subr.bf16.mxu0 0
        %2102 = vmatpush1.bf16.xpose.msra.mxu0 0
        %2103 = vmatprep.subr.bf16.mxu0 0
        %2104 = vmatpush1.bf16.xpose.msra.mxu0 0
        %2105 = vmatprep.subr.bf16.mxu0 0
        %2106 = vmatpush1.bf16.xpose.msra.mxu0 0
        %2107 = vmatprep.subr.bf16.mxu0 0
        %2108 = vmatpush1.bf16.xpose.msra.mxu0 0
        %2109 = vmatprep.subr.bf16.mxu0 0
        %2110 = vmatpush1.bf16.xpose.msra.mxu0 0
        %2111 = vmatprep.subr.bf16.mxu0 0
        %2112 = vmatpush1.bf16.xpose.msra.mxu0 0
        %2113 = vmatprep.subr.bf16.mxu0 0
        %2114 = vmatpush1.bf16.xpose.msra.mxu0 0
        %2115 = vmatprep.subr.bf16.mxu0 0
        %2116 = vmatpush1.bf16.xpose.msra.mxu0 0
        %2117 = vmatprep.subr.bf16.mxu0 0
        %2118 = vmatpush1.bf16.xpose.msra.mxu0 0
        %2119 = vmatprep.mubr.bf16.mxu0 0
        %2120 = vmatmul.mubr.bf16.gmra.mrb[0].mxu0 %v2082
        %v2121 = vpop.f32.mrb[0].mxu0
        %v2122 = vadd.f32 %v1608, %v2121
        %v2123 = vpop.f32.mrb[0].mxu0
        %v2124 = vpop.f32.mrb[0].mxu0
        %v2125 = vadd.f32 %v1609, %v2124
        %v2126 = vpop.f32.mrb[0].mxu0
        %2127 = vdwg.mxu0
        %v2129 = vsel %vm1610, %v1203, 0
        %v2132 = vsel %vm1610, %v1395, 0
        %2134 = vmatprep.subr.bf16.mxu0 0
        %2135 = vmatpush1.bf16.xpose.msra.mxu0 %v2132
        %2136 = vmatprep.subr.bf16.mxu0 0
        %2137 = vmatpush1.bf16.xpose.msra.mxu0 0
        %2138 = vmatprep.subr.bf16.mxu0 0
        %2139 = vmatpush1.bf16.xpose.msra.mxu0 0
        %2140 = vmatprep.subr.bf16.mxu0 0
        %2141 = vmatpush1.bf16.xpose.msra.mxu0 0
        %2142 = vmatprep.subr.bf16.mxu0 0
        %2143 = vmatpush1.bf16.xpose.msra.mxu0 0
        %2144 = vmatprep.subr.bf16.mxu0 0
        %2145 = vmatpush1.bf16.xpose.msra.mxu0 0
        %2146 = vmatprep.subr.bf16.mxu0 0
        %2147 = vmatpush1.bf16.xpose.msra.mxu0 0
        %2148 = vmatprep.subr.bf16.mxu0 0
        %2149 = vmatpush1.bf16.xpose.msra.mxu0 0
        %2150 = vmatprep.subr.bf16.mxu0 0
        %2151 = vmatpush1.bf16.xpose.msra.mxu0 0
        %2152 = vmatprep.subr.bf16.mxu0 0
        %2153 = vmatpush1.bf16.xpose.msra.mxu0 0
        %2154 = vmatprep.subr.bf16.mxu0 0
        %2155 = vmatpush1.bf16.xpose.msra.mxu0 0
        %2156 = vmatprep.subr.bf16.mxu0 0
        %2157 = vmatpush1.bf16.xpose.msra.mxu0 0
        %2158 = vmatprep.subr.bf16.mxu0 0
        %2159 = vmatpush1.bf16.xpose.msra.mxu0 0
        %2160 = vmatprep.subr.bf16.mxu0 0
        %2161 = vmatpush1.bf16.xpose.msra.mxu0 0
        %2162 = vmatprep.subr.bf16.mxu0 0
        %2163 = vmatpush1.bf16.xpose.msra.mxu0 0
        %2164 = vmatprep.subr.bf16.mxu0 0
        %2165 = vmatpush1.bf16.xpose.msra.mxu0 0
        %2166 = vmatprep.mubr.bf16.mxu0 0
        %2167 = vmatmul.mubr.bf16.gmra.mrb[0].mxu0 %v2129
        %v2168 = vpop.f32.mrb[0].mxu0
        %v2169 = vadd.f32 %v1608, %v2168
        %v2170 = vpop.f32.mrb[0].mxu0
        %v2171 = vpop.f32.mrb[0].mxu0
        %v2172 = vadd.f32 %v1609, %v2171
        %v2173 = vpop.f32.mrb[0].mxu0
        %2174 = vdwg.mxu0
        %v2176 = vsel %vm1610, %v1204, 0
        %v2179 = vsel %vm1610, %v1396, 0
        %2181 = vmatprep.subr.bf16.mxu0 0
        %2182 = vmatpush1.bf16.xpose.msra.mxu0 %v2179
        %2183 = vmatprep.subr.bf16.mxu0 0
        %2184 = vmatpush1.bf16.xpose.msra.mxu0 0
        %2185 = vmatprep.subr.bf16.mxu0 0
        %2186 = vmatpush1.bf16.xpose.msra.mxu0 0
        %2187 = vmatprep.subr.bf16.mxu0 0
        %2188 = vmatpush1.bf16.xpose.msra.mxu0 0
        %2189 = vmatprep.subr.bf16.mxu0 0
        %2190 = vmatpush1.bf16.xpose.msra.mxu0 0
        %2191 = vmatprep.subr.bf16.mxu0 0
        %2192 = vmatpush1.bf16.xpose.msra.mxu0 0
        %2193 = vmatprep.subr.bf16.mxu0 0
        %2194 = vmatpush1.bf16.xpose.msra.mxu0 0
        %2195 = vmatprep.subr.bf16.mxu0 0
        %2196 = vmatpush1.bf16.xpose.msra.mxu0 0
        %2197 = vmatprep.subr.bf16.mxu0 0
        %2198 = vmatpush1.bf16.xpose.msra.mxu0 0
        %2199 = vmatprep.subr.bf16.mxu0 0
        %2200 = vmatpush1.bf16.xpose.msra.mxu0 0
        %2201 = vmatprep.subr.bf16.mxu0 0
        %2202 = vmatpush1.bf16.xpose.msra.mxu0 0
        %2203 = vmatprep.subr.bf16.mxu0 0
        %2204 = vmatpush1.bf16.xpose.msra.mxu0 0
        %2205 = vmatprep.subr.bf16.mxu0 0
        %2206 = vmatpush1.bf16.xpose.msra.mxu0 0
        %2207 = vmatprep.subr.bf16.mxu0 0
        %2208 = vmatpush1.bf16.xpose.msra.mxu0 0
        %2209 = vmatprep.subr.bf16.mxu0 0
        %2210 = vmatpush1.bf16.xpose.msra.mxu0 0
        %2211 = vmatprep.subr.bf16.mxu0 0
        %2212 = vmatpush1.bf16.xpose.msra.mxu0 0
        %2213 = vmatprep.mubr.bf16.mxu0 0
        %2214 = vmatmul.mubr.bf16.gmra.mrb[0].mxu0 %v2176
        %v2215 = vpop.f32.mrb[0].mxu0
        %v2216 = vadd.f32 %v1608, %v2215
        %v2217 = vpop.f32.mrb[0].mxu0
        %v2218 = vpop.f32.mrb[0].mxu0
        %v2219 = vadd.f32 %v1609, %v2218
        %v2220 = vpop.f32.mrb[0].mxu0
        %2221 = vdwg.mxu0
        %v2223 = vsel %vm1610, %v1205, 0
        %v2226 = vsel %vm1610, %v1397, 0
        %2228 = vmatprep.subr.bf16.mxu0 0
        %2229 = vmatpush1.bf16.xpose.msra.mxu0 %v2226
        %2230 = vmatprep.subr.bf16.mxu0 0
        %2231 = vmatpush1.bf16.xpose.msra.mxu0 0
        %2232 = vmatprep.subr.bf16.mxu0 0
        %2233 = vmatpush1.bf16.xpose.msra.mxu0 0
        %2234 = vmatprep.subr.bf16.mxu0 0
        %2235 = vmatpush1.bf16.xpose.msra.mxu0 0
        %2236 = vmatprep.subr.bf16.mxu0 0
        %2237 = vmatpush1.bf16.xpose.msra.mxu0 0
        %2238 = vmatprep.subr.bf16.mxu0 0
        %2239 = vmatpush1.bf16.xpose.msra.mxu0 0
        %2240 = vmatprep.subr.bf16.mxu0 0
        %2241 = vmatpush1.bf16.xpose.msra.mxu0 0
        %2242 = vmatprep.subr.bf16.mxu0 0
        %2243 = vmatpush1.bf16.xpose.msra.mxu0 0
        %2244 = vmatprep.subr.bf16.mxu0 0
        %2245 = vmatpush1.bf16.xpose.msra.mxu0 0
        %2246 = vmatprep.subr.bf16.mxu0 0
        %2247 = vmatpush1.bf16.xpose.msra.mxu0 0
        %2248 = vmatprep.subr.bf16.mxu0 0
        %2249 = vmatpush1.bf16.xpose.msra.mxu0 0
        %2250 = vmatprep.subr.bf16.mxu0 0
        %2251 = vmatpush1.bf16.xpose.msra.mxu0 0
        %2252 = vmatprep.subr.bf16.mxu0 0
        %2253 = vmatpush1.bf16.xpose.msra.mxu0 0
        %2254 = vmatprep.subr.bf16.mxu0 0
        %2255 = vmatpush1.bf16.xpose.msra.mxu0 0
        %2256 = vmatprep.subr.bf16.mxu0 0
        %2257 = vmatpush1.bf16.xpose.msra.mxu0 0
        %2258 = vmatprep.subr.bf16.mxu0 0
        %2259 = vmatpush1.bf16.xpose.msra.mxu0 0
        %2260 = vmatprep.mubr.bf16.mxu0 0
        %2261 = vmatmul.mubr.bf16.gmra.mrb[0].mxu0 %v2223
        %v2262 = vpop.f32.mrb[0].mxu0
        %v2263 = vadd.f32 %v1608, %v2262
        %v2264 = vpop.f32.mrb[0].mxu0
        %v2265 = vpop.f32.mrb[0].mxu0
        %v2266 = vadd.f32 %v1609, %v2265
        %v2267 = vpop.f32.mrb[0].mxu0
        %2268 = vdwg.mxu0
        %v2270 = vsel %vm1610, %v1206, 0
        %v2273 = vsel %vm1610, %v1398, 0
        %2275 = vmatprep.subr.bf16.mxu0 0
        %2276 = vmatpush1.bf16.xpose.msra.mxu0 %v2273
        %2277 = vmatprep.subr.bf16.mxu0 0
        %2278 = vmatpush1.bf16.xpose.msra.mxu0 0
        %2279 = vmatprep.subr.bf16.mxu0 0
        %2280 = vmatpush1.bf16.xpose.msra.mxu0 0
        %2281 = vmatprep.subr.bf16.mxu0 0
        %2282 = vmatpush1.bf16.xpose.msra.mxu0 0
        %2283 = vmatprep.subr.bf16.mxu0 0
        %2284 = vmatpush1.bf16.xpose.msra.mxu0 0
        %2285 = vmatprep.subr.bf16.mxu0 0
        %2286 = vmatpush1.bf16.xpose.msra.mxu0 0
        %2287 = vmatprep.subr.bf16.mxu0 0
        %2288 = vmatpush1.bf16.xpose.msra.mxu0 0
        %2289 = vmatprep.subr.bf16.mxu0 0
        %2290 = vmatpush1.bf16.xpose.msra.mxu0 0
        %2291 = vmatprep.subr.bf16.mxu0 0
        %2292 = vmatpush1.bf16.xpose.msra.mxu0 0
        %2293 = vmatprep.subr.bf16.mxu0 0
        %2294 = vmatpush1.bf16.xpose.msra.mxu0 0
        %2295 = vmatprep.subr.bf16.mxu0 0
        %2296 = vmatpush1.bf16.xpose.msra.mxu0 0
        %2297 = vmatprep.subr.bf16.mxu0 0
        %2298 = vmatpush1.bf16.xpose.msra.mxu0 0
        %2299 = vmatprep.subr.bf16.mxu0 0
        %2300 = vmatpush1.bf16.xpose.msra.mxu0 0
        %2301 = vmatprep.subr.bf16.mxu0 0
        %2302 = vmatpush1.bf16.xpose.msra.mxu0 0
        %2303 = vmatprep.subr.bf16.mxu0 0
        %2304 = vmatpush1.bf16.xpose.msra.mxu0 0
        %2305 = vmatprep.subr.bf16.mxu0 0
        %2306 = vmatpush1.bf16.xpose.msra.mxu0 0
        %2307 = vmatprep.mubr.bf16.mxu0 0
        %2308 = vmatmul.mubr.bf16.gmra.mrb[0].mxu0 %v2270
        %v2309 = vpop.f32.mrb[0].mxu0
        %v2310 = vadd.f32 %v1608, %v2309
        %v2311 = vpop.f32.mrb[0].mxu0
        %v2312 = vpop.f32.mrb[0].mxu0
        %v2313 = vadd.f32 %v1609, %v2312
        %v2314 = vpop.f32.mrb[0].mxu0
        %2315 = vdwg.mxu0
        %v2317 = vsel %vm1610, %v1207, 0
        %v2320 = vsel %vm1610, %v1399, 0
        %2322 = vmatprep.subr.bf16.mxu0 0
        %2323 = vmatpush1.bf16.xpose.msra.mxu0 %v2320
        %2324 = vmatprep.subr.bf16.mxu0 0
        %2325 = vmatpush1.bf16.xpose.msra.mxu0 0
        %2326 = vmatprep.subr.bf16.mxu0 0
        %2327 = vmatpush1.bf16.xpose.msra.mxu0 0
        %2328 = vmatprep.subr.bf16.mxu0 0
        %2329 = vmatpush1.bf16.xpose.msra.mxu0 0
        %2330 = vmatprep.subr.bf16.mxu0 0
        %2331 = vmatpush1.bf16.xpose.msra.mxu0 0
        %2332 = vmatprep.subr.bf16.mxu0 0
        %2333 = vmatpush1.bf16.xpose.msra.mxu0 0
        %2334 = vmatprep.subr.bf16.mxu0 0
        %2335 = vmatpush1.bf16.xpose.msra.mxu0 0
        %2336 = vmatprep.subr.bf16.mxu0 0
        %2337 = vmatpush1.bf16.xpose.msra.mxu0 0
        %2338 = vmatprep.subr.bf16.mxu0 0
        %2339 = vmatpush1.bf16.xpose.msra.mxu0 0
        %2340 = vmatprep.subr.bf16.mxu0 0
        %2341 = vmatpush1.bf16.xpose.msra.mxu0 0
        %2342 = vmatprep.subr.bf16.mxu0 0
        %2343 = vmatpush1.bf16.xpose.msra.mxu0 0
        %2344 = vmatprep.subr.bf16.mxu0 0
        %2345 = vmatpush1.bf16.xpose.msra.mxu0 0
        %2346 = vmatprep.subr.bf16.mxu0 0
        %2347 = vmatpush1.bf16.xpose.msra.mxu0 0
        %2348 = vmatprep.subr.bf16.mxu0 0
        %2349 = vmatpush1.bf16.xpose.msra.mxu0 0
        %2350 = vmatprep.subr.bf16.mxu0 0
        %2351 = vmatpush1.bf16.xpose.msra.mxu0 0
        %2352 = vmatprep.subr.bf16.mxu0 0
        %2353 = vmatpush1.bf16.xpose.msra.mxu0 0
        %2354 = vmatprep.mubr.bf16.mxu0 0
        %2355 = vmatmul.mubr.bf16.gmra.mrb[0].mxu0 %v2317
        %v2356 = vpop.f32.mrb[0].mxu0
        %v2357 = vadd.f32 %v1608, %v2356
        %v2358 = vpop.f32.mrb[0].mxu0
        %v2359 = vpop.f32.mrb[0].mxu0
        %v2360 = vadd.f32 %v1609, %v2359
        %v2361 = vpop.f32.mrb[0].mxu0
        %2362 = vdwg.mxu0
        %v2364 = vsel %vm1610, %v1208, 0
        %v2367 = vsel %vm1610, %v1400, 0
        %2369 = vmatprep.subr.bf16.mxu0 0
        %2370 = vmatpush1.bf16.xpose.msra.mxu0 %v2367
        %2371 = vmatprep.subr.bf16.mxu0 0
        %2372 = vmatpush1.bf16.xpose.msra.mxu0 0
        %2373 = vmatprep.subr.bf16.mxu0 0
        %2374 = vmatpush1.bf16.xpose.msra.mxu0 0
        %2375 = vmatprep.subr.bf16.mxu0 0
        %2376 = vmatpush1.bf16.xpose.msra.mxu0 0
        %2377 = vmatprep.subr.bf16.mxu0 0
        %2378 = vmatpush1.bf16.xpose.msra.mxu0 0
        %2379 = vmatprep.subr.bf16.mxu0 0
        %2380 = vmatpush1.bf16.xpose.msra.mxu0 0
        %2381 = vmatprep.subr.bf16.mxu0 0
        %2382 = vmatpush1.bf16.xpose.msra.mxu0 0
        %2383 = vmatprep.subr.bf16.mxu0 0
        %2384 = vmatpush1.bf16.xpose.msra.mxu0 0
        %2385 = vmatprep.subr.bf16.mxu0 0
        %2386 = vmatpush1.bf16.xpose.msra.mxu0 0
        %2387 = vmatprep.subr.bf16.mxu0 0
        %2388 = vmatpush1.bf16.xpose.msra.mxu0 0
        %2389 = vmatprep.subr.bf16.mxu0 0
        %2390 = vmatpush1.bf16.xpose.msra.mxu0 0
        %2391 = vmatprep.subr.bf16.mxu0 0
        %2392 = vmatpush1.bf16.xpose.msra.mxu0 0
        %2393 = vmatprep.subr.bf16.mxu0 0
        %2394 = vmatpush1.bf16.xpose.msra.mxu0 0
        %2395 = vmatprep.subr.bf16.mxu0 0
        %2396 = vmatpush1.bf16.xpose.msra.mxu0 0
        %2397 = vmatprep.subr.bf16.mxu0 0
        %2398 = vmatpush1.bf16.xpose.msra.mxu0 0
        %2399 = vmatprep.subr.bf16.mxu0 0
        %2400 = vmatpush1.bf16.xpose.msra.mxu0 0
        %2401 = vmatprep.mubr.bf16.mxu0 0
        %2402 = vmatmul.mubr.bf16.gmra.mrb[0].mxu0 %v2364
        %v2403 = vpop.f32.mrb[0].mxu0
        %v2404 = vadd.f32 %v1608, %v2403
        %v2405 = vpop.f32.mrb[0].mxu0
        %v2406 = vpop.f32.mrb[0].mxu0
        %v2407 = vadd.f32 %v1609, %v2406
        %v2408 = vpop.f32.mrb[0].mxu0
        %2409 = vdwg.mxu0
        %v2411 = vsel %vm1610, %v1209, 0
        %v2414 = vsel %vm1610, %v1401, 0
        %2416 = vmatprep.subr.bf16.mxu0 0
        %2417 = vmatpush1.bf16.xpose.msra.mxu0 %v2414
        %2418 = vmatprep.subr.bf16.mxu0 0
        %2419 = vmatpush1.bf16.xpose.msra.mxu0 0
        %2420 = vmatprep.subr.bf16.mxu0 0
        %2421 = vmatpush1.bf16.xpose.msra.mxu0 0
        %2422 = vmatprep.subr.bf16.mxu0 0
        %2423 = vmatpush1.bf16.xpose.msra.mxu0 0
        %2424 = vmatprep.subr.bf16.mxu0 0
        %2425 = vmatpush1.bf16.xpose.msra.mxu0 0
        %2426 = vmatprep.subr.bf16.mxu0 0
        %2427 = vmatpush1.bf16.xpose.msra.mxu0 0
        %2428 = vmatprep.subr.bf16.mxu0 0
        %2429 = vmatpush1.bf16.xpose.msra.mxu0 0
        %2430 = vmatprep.subr.bf16.mxu0 0
        %2431 = vmatpush1.bf16.xpose.msra.mxu0 0
        %2432 = vmatprep.subr.bf16.mxu0 0
        %2433 = vmatpush1.bf16.xpose.msra.mxu0 0
        %2434 = vmatprep.subr.bf16.mxu0 0
        %2435 = vmatpush1.bf16.xpose.msra.mxu0 0
        %2436 = vmatprep.subr.bf16.mxu0 0
        %2437 = vmatpush1.bf16.xpose.msra.mxu0 0
        %2438 = vmatprep.subr.bf16.mxu0 0
        %2439 = vmatpush1.bf16.xpose.msra.mxu0 0
        %2440 = vmatprep.subr.bf16.mxu0 0
        %2441 = vmatpush1.bf16.xpose.msra.mxu0 0
        %2442 = vmatprep.subr.bf16.mxu0 0
        %2443 = vmatpush1.bf16.xpose.msra.mxu0 0
        %2444 = vmatprep.subr.bf16.mxu0 0
        %2445 = vmatpush1.bf16.xpose.msra.mxu0 0
        %2446 = vmatprep.subr.bf16.mxu0 0
        %2447 = vmatpush1.bf16.xpose.msra.mxu0 0
        %2448 = vmatprep.mubr.bf16.mxu0 0
        %2449 = vmatmul.mubr.bf16.gmra.mrb[0].mxu0 %v2411
        %v2450 = vpop.f32.mrb[0].mxu0
        %v2451 = vadd.f32 %v1608, %v2450
        %v2452 = vpop.f32.mrb[0].mxu0
        %v2453 = vpop.f32.mrb[0].mxu0
        %v2454 = vadd.f32 %v1609, %v2453
        %v2455 = vpop.f32.mrb[0].mxu0
        %2456 = vdwg.mxu0
        %v2458 = vsel %vm1610, %v1210, 0
        %v2461 = vsel %vm1610, %v1402, 0
        %2463 = vmatprep.subr.bf16.mxu0 0
        %2464 = vmatpush1.bf16.xpose.msra.mxu0 %v2461
        %2465 = vmatprep.subr.bf16.mxu0 0
        %2466 = vmatpush1.bf16.xpose.msra.mxu0 0
        %2467 = vmatprep.subr.bf16.mxu0 0
        %2468 = vmatpush1.bf16.xpose.msra.mxu0 0
        %2469 = vmatprep.subr.bf16.mxu0 0
        %2470 = vmatpush1.bf16.xpose.msra.mxu0 0
        %2471 = vmatprep.subr.bf16.mxu0 0
        %2472 = vmatpush1.bf16.xpose.msra.mxu0 0
        %2473 = vmatprep.subr.bf16.mxu0 0
        %2474 = vmatpush1.bf16.xpose.msra.mxu0 0
        %2475 = vmatprep.subr.bf16.mxu0 0
        %2476 = vmatpush1.bf16.xpose.msra.mxu0 0
        %2477 = vmatprep.subr.bf16.mxu0 0
        %2478 = vmatpush1.bf16.xpose.msra.mxu0 0
        %2479 = vmatprep.subr.bf16.mxu0 0
        %2480 = vmatpush1.bf16.xpose.msra.mxu0 0
        %2481 = vmatprep.subr.bf16.mxu0 0
        %2482 = vmatpush1.bf16.xpose.msra.mxu0 0
        %2483 = vmatprep.subr.bf16.mxu0 0
        %2484 = vmatpush1.bf16.xpose.msra.mxu0 0
        %2485 = vmatprep.subr.bf16.mxu0 0
        %2486 = vmatpush1.bf16.xpose.msra.mxu0 0
        %2487 = vmatprep.subr.bf16.mxu0 0
        %2488 = vmatpush1.bf16.xpose.msra.mxu0 0
        %2489 = vmatprep.subr.bf16.mxu0 0
        %2490 = vmatpush1.bf16.xpose.msra.mxu0 0
        %2491 = vmatprep.subr.bf16.mxu0 0
        %2492 = vmatpush1.bf16.xpose.msra.mxu0 0
        %2493 = vmatprep.subr.bf16.mxu0 0
        %2494 = vmatpush1.bf16.xpose.msra.mxu0 0
        %2495 = vmatprep.mubr.bf16.mxu0 0
        %2496 = vmatmul.mubr.bf16.gmra.mrb[0].mxu0 %v2458
        %v2497 = vpop.f32.mrb[0].mxu0
        %v2498 = vadd.f32 %v1608, %v2497
        %v2499 = vpop.f32.mrb[0].mxu0
        %v2500 = vpop.f32.mrb[0].mxu0
        %v2501 = vadd.f32 %v1609, %v2500
        %v2502 = vpop.f32.mrb[0].mxu0
        %2503 = vdwg.mxu0
        %v2505 = vsel %vm1610, %v1211, 0
        %v2508 = vsel %vm1610, %v1403, 0
        %2510 = vmatprep.subr.bf16.mxu0 0
        %2511 = vmatpush1.bf16.xpose.msra.mxu0 %v2508
        %2512 = vmatprep.subr.bf16.mxu0 0
        %2513 = vmatpush1.bf16.xpose.msra.mxu0 0
        %2514 = vmatprep.subr.bf16.mxu0 0
        %2515 = vmatpush1.bf16.xpose.msra.mxu0 0
        %2516 = vmatprep.subr.bf16.mxu0 0
        %2517 = vmatpush1.bf16.xpose.msra.mxu0 0
        %2518 = vmatprep.subr.bf16.mxu0 0
        %2519 = vmatpush1.bf16.xpose.msra.mxu0 0
        %2520 = vmatprep.subr.bf16.mxu0 0
        %2521 = vmatpush1.bf16.xpose.msra.mxu0 0
        %2522 = vmatprep.subr.bf16.mxu0 0
        %2523 = vmatpush1.bf16.xpose.msra.mxu0 0
        %2524 = vmatprep.subr.bf16.mxu0 0
        %2525 = vmatpush1.bf16.xpose.msra.mxu0 0
        %2526 = vmatprep.subr.bf16.mxu0 0
        %2527 = vmatpush1.bf16.xpose.msra.mxu0 0
        %2528 = vmatprep.subr.bf16.mxu0 0
        %2529 = vmatpush1.bf16.xpose.msra.mxu0 0
        %2530 = vmatprep.subr.bf16.mxu0 0
        %2531 = vmatpush1.bf16.xpose.msra.mxu0 0
        %2532 = vmatprep.subr.bf16.mxu0 0
        %2533 = vmatpush1.bf16.xpose.msra.mxu0 0
        %2534 = vmatprep.subr.bf16.mxu0 0
        %2535 = vmatpush1.bf16.xpose.msra.mxu0 0
        %2536 = vmatprep.subr.bf16.mxu0 0
        %2537 = vmatpush1.bf16.xpose.msra.mxu0 0
        %2538 = vmatprep.subr.bf16.mxu0 0
        %2539 = vmatpush1.bf16.xpose.msra.mxu0 0
        %2540 = vmatprep.subr.bf16.mxu0 0
        %2541 = vmatpush1.bf16.xpose.msra.mxu0 0
        %2542 = vmatprep.mubr.bf16.mxu0 0
        %2543 = vmatmul.mubr.bf16.gmra.mrb[0].mxu0 %v2505
        %v2544 = vpop.f32.mrb[0].mxu0
        %v2545 = vadd.f32 %v1608, %v2544
        %v2546 = vpop.f32.mrb[0].mxu0
        %v2547 = vpop.f32.mrb[0].mxu0
        %v2548 = vadd.f32 %v1609, %v2547
        %v2549 = vpop.f32.mrb[0].mxu0
        %2550 = vdwg.mxu0
        %v2552 = vsel %vm1610, %v1212, 0
        %v2555 = vsel %vm1610, %v1404, 0
        %2557 = vmatprep.subr.bf16.mxu0 0
        %2558 = vmatpush1.bf16.xpose.msra.mxu0 %v2555
        %2559 = vmatprep.subr.bf16.mxu0 0
        %2560 = vmatpush1.bf16.xpose.msra.mxu0 0
        %2561 = vmatprep.subr.bf16.mxu0 0
        %2562 = vmatpush1.bf16.xpose.msra.mxu0 0
        %2563 = vmatprep.subr.bf16.mxu0 0
        %2564 = vmatpush1.bf16.xpose.msra.mxu0 0
        %2565 = vmatprep.subr.bf16.mxu0 0
        %2566 = vmatpush1.bf16.xpose.msra.mxu0 0
        %2567 = vmatprep.subr.bf16.mxu0 0
        %2568 = vmatpush1.bf16.xpose.msra.mxu0 0
        %2569 = vmatprep.subr.bf16.mxu0 0
        %2570 = vmatpush1.bf16.xpose.msra.mxu0 0
        %2571 = vmatprep.subr.bf16.mxu0 0
        %2572 = vmatpush1.bf16.xpose.msra.mxu0 0
        %2573 = vmatprep.subr.bf16.mxu0 0
        %2574 = vmatpush1.bf16.xpose.msra.mxu0 0
        %2575 = vmatprep.subr.bf16.mxu0 0
        %2576 = vmatpush1.bf16.xpose.msra.mxu0 0
        %2577 = vmatprep.subr.bf16.mxu0 0
        %2578 = vmatpush1.bf16.xpose.msra.mxu0 0
        %2579 = vmatprep.subr.bf16.mxu0 0
        %2580 = vmatpush1.bf16.xpose.msra.mxu0 0
        %2581 = vmatprep.subr.bf16.mxu0 0
        %2582 = vmatpush1.bf16.xpose.msra.mxu0 0
        %2583 = vmatprep.subr.bf16.mxu0 0
        %2584 = vmatpush1.bf16.xpose.msra.mxu0 0
        %2585 = vmatprep.subr.bf16.mxu0 0
        %2586 = vmatpush1.bf16.xpose.msra.mxu0 0
        %2587 = vmatprep.subr.bf16.mxu0 0
        %2588 = vmatpush1.bf16.xpose.msra.mxu0 0
        %2589 = vmatprep.mubr.bf16.mxu0 0
        %2590 = vmatmul.mubr.bf16.gmra.mrb[0].mxu0 %v2552
        %v2591 = vpop.f32.mrb[0].mxu0
        %v2592 = vadd.f32 %v1608, %v2591
        %v2593 = vpop.f32.mrb[0].mxu0
        %v2594 = vpop.f32.mrb[0].mxu0
        %v2595 = vadd.f32 %v1609, %v2594
        %v2596 = vpop.f32.mrb[0].mxu0
        %2597 = vdwg.mxu0
        %v2599 = vsel %vm1610, %v1213, 0
        %v2602 = vsel %vm1610, %v1405, 0
        %2604 = vmatprep.subr.bf16.mxu0 0
        %2605 = vmatpush1.bf16.xpose.msra.mxu0 %v2602
        %2606 = vmatprep.subr.bf16.mxu0 0
        %2607 = vmatpush1.bf16.xpose.msra.mxu0 0
        %2608 = vmatprep.subr.bf16.mxu0 0
        %2609 = vmatpush1.bf16.xpose.msra.mxu0 0
        %2610 = vmatprep.subr.bf16.mxu0 0
        %2611 = vmatpush1.bf16.xpose.msra.mxu0 0
        %2612 = vmatprep.subr.bf16.mxu0 0
        %2613 = vmatpush1.bf16.xpose.msra.mxu0 0
        %2614 = vmatprep.subr.bf16.mxu0 0
        %2615 = vmatpush1.bf16.xpose.msra.mxu0 0
        %2616 = vmatprep.subr.bf16.mxu0 0
        %2617 = vmatpush1.bf16.xpose.msra.mxu0 0
        %2618 = vmatprep.subr.bf16.mxu0 0
        %2619 = vmatpush1.bf16.xpose.msra.mxu0 0
        %2620 = vmatprep.subr.bf16.mxu0 0
        %2621 = vmatpush1.bf16.xpose.msra.mxu0 0
        %2622 = vmatprep.subr.bf16.mxu0 0
        %2623 = vmatpush1.bf16.xpose.msra.mxu0 0
        %2624 = vmatprep.subr.bf16.mxu0 0
        %2625 = vmatpush1.bf16.xpose.msra.mxu0 0
        %2626 = vmatprep.subr.bf16.mxu0 0
        %2627 = vmatpush1.bf16.xpose.msra.mxu0 0
        %2628 = vmatprep.subr.bf16.mxu0 0
        %2629 = vmatpush1.bf16.xpose.msra.mxu0 0
        %2630 = vmatprep.subr.bf16.mxu0 0
        %2631 = vmatpush1.bf16.xpose.msra.mxu0 0
        %2632 = vmatprep.subr.bf16.mxu0 0
        %2633 = vmatpush1.bf16.xpose.msra.mxu0 0
        %2634 = vmatprep.subr.bf16.mxu0 0
        %2635 = vmatpush1.bf16.xpose.msra.mxu0 0
        %2636 = vmatprep.mubr.bf16.mxu0 0
        %2637 = vmatmul.mubr.bf16.gmra.mrb[0].mxu0 %v2599
        %v2638 = vpop.f32.mrb[0].mxu0
        %v2639 = vadd.f32 %v1608, %v2638
        %v2640 = vpop.f32.mrb[0].mxu0
        %v2641 = vpop.f32.mrb[0].mxu0
        %v2642 = vadd.f32 %v1609, %v2641
        %v2643 = vpop.f32.mrb[0].mxu0
        %2644 = vdwg.mxu0
        %v2646 = vsel %vm1610, %v1214, 0
        %v2649 = vsel %vm1610, %v1406, 0
        %2651 = vmatprep.subr.bf16.mxu0 0
        %2652 = vmatpush1.bf16.xpose.msra.mxu0 %v2649
        %2653 = vmatprep.subr.bf16.mxu0 0
        %2654 = vmatpush1.bf16.xpose.msra.mxu0 0
        %2655 = vmatprep.subr.bf16.mxu0 0
        %2656 = vmatpush1.bf16.xpose.msra.mxu0 0
        %2657 = vmatprep.subr.bf16.mxu0 0
        %2658 = vmatpush1.bf16.xpose.msra.mxu0 0
        %2659 = vmatprep.subr.bf16.mxu0 0
        %2660 = vmatpush1.bf16.xpose.msra.mxu0 0
        %2661 = vmatprep.subr.bf16.mxu0 0
        %2662 = vmatpush1.bf16.xpose.msra.mxu0 0
        %2663 = vmatprep.subr.bf16.mxu0 0
        %2664 = vmatpush1.bf16.xpose.msra.mxu0 0
        %2665 = vmatprep.subr.bf16.mxu0 0
        %2666 = vmatpush1.bf16.xpose.msra.mxu0 0
        %2667 = vmatprep.subr.bf16.mxu0 0
        %2668 = vmatpush1.bf16.xpose.msra.mxu0 0
        %2669 = vmatprep.subr.bf16.mxu0 0
        %2670 = vmatpush1.bf16.xpose.msra.mxu0 0
        %2671 = vmatprep.subr.bf16.mxu0 0
        %2672 = vmatpush1.bf16.xpose.msra.mxu0 0
        %2673 = vmatprep.subr.bf16.mxu0 0
        %2674 = vmatpush1.bf16.xpose.msra.mxu0 0
        %2675 = vmatprep.subr.bf16.mxu0 0
        %2676 = vmatpush1.bf16.xpose.msra.mxu0 0
        %2677 = vmatprep.subr.bf16.mxu0 0
        %2678 = vmatpush1.bf16.xpose.msra.mxu0 0
        %2679 = vmatprep.subr.bf16.mxu0 0
        %2680 = vmatpush1.bf16.xpose.msra.mxu0 0
        %2681 = vmatprep.subr.bf16.mxu0 0
        %2682 = vmatpush1.bf16.xpose.msra.mxu0 0
        %2683 = vmatprep.mubr.bf16.mxu0 0
        %2684 = vmatmul.mubr.bf16.gmra.mrb[0].mxu0 %v2646
        %v2685 = vpop.f32.mrb[0].mxu0
        %v2686 = vadd.f32 %v1608, %v2685
        %v2687 = vpop.f32.mrb[0].mxu0
        %v2688 = vpop.f32.mrb[0].mxu0
        %v2689 = vadd.f32 %v1609, %v2688
        %v2690 = vpop.f32.mrb[0].mxu0
        %2691 = vdwg.mxu0
        %v2693 = vsel %vm1610, %v1215, 0
        %v2696 = vsel %vm1610, %v1407, 0
        %2698 = vmatprep.subr.bf16.mxu0 0
        %2699 = vmatpush1.bf16.xpose.msra.mxu0 %v2696
        %2700 = vmatprep.subr.bf16.mxu0 0
        %2701 = vmatpush1.bf16.xpose.msra.mxu0 0
        %2702 = vmatprep.subr.bf16.mxu0 0
        %2703 = vmatpush1.bf16.xpose.msra.mxu0 0
        %2704 = vmatprep.subr.bf16.mxu0 0
        %2705 = vmatpush1.bf16.xpose.msra.mxu0 0
        %2706 = vmatprep.subr.bf16.mxu0 0
        %2707 = vmatpush1.bf16.xpose.msra.mxu0 0
        %2708 = vmatprep.subr.bf16.mxu0 0
        %2709 = vmatpush1.bf16.xpose.msra.mxu0 0
        %2710 = vmatprep.subr.bf16.mxu0 0
        %2711 = vmatpush1.bf16.xpose.msra.mxu0 0
        %2712 = vmatprep.subr.bf16.mxu0 0
        %2713 = vmatpush1.bf16.xpose.msra.mxu0 0
        %2714 = vmatprep.subr.bf16.mxu0 0
        %2715 = vmatpush1.bf16.xpose.msra.mxu0 0
        %2716 = vmatprep.subr.bf16.mxu0 0
        %2717 = vmatpush1.bf16.xpose.msra.mxu0 0
        %2718 = vmatprep.subr.bf16.mxu0 0
        %2719 = vmatpush1.bf16.xpose.msra.mxu0 0
        %2720 = vmatprep.subr.bf16.mxu0 0
        %2721 = vmatpush1.bf16.xpose.msra.mxu0 0
        %2722 = vmatprep.subr.bf16.mxu0 0
        %2723 = vmatpush1.bf16.xpose.msra.mxu0 0
        %2724 = vmatprep.subr.bf16.mxu0 0
        %2725 = vmatpush1.bf16.xpose.msra.mxu0 0
        %2726 = vmatprep.subr.bf16.mxu0 0
        %2727 = vmatpush1.bf16.xpose.msra.mxu0 0
        %2728 = vmatprep.subr.bf16.mxu0 0
        %2729 = vmatpush1.bf16.xpose.msra.mxu0 0
        %2730 = vmatprep.mubr.bf16.mxu0 0
        %2731 = vmatmul.mubr.bf16.gmra.mrb[0].mxu0 %v2693
        %v2732 = vpop.f32.mrb[0].mxu0
        %v2733 = vadd.f32 %v1608, %v2732
        %v2734 = vpop.f32.mrb[0].mxu0
        %v2735 = vpop.f32.mrb[0].mxu0
        %v2736 = vadd.f32 %v1609, %v2735
        %v2737 = vpop.f32.mrb[0].mxu0
        %2738 = vdwg.mxu0
        %v2740 = vsel %vm1610, %v1216, 0
        %v2743 = vsel %vm1610, %v1408, 0
        %2745 = vmatprep.subr.bf16.mxu0 0
        %2746 = vmatpush1.bf16.xpose.msra.mxu0 %v2743
        %2747 = vmatprep.subr.bf16.mxu0 0
        %2748 = vmatpush1.bf16.xpose.msra.mxu0 0
        %2749 = vmatprep.subr.bf16.mxu0 0
        %2750 = vmatpush1.bf16.xpose.msra.mxu0 0
        %2751 = vmatprep.subr.bf16.mxu0 0
        %2752 = vmatpush1.bf16.xpose.msra.mxu0 0
        %2753 = vmatprep.subr.bf16.mxu0 0
        %2754 = vmatpush1.bf16.xpose.msra.mxu0 0
        %2755 = vmatprep.subr.bf16.mxu0 0
        %2756 = vmatpush1.bf16.xpose.msra.mxu0 0
        %2757 = vmatprep.subr.bf16.mxu0 0
        %2758 = vmatpush1.bf16.xpose.msra.mxu0 0
        %2759 = vmatprep.subr.bf16.mxu0 0
        %2760 = vmatpush1.bf16.xpose.msra.mxu0 0
        %2761 = vmatprep.subr.bf16.mxu0 0
        %2762 = vmatpush1.bf16.xpose.msra.mxu0 0
        %2763 = vmatprep.subr.bf16.mxu0 0
        %2764 = vmatpush1.bf16.xpose.msra.mxu0 0
        %2765 = vmatprep.subr.bf16.mxu0 0
        %2766 = vmatpush1.bf16.xpose.msra.mxu0 0
        %2767 = vmatprep.subr.bf16.mxu0 0
        %2768 = vmatpush1.bf16.xpose.msra.mxu0 0
        %2769 = vmatprep.subr.bf16.mxu0 0
        %2770 = vmatpush1.bf16.xpose.msra.mxu0 0
        %2771 = vmatprep.subr.bf16.mxu0 0
        %2772 = vmatpush1.bf16.xpose.msra.mxu0 0
        %2773 = vmatprep.subr.bf16.mxu0 0
        %2774 = vmatpush1.bf16.xpose.msra.mxu0 0
        %2775 = vmatprep.subr.bf16.mxu0 0
        %2776 = vmatpush1.bf16.xpose.msra.mxu0 0
        %2777 = vmatprep.mubr.bf16.mxu0 0
        %2778 = vmatmul.mubr.bf16.gmra.mrb[0].mxu0 %v2740
        %v2779 = vpop.f32.mrb[0].mxu0
        %v2780 = vadd.f32 %v1608, %v2779
        %v2781 = vpop.f32.mrb[0].mxu0
        %v2782 = vpop.f32.mrb[0].mxu0
        %v2783 = vadd.f32 %v1609, %v2782
        %v2784 = vpop.f32.mrb[0].mxu0
        %2785 = vdwg.mxu0
        %v2787 = vsel %vm1610, %v1217, 0
        %v2790 = vsel %vm1610, %v1409, 0
        %2792 = vmatprep.subr.bf16.mxu0 0
        %2793 = vmatpush1.bf16.xpose.msra.mxu0 %v2790
        %2794 = vmatprep.subr.bf16.mxu0 0
        %2795 = vmatpush1.bf16.xpose.msra.mxu0 0
        %2796 = vmatprep.subr.bf16.mxu0 0
        %2797 = vmatpush1.bf16.xpose.msra.mxu0 0
        %2798 = vmatprep.subr.bf16.mxu0 0
        %2799 = vmatpush1.bf16.xpose.msra.mxu0 0
        %2800 = vmatprep.subr.bf16.mxu0 0
        %2801 = vmatpush1.bf16.xpose.msra.mxu0 0
        %2802 = vmatprep.subr.bf16.mxu0 0
        %2803 = vmatpush1.bf16.xpose.msra.mxu0 0
        %2804 = vmatprep.subr.bf16.mxu0 0
        %2805 = vmatpush1.bf16.xpose.msra.mxu0 0
        %2806 = vmatprep.subr.bf16.mxu0 0
        %2807 = vmatpush1.bf16.xpose.msra.mxu0 0
        %2808 = vmatprep.subr.bf16.mxu0 0
        %2809 = vmatpush1.bf16.xpose.msra.mxu0 0
        %2810 = vmatprep.subr.bf16.mxu0 0
        %2811 = vmatpush1.bf16.xpose.msra.mxu0 0
        %2812 = vmatprep.subr.bf16.mxu0 0
        %2813 = vmatpush1.bf16.xpose.msra.mxu0 0
        %2814 = vmatprep.subr.bf16.mxu0 0
        %2815 = vmatpush1.bf16.xpose.msra.mxu0 0
        %2816 = vmatprep.subr.bf16.mxu0 0
        %2817 = vmatpush1.bf16.xpose.msra.mxu0 0
        %2818 = vmatprep.subr.bf16.mxu0 0
        %2819 = vmatpush1.bf16.xpose.msra.mxu0 0
        %2820 = vmatprep.subr.bf16.mxu0 0
        %2821 = vmatpush1.bf16.xpose.msra.mxu0 0
        %2822 = vmatprep.subr.bf16.mxu0 0
        %2823 = vmatpush1.bf16.xpose.msra.mxu0 0
        %2824 = vmatprep.mubr.bf16.mxu0 0
        %2825 = vmatmul.mubr.bf16.gmra.mrb[0].mxu0 %v2787
        %v2826 = vpop.f32.mrb[0].mxu0
        %v2827 = vadd.f32 %v1608, %v2826
        %v2828 = vpop.f32.mrb[0].mxu0
        %v2829 = vpop.f32.mrb[0].mxu0
        %v2830 = vadd.f32 %v1609, %v2829
        %v2831 = vpop.f32.mrb[0].mxu0
        %2832 = vdwg.mxu0
        %v2834 = vsel %vm1610, %v1218, 0
        %v2837 = vsel %vm1610, %v1410, 0
        %2839 = vmatprep.subr.bf16.mxu0 0
        %2840 = vmatpush1.bf16.xpose.msra.mxu0 %v2837
        %2841 = vmatprep.subr.bf16.mxu0 0
        %2842 = vmatpush1.bf16.xpose.msra.mxu0 0
        %2843 = vmatprep.subr.bf16.mxu0 0
        %2844 = vmatpush1.bf16.xpose.msra.mxu0 0
        %2845 = vmatprep.subr.bf16.mxu0 0
        %2846 = vmatpush1.bf16.xpose.msra.mxu0 0
        %2847 = vmatprep.subr.bf16.mxu0 0
        %2848 = vmatpush1.bf16.xpose.msra.mxu0 0
        %2849 = vmatprep.subr.bf16.mxu0 0
        %2850 = vmatpush1.bf16.xpose.msra.mxu0 0
        %2851 = vmatprep.subr.bf16.mxu0 0
        %2852 = vmatpush1.bf16.xpose.msra.mxu0 0
        %2853 = vmatprep.subr.bf16.mxu0 0
        %2854 = vmatpush1.bf16.xpose.msra.mxu0 0
        %2855 = vmatprep.subr.bf16.mxu0 0
        %2856 = vmatpush1.bf16.xpose.msra.mxu0 0
        %2857 = vmatprep.subr.bf16.mxu0 0
        %2858 = vmatpush1.bf16.xpose.msra.mxu0 0
        %2859 = vmatprep.subr.bf16.mxu0 0
        %2860 = vmatpush1.bf16.xpose.msra.mxu0 0
        %2861 = vmatprep.subr.bf16.mxu0 0
        %2862 = vmatpush1.bf16.xpose.msra.mxu0 0
        %2863 = vmatprep.subr.bf16.mxu0 0
        %2864 = vmatpush1.bf16.xpose.msra.mxu0 0
        %2865 = vmatprep.subr.bf16.mxu0 0
        %2866 = vmatpush1.bf16.xpose.msra.mxu0 0
        %2867 = vmatprep.subr.bf16.mxu0 0
        %2868 = vmatpush1.bf16.xpose.msra.mxu0 0
        %2869 = vmatprep.subr.bf16.mxu0 0
        %2870 = vmatpush1.bf16.xpose.msra.mxu0 0
        %2871 = vmatprep.mubr.bf16.mxu0 0
        %2872 = vmatmul.mubr.bf16.gmra.mrb[0].mxu0 %v2834
        %v2873 = vpop.f32.mrb[0].mxu0
        %v2874 = vadd.f32 %v1608, %v2873
        %v2875 = vpop.f32.mrb[0].mxu0
        %v2876 = vpop.f32.mrb[0].mxu0
        %v2877 = vadd.f32 %v1609, %v2876
        %v2878 = vpop.f32.mrb[0].mxu0
        %2879 = vdwg.mxu0
        %v2881 = vsel %vm1610, %v1219, 0
        %v2884 = vsel %vm1610, %v1411, 0
        %2886 = vmatprep.subr.bf16.mxu0 0
        %2887 = vmatpush1.bf16.xpose.msra.mxu0 %v2884
        %2888 = vmatprep.subr.bf16.mxu0 0
        %2889 = vmatpush1.bf16.xpose.msra.mxu0 0
        %2890 = vmatprep.subr.bf16.mxu0 0
        %2891 = vmatpush1.bf16.xpose.msra.mxu0 0
        %2892 = vmatprep.subr.bf16.mxu0 0
        %2893 = vmatpush1.bf16.xpose.msra.mxu0 0
        %2894 = vmatprep.subr.bf16.mxu0 0
        %2895 = vmatpush1.bf16.xpose.msra.mxu0 0
        %2896 = vmatprep.subr.bf16.mxu0 0
        %2897 = vmatpush1.bf16.xpose.msra.mxu0 0
        %2898 = vmatprep.subr.bf16.mxu0 0
        %2899 = vmatpush1.bf16.xpose.msra.mxu0 0
        %2900 = vmatprep.subr.bf16.mxu0 0
        %2901 = vmatpush1.bf16.xpose.msra.mxu0 0
        %2902 = vmatprep.subr.bf16.mxu0 0
        %2903 = vmatpush1.bf16.xpose.msra.mxu0 0
        %2904 = vmatprep.subr.bf16.mxu0 0
        %2905 = vmatpush1.bf16.xpose.msra.mxu0 0
        %2906 = vmatprep.subr.bf16.mxu0 0
        %2907 = vmatpush1.bf16.xpose.msra.mxu0 0
        %2908 = vmatprep.subr.bf16.mxu0 0
        %2909 = vmatpush1.bf16.xpose.msra.mxu0 0
        %2910 = vmatprep.subr.bf16.mxu0 0
        %2911 = vmatpush1.bf16.xpose.msra.mxu0 0
        %2912 = vmatprep.subr.bf16.mxu0 0
        %2913 = vmatpush1.bf16.xpose.msra.mxu0 0
        %2914 = vmatprep.subr.bf16.mxu0 0
        %2915 = vmatpush1.bf16.xpose.msra.mxu0 0
        %2916 = vmatprep.subr.bf16.mxu0 0
        %2917 = vmatpush1.bf16.xpose.msra.mxu0 0
        %2918 = vmatprep.mubr.bf16.mxu0 0
        %2919 = vmatmul.mubr.bf16.gmra.mrb[0].mxu0 %v2881
        %v2920 = vpop.f32.mrb[0].mxu0
        %v2921 = vadd.f32 %v1608, %v2920
        %v2922 = vpop.f32.mrb[0].mxu0
        %v2923 = vpop.f32.mrb[0].mxu0
        %v2924 = vadd.f32 %v1609, %v2923
        %v2925 = vpop.f32.mrb[0].mxu0
        %2926 = vdwg.mxu0
        %v2928 = vsel %vm1610, %v1220, 0
        %v2931 = vsel %vm1610, %v1412, 0
        %2933 = vmatprep.subr.bf16.mxu0 0
        %2934 = vmatpush1.bf16.xpose.msra.mxu0 %v2931
        %2935 = vmatprep.subr.bf16.mxu0 0
        %2936 = vmatpush1.bf16.xpose.msra.mxu0 0
        %2937 = vmatprep.subr.bf16.mxu0 0
        %2938 = vmatpush1.bf16.xpose.msra.mxu0 0
        %2939 = vmatprep.subr.bf16.mxu0 0
        %2940 = vmatpush1.bf16.xpose.msra.mxu0 0
        %2941 = vmatprep.subr.bf16.mxu0 0
        %2942 = vmatpush1.bf16.xpose.msra.mxu0 0
        %2943 = vmatprep.subr.bf16.mxu0 0
        %2944 = vmatpush1.bf16.xpose.msra.mxu0 0
        %2945 = vmatprep.subr.bf16.mxu0 0
        %2946 = vmatpush1.bf16.xpose.msra.mxu0 0
        %2947 = vmatprep.subr.bf16.mxu0 0
        %2948 = vmatpush1.bf16.xpose.msra.mxu0 0
        %2949 = vmatprep.subr.bf16.mxu0 0
        %2950 = vmatpush1.bf16.xpose.msra.mxu0 0
        %2951 = vmatprep.subr.bf16.mxu0 0
        %2952 = vmatpush1.bf16.xpose.msra.mxu0 0
        %2953 = vmatprep.subr.bf16.mxu0 0
        %2954 = vmatpush1.bf16.xpose.msra.mxu0 0
        %2955 = vmatprep.subr.bf16.mxu0 0
        %2956 = vmatpush1.bf16.xpose.msra.mxu0 0
        %2957 = vmatprep.subr.bf16.mxu0 0
        %2958 = vmatpush1.bf16.xpose.msra.mxu0 0
        %2959 = vmatprep.subr.bf16.mxu0 0
        %2960 = vmatpush1.bf16.xpose.msra.mxu0 0
        %2961 = vmatprep.subr.bf16.mxu0 0
        %2962 = vmatpush1.bf16.xpose.msra.mxu0 0
        %2963 = vmatprep.subr.bf16.mxu0 0
        %2964 = vmatpush1.bf16.xpose.msra.mxu0 0
        %2965 = vmatprep.mubr.bf16.mxu0 0
        %2966 = vmatmul.mubr.bf16.gmra.mrb[0].mxu0 %v2928
        %v2967 = vpop.f32.mrb[0].mxu0
        %v2968 = vadd.f32 %v1608, %v2967
        %v2969 = vpop.f32.mrb[0].mxu0
        %v2970 = vpop.f32.mrb[0].mxu0
        %v2971 = vadd.f32 %v1609, %v2970
        %v2972 = vpop.f32.mrb[0].mxu0
        %2973 = vdwg.mxu0
        %v2975 = vsel %vm1610, %v1221, 0
        %v2978 = vsel %vm1610, %v1413, 0
        %2980 = vmatprep.subr.bf16.mxu0 0
        %2981 = vmatpush1.bf16.xpose.msra.mxu0 %v2978
        %2982 = vmatprep.subr.bf16.mxu0 0
        %2983 = vmatpush1.bf16.xpose.msra.mxu0 0
        %2984 = vmatprep.subr.bf16.mxu0 0
        %2985 = vmatpush1.bf16.xpose.msra.mxu0 0
        %2986 = vmatprep.subr.bf16.mxu0 0
        %2987 = vmatpush1.bf16.xpose.msra.mxu0 0
        %2988 = vmatprep.subr.bf16.mxu0 0
        %2989 = vmatpush1.bf16.xpose.msra.mxu0 0
        %2990 = vmatprep.subr.bf16.mxu0 0
        %2991 = vmatpush1.bf16.xpose.msra.mxu0 0
        %2992 = vmatprep.subr.bf16.mxu0 0
        %2993 = vmatpush1.bf16.xpose.msra.mxu0 0
        %2994 = vmatprep.subr.bf16.mxu0 0
        %2995 = vmatpush1.bf16.xpose.msra.mxu0 0
        %2996 = vmatprep.subr.bf16.mxu0 0
        %2997 = vmatpush1.bf16.xpose.msra.mxu0 0
        %2998 = vmatprep.subr.bf16.mxu0 0
        %2999 = vmatpush1.bf16.xpose.msra.mxu0 0
        %3000 = vmatprep.subr.bf16.mxu0 0
        %3001 = vmatpush1.bf16.xpose.msra.mxu0 0
        %3002 = vmatprep.subr.bf16.mxu0 0
        %3003 = vmatpush1.bf16.xpose.msra.mxu0 0
        %3004 = vmatprep.subr.bf16.mxu0 0
        %3005 = vmatpush1.bf16.xpose.msra.mxu0 0
        %3006 = vmatprep.subr.bf16.mxu0 0
        %3007 = vmatpush1.bf16.xpose.msra.mxu0 0
        %3008 = vmatprep.subr.bf16.mxu0 0
        %3009 = vmatpush1.bf16.xpose.msra.mxu0 0
        %3010 = vmatprep.subr.bf16.mxu0 0
        %3011 = vmatpush1.bf16.xpose.msra.mxu0 0
        %3012 = vmatprep.mubr.bf16.mxu0 0
        %3013 = vmatmul.mubr.bf16.gmra.mrb[0].mxu0 %v2975
        %v3014 = vpop.f32.mrb[0].mxu0
        %v3015 = vadd.f32 %v1608, %v3014
        %v3016 = vpop.f32.mrb[0].mxu0
        %v3017 = vpop.f32.mrb[0].mxu0
        %v3018 = vadd.f32 %v1609, %v3017
        %v3019 = vpop.f32.mrb[0].mxu0
        %3020 = vdwg.mxu0
        %v3022 = vsel %vm1610, %v1222, 0
        %v3025 = vsel %vm1610, %v1414, 0
        %3027 = vmatprep.subr.bf16.mxu0 0
        %3028 = vmatpush1.bf16.xpose.msra.mxu0 %v3025
        %3029 = vmatprep.subr.bf16.mxu0 0
        %3030 = vmatpush1.bf16.xpose.msra.mxu0 0
        %3031 = vmatprep.subr.bf16.mxu0 0
        %3032 = vmatpush1.bf16.xpose.msra.mxu0 0
        %3033 = vmatprep.subr.bf16.mxu0 0
        %3034 = vmatpush1.bf16.xpose.msra.mxu0 0
        %3035 = vmatprep.subr.bf16.mxu0 0
        %3036 = vmatpush1.bf16.xpose.msra.mxu0 0
        %3037 = vmatprep.subr.bf16.mxu0 0
        %3038 = vmatpush1.bf16.xpose.msra.mxu0 0
        %3039 = vmatprep.subr.bf16.mxu0 0
        %3040 = vmatpush1.bf16.xpose.msra.mxu0 0
        %3041 = vmatprep.subr.bf16.mxu0 0
        %3042 = vmatpush1.bf16.xpose.msra.mxu0 0
        %3043 = vmatprep.subr.bf16.mxu0 0
        %3044 = vmatpush1.bf16.xpose.msra.mxu0 0
        %3045 = vmatprep.subr.bf16.mxu0 0
        %3046 = vmatpush1.bf16.xpose.msra.mxu0 0
        %3047 = vmatprep.subr.bf16.mxu0 0
        %3048 = vmatpush1.bf16.xpose.msra.mxu0 0
        %3049 = vmatprep.subr.bf16.mxu0 0
        %3050 = vmatpush1.bf16.xpose.msra.mxu0 0
        %3051 = vmatprep.subr.bf16.mxu0 0
        %3052 = vmatpush1.bf16.xpose.msra.mxu0 0
        %3053 = vmatprep.subr.bf16.mxu0 0
        %3054 = vmatpush1.bf16.xpose.msra.mxu0 0
        %3055 = vmatprep.subr.bf16.mxu0 0
        %3056 = vmatpush1.bf16.xpose.msra.mxu0 0
        %3057 = vmatprep.subr.bf16.mxu0 0
        %3058 = vmatpush1.bf16.xpose.msra.mxu0 0
        %3059 = vmatprep.mubr.bf16.mxu0 0
        %3060 = vmatmul.mubr.bf16.gmra.mrb[0].mxu0 %v3022
        %v3061 = vpop.f32.mrb[0].mxu0
        %v3062 = vadd.f32 %v1608, %v3061
        %v3063 = vpop.f32.mrb[0].mxu0
        %v3064 = vpop.f32.mrb[0].mxu0
        %v3065 = vadd.f32 %v1609, %v3064
        %v3066 = vpop.f32.mrb[0].mxu0
        %3067 = vdwg.mxu0
        %v3069 = vsel %vm1610, %v1223, 0
        %v3072 = vsel %vm1610, %v1415, 0
        %3074 = vmatprep.subr.bf16.mxu0 0
        %3075 = vmatpush1.bf16.xpose.msra.mxu0 %v3072
        %3076 = vmatprep.subr.bf16.mxu0 0
        %3077 = vmatpush1.bf16.xpose.msra.mxu0 0
        %3078 = vmatprep.subr.bf16.mxu0 0
        %3079 = vmatpush1.bf16.xpose.msra.mxu0 0
        %3080 = vmatprep.subr.bf16.mxu0 0
        %3081 = vmatpush1.bf16.xpose.msra.mxu0 0
        %3082 = vmatprep.subr.bf16.mxu0 0
        %3083 = vmatpush1.bf16.xpose.msra.mxu0 0
        %3084 = vmatprep.subr.bf16.mxu0 0
        %3085 = vmatpush1.bf16.xpose.msra.mxu0 0
        %3086 = vmatprep.subr.bf16.mxu0 0
        %3087 = vmatpush1.bf16.xpose.msra.mxu0 0
        %3088 = vmatprep.subr.bf16.mxu0 0
        %3089 = vmatpush1.bf16.xpose.msra.mxu0 0
        %3090 = vmatprep.subr.bf16.mxu0 0
        %3091 = vmatpush1.bf16.xpose.msra.mxu0 0
        %3092 = vmatprep.subr.bf16.mxu0 0
        %3093 = vmatpush1.bf16.xpose.msra.mxu0 0
        %3094 = vmatprep.subr.bf16.mxu0 0
        %3095 = vmatpush1.bf16.xpose.msra.mxu0 0
        %3096 = vmatprep.subr.bf16.mxu0 0
        %3097 = vmatpush1.bf16.xpose.msra.mxu0 0
        %3098 = vmatprep.subr.bf16.mxu0 0
        %3099 = vmatpush1.bf16.xpose.msra.mxu0 0
        %3100 = vmatprep.subr.bf16.mxu0 0
        %3101 = vmatpush1.bf16.xpose.msra.mxu0 0
        %3102 = vmatprep.subr.bf16.mxu0 0
        %3103 = vmatpush1.bf16.xpose.msra.mxu0 0
        %3104 = vmatprep.subr.bf16.mxu0 0
        %3105 = vmatpush1.bf16.xpose.msra.mxu0 0
        %3106 = vmatprep.mubr.bf16.mxu0 0
        %3107 = vmatmul.mubr.bf16.gmra.mrb[0].mxu0 %v3069
        %v3108 = vpop.f32.mrb[0].mxu0
        %v3109 = vadd.f32 %v1608, %v3108
        %v3110 = vpop.f32.mrb[0].mxu0
        %v3111 = vpop.f32.mrb[0].mxu0
        %v3112 = vadd.f32 %v1609, %v3111
        %v3113 = vpop.f32.mrb[0].mxu0
        %3114 = vdwg.mxu0
        %vm3115 = vcmask 130048
        %v3116 = vsel %vm3115, %v1652, -inf
        %3117 = vmax.xlane.f32.xlu0 %v3116
        %v3118 = vpop.xlane.xlu0 %3117
        %v3119 = vsel %vm3115, %v1655, -inf
        %3120 = vmax.xlane.f32.xlu0 %v3119
        %v3121 = vpop.xlane.xlu0 %3120
        %v3122 = vsel %vm3115, %v1699, -inf
        %3123 = vmax.xlane.f32.xlu0 %v3122
        %v3124 = vpop.xlane.xlu0 %3123
        %v3125 = vsel %vm3115, %v1702, -inf
        %3126 = vmax.xlane.f32.xlu0 %v3125
        %v3127 = vpop.xlane.xlu0 %3126
        %v3128 = vsel %vm3115, %v1746, -inf
        %3129 = vmax.xlane.f32.xlu0 %v3128
        %v3130 = vpop.xlane.xlu0 %3129
        %v3131 = vsel %vm3115, %v1749, -inf
        %3132 = vmax.xlane.f32.xlu0 %v3131
        %v3133 = vpop.xlane.xlu0 %3132
        %v3134 = vsel %vm3115, %v1793, -inf
        %3135 = vmax.xlane.f32.xlu0 %v3134
        %v3136 = vpop.xlane.xlu0 %3135
        %v3137 = vsel %vm3115, %v1796, -inf
        %3138 = vmax.xlane.f32.xlu0 %v3137
        %v3139 = vpop.xlane.xlu0 %3138
        %v3140 = vsel %vm3115, %v1840, -inf
        %3141 = vmax.xlane.f32.xlu0 %v3140
        %v3142 = vpop.xlane.xlu0 %3141
        %v3143 = vsel %vm3115, %v1843, -inf
        %3144 = vmax.xlane.f32.xlu0 %v3143
        %v3145 = vpop.xlane.xlu0 %3144
        %v3146 = vsel %vm3115, %v1887, -inf
        %3147 = vmax.xlane.f32.xlu0 %v3146
        %v3148 = vpop.xlane.xlu0 %3147
        %v3149 = vsel %vm3115, %v1890, -inf
        %3150 = vmax.xlane.f32.xlu0 %v3149
        %v3151 = vpop.xlane.xlu0 %3150
        %v3152 = vsel %vm3115, %v1934, -inf
        %3153 = vmax.xlane.f32.xlu0 %v3152
        %v3154 = vpop.xlane.xlu0 %3153
        %v3155 = vsel %vm3115, %v1937, -inf
        %3156 = vmax.xlane.f32.xlu0 %v3155
        %v3157 = vpop.xlane.xlu0 %3156
        %v3158 = vsel %vm3115, %v1981, -inf
        %3159 = vmax.xlane.f32.xlu0 %v3158
        %v3160 = vpop.xlane.xlu0 %3159
        %v3161 = vsel %vm3115, %v1984, -inf
        %3162 = vmax.xlane.f32.xlu0 %v3161
        %v3163 = vpop.xlane.xlu0 %3162
        %v3164 = vsel %vm3115, %v2028, -inf
        %3165 = vmax.xlane.f32.xlu0 %v3164
        %v3166 = vpop.xlane.xlu0 %3165
        %v3167 = vsel %vm3115, %v2031, -inf
        %3168 = vmax.xlane.f32.xlu0 %v3167
        %v3169 = vpop.xlane.xlu0 %3168
        %v3170 = vsel %vm3115, %v2075, -inf
        %3171 = vmax.xlane.f32.xlu0 %v3170
        %v3172 = vpop.xlane.xlu0 %3171
        %v3173 = vsel %vm3115, %v2078, -inf
        %3174 = vmax.xlane.f32.xlu0 %v3173
        %v3175 = vpop.xlane.xlu0 %3174
        %v3176 = vsel %vm3115, %v2122, -inf
        %3177 = vmax.xlane.f32.xlu0 %v3176
        %v3178 = vpop.xlane.xlu0 %3177
        %v3179 = vsel %vm3115, %v2125, -inf
        %3180 = vmax.xlane.f32.xlu0 %v3179
        %v3181 = vpop.xlane.xlu0 %3180
        %v3182 = vsel %vm3115, %v2169, -inf
        %3183 = vmax.xlane.f32.xlu0 %v3182
        %v3184 = vpop.xlane.xlu0 %3183
        %v3185 = vsel %vm3115, %v2172, -inf
        %3186 = vmax.xlane.f32.xlu0 %v3185
        %v3187 = vpop.xlane.xlu0 %3186
        %v3188 = vsel %vm3115, %v2216, -inf
        %3189 = vmax.xlane.f32.xlu0 %v3188
        %v3190 = vpop.xlane.xlu0 %3189
        %v3191 = vsel %vm3115, %v2219, -inf
        %3192 = vmax.xlane.f32.xlu0 %v3191
        %v3193 = vpop.xlane.xlu0 %3192
        %v3194 = vsel %vm3115, %v2263, -inf
        %3195 = vmax.xlane.f32.xlu0 %v3194
        %v3196 = vpop.xlane.xlu0 %3195
        %v3197 = vsel %vm3115, %v2266, -inf
        %3198 = vmax.xlane.f32.xlu0 %v3197
        %v3199 = vpop.xlane.xlu0 %3198
        %v3200 = vsel %vm3115, %v2310, -inf
        %3201 = vmax.xlane.f32.xlu0 %v3200
        %v3202 = vpop.xlane.xlu0 %3201
        %v3203 = vsel %vm3115, %v2313, -inf
        %3204 = vmax.xlane.f32.xlu0 %v3203
        %v3205 = vpop.xlane.xlu0 %3204
        %v3206 = vsel %vm3115, %v2357, -inf
        %3207 = vmax.xlane.f32.xlu0 %v3206
        %v3208 = vpop.xlane.xlu0 %3207
        %v3209 = vsel %vm3115, %v2360, -inf
        %3210 = vmax.xlane.f32.xlu0 %v3209
        %v3211 = vpop.xlane.xlu0 %3210
        %v3212 = vsel %vm3115, %v2404, -inf
        %3213 = vmax.xlane.f32.xlu0 %v3212
        %v3214 = vpop.xlane.xlu0 %3213
        %v3215 = vsel %vm3115, %v2407, -inf
        %3216 = vmax.xlane.f32.xlu0 %v3215
        %v3217 = vpop.xlane.xlu0 %3216
        %v3218 = vsel %vm3115, %v2451, -inf
        %3219 = vmax.xlane.f32.xlu0 %v3218
        %v3220 = vpop.xlane.xlu0 %3219
        %v3221 = vsel %vm3115, %v2454, -inf
        %3222 = vmax.xlane.f32.xlu0 %v3221
        %v3223 = vpop.xlane.xlu0 %3222
        %v3224 = vsel %vm3115, %v2498, -inf
        %3225 = vmax.xlane.f32.xlu0 %v3224
        %v3226 = vpop.xlane.xlu0 %3225
        %v3227 = vsel %vm3115, %v2501, -inf
        %3228 = vmax.xlane.f32.xlu0 %v3227
        %v3229 = vpop.xlane.xlu0 %3228
        %v3230 = vsel %vm3115, %v2545, -inf
        %3231 = vmax.xlane.f32.xlu0 %v3230
        %v3232 = vpop.xlane.xlu0 %3231
        %v3233 = vsel %vm3115, %v2548, -inf
        %3234 = vmax.xlane.f32.xlu0 %v3233
        %v3235 = vpop.xlane.xlu0 %3234
        %v3236 = vsel %vm3115, %v2592, -inf
        %3237 = vmax.xlane.f32.xlu0 %v3236
        %v3238 = vpop.xlane.xlu0 %3237
        %v3239 = vsel %vm3115, %v2595, -inf
        %3240 = vmax.xlane.f32.xlu0 %v3239
        %v3241 = vpop.xlane.xlu0 %3240
        %v3242 = vsel %vm3115, %v2639, -inf
        %3243 = vmax.xlane.f32.xlu0 %v3242
        %v3244 = vpop.xlane.xlu0 %3243
        %v3245 = vsel %vm3115, %v2642, -inf
        %3246 = vmax.xlane.f32.xlu0 %v3245
        %v3247 = vpop.xlane.xlu0 %3246
        %v3248 = vsel %vm3115, %v2686, -inf
        %3249 = vmax.xlane.f32.xlu0 %v3248
        %v3250 = vpop.xlane.xlu0 %3249
        %v3251 = vsel %vm3115, %v2689, -inf
        %3252 = vmax.xlane.f32.xlu0 %v3251
        %v3253 = vpop.xlane.xlu0 %3252
        %v3254 = vsel %vm3115, %v2733, -inf
        %3255 = vmax.xlane.f32.xlu0 %v3254
        %v3256 = vpop.xlane.xlu0 %3255
        %v3257 = vsel %vm3115, %v2736, -inf
        %3258 = vmax.xlane.f32.xlu0 %v3257
        %v3259 = vpop.xlane.xlu0 %3258
        %v3260 = vsel %vm3115, %v2780, -inf
        %3261 = vmax.xlane.f32.xlu0 %v3260
        %v3262 = vpop.xlane.xlu0 %3261
        %v3263 = vsel %vm3115, %v2783, -inf
        %3264 = vmax.xlane.f32.xlu0 %v3263
        %v3265 = vpop.xlane.xlu0 %3264
        %v3266 = vsel %vm3115, %v2827, -inf
        %3267 = vmax.xlane.f32.xlu0 %v3266
        %v3268 = vpop.xlane.xlu0 %3267
        %v3269 = vsel %vm3115, %v2830, -inf
        %3270 = vmax.xlane.f32.xlu0 %v3269
        %v3271 = vpop.xlane.xlu0 %3270
        %v3272 = vsel %vm3115, %v2874, -inf
        %3273 = vmax.xlane.f32.xlu0 %v3272
        %v3274 = vpop.xlane.xlu0 %3273
        %v3275 = vsel %vm3115, %v2877, -inf
        %3276 = vmax.xlane.f32.xlu0 %v3275
        %v3277 = vpop.xlane.xlu0 %3276
        %v3278 = vsel %vm3115, %v2921, -inf
        %3279 = vmax.xlane.f32.xlu0 %v3278
        %v3280 = vpop.xlane.xlu0 %3279
        %v3281 = vsel %vm3115, %v2924, -inf
        %3282 = vmax.xlane.f32.xlu0 %v3281
        %v3283 = vpop.xlane.xlu0 %3282
        %v3284 = vsel %vm3115, %v2968, -inf
        %3285 = vmax.xlane.f32.xlu0 %v3284
        %v3286 = vpop.xlane.xlu0 %3285
        %v3287 = vsel %vm3115, %v2971, -inf
        %3288 = vmax.xlane.f32.xlu0 %v3287
        %v3289 = vpop.xlane.xlu0 %3288
        %v3290 = vsel %vm3115, %v3015, -inf
        %3291 = vmax.xlane.f32.xlu0 %v3290
        %v3292 = vpop.xlane.xlu0 %3291
        %v3293 = vsel %vm3115, %v3018, -inf
        %3294 = vmax.xlane.f32.xlu0 %v3293
        %v3295 = vpop.xlane.xlu0 %3294
        %v3296 = vsel %vm3115, %v3062, -inf
        %3297 = vmax.xlane.f32.xlu0 %v3296
        %v3298 = vpop.xlane.xlu0 %3297
        %v3299 = vsel %vm3115, %v3065, -inf
        %3300 = vmax.xlane.f32.xlu0 %v3299
        %v3301 = vpop.xlane.xlu0 %3300
        %v3302 = vsel %vm3115, %v3109, -inf
        %3303 = vmax.xlane.f32.xlu0 %v3302
        %v3304 = vpop.xlane.xlu0 %3303
        %v3305 = vsel %vm3115, %v3112, -inf
        %3306 = vmax.xlane.f32.xlu0 %v3305
        %v3307 = vpop.xlane.xlu0 %3306
        %v3308 = vsub.f32 %v1652, %v3118
        %v3309 = vsub.f32 %v1655, %v3121
        %v3310 = vsub.f32 %v1699, %v3124
        %v3311 = vsub.f32 %v1702, %v3127
        %v3312 = vsub.f32 %v1746, %v3130
        %v3313 = vsub.f32 %v1749, %v3133
        %v3314 = vsub.f32 %v1793, %v3136
        %v3315 = vsub.f32 %v1796, %v3139
        %v3316 = vsub.f32 %v1840, %v3142
        %v3317 = vsub.f32 %v1843, %v3145
        %v3318 = vsub.f32 %v1887, %v3148
        %v3319 = vsub.f32 %v1890, %v3151
        %v3320 = vsub.f32 %v1934, %v3154
        %v3321 = vsub.f32 %v1937, %v3157
        %v3322 = vsub.f32 %v1981, %v3160
        %v3323 = vsub.f32 %v1984, %v3163
        %v3324 = vsub.f32 %v2028, %v3166
        %v3325 = vsub.f32 %v2031, %v3169
        %v3326 = vsub.f32 %v2075, %v3172
        %v3327 = vsub.f32 %v2078, %v3175
        %v3328 = vsub.f32 %v2122, %v3178
        %v3329 = vsub.f32 %v2125, %v3181
        %v3330 = vsub.f32 %v2169, %v3184
        %v3331 = vsub.f32 %v2172, %v3187
        %v3332 = vsub.f32 %v2216, %v3190
        %v3333 = vsub.f32 %v2219, %v3193
        %v3334 = vsub.f32 %v2263, %v3196
        %v3335 = vsub.f32 %v2266, %v3199
        %v3336 = vsub.f32 %v2310, %v3202
        %v3337 = vsub.f32 %v2313, %v3205
        %v3338 = vsub.f32 %v2357, %v3208
        %v3339 = vsub.f32 %v2360, %v3211
        %v3340 = vsub.f32 %v2404, %v3214
        %v3341 = vsub.f32 %v2407, %v3217
        %v3342 = vsub.f32 %v2451, %v3220
        %v3343 = vsub.f32 %v2454, %v3223
        %v3344 = vsub.f32 %v2498, %v3226
        %v3345 = vsub.f32 %v2501, %v3229
        %v3346 = vsub.f32 %v2545, %v3232
        %v3347 = vsub.f32 %v2548, %v3235
        %v3348 = vsub.f32 %v2592, %v3238
        %v3349 = vsub.f32 %v2595, %v3241
        %v3350 = vsub.f32 %v2639, %v3244
        %v3351 = vsub.f32 %v2642, %v3247
        %v3352 = vsub.f32 %v2686, %v3250
        %v3353 = vsub.f32 %v2689, %v3253
        %v3354 = vsub.f32 %v2733, %v3256
        %v3355 = vsub.f32 %v2736, %v3259
        %v3356 = vsub.f32 %v2780, %v3262
        %v3357 = vsub.f32 %v2783, %v3265
        %v3358 = vsub.f32 %v2827, %v3268
        %v3359 = vsub.f32 %v2830, %v3271
        %v3360 = vsub.f32 %v2874, %v3274
        %v3361 = vsub.f32 %v2877, %v3277
        %v3362 = vsub.f32 %v2921, %v3280
        %v3363 = vsub.f32 %v2924, %v3283
        %v3364 = vsub.f32 %v2968, %v3286
        %v3365 = vsub.f32 %v2971, %v3289
        %v3366 = vsub.f32 %v3015, %v3292
        %v3367 = vsub.f32 %v3018, %v3295
        %v3368 = vsub.f32 %v3062, %v3298
        %v3369 = vsub.f32 %v3065, %v3301
        %v3370 = vsub.f32 %v3109, %v3304
        %v3371 = vsub.f32 %v3112, %v3307
        %v3372 = vmul.f32 %v3308, 1.442695
        %v3373 = vpow.pop %v3372
        %v3374 = vmul.f32 %v3309, 1.442695
        %v3375 = vpow.pop %v3374
        %v3376 = vmul.f32 %v3310, 1.442695
        %v3377 = vpow.pop %v3376
        %v3378 = vmul.f32 %v3311, 1.442695
        %v3379 = vpow.pop %v3378
        %v3380 = vmul.f32 %v3312, 1.442695
        %v3381 = vpow.pop %v3380
        %v3382 = vmul.f32 %v3313, 1.442695
        %v3383 = vpow.pop %v3382
        %v3384 = vmul.f32 %v3314, 1.442695
        %v3385 = vpow.pop %v3384
        %v3386 = vmul.f32 %v3315, 1.442695
        %v3387 = vpow.pop %v3386
        %v3388 = vmul.f32 %v3316, 1.442695
        %v3389 = vpow.pop %v3388
        %v3390 = vmul.f32 %v3317, 1.442695
        %v3391 = vpow.pop %v3390
        %v3392 = vmul.f32 %v3318, 1.442695
        %v3393 = vpow.pop %v3392
        %v3394 = vmul.f32 %v3319, 1.442695
        %v3395 = vpow.pop %v3394
        %v3396 = vmul.f32 %v3320, 1.442695
        %v3397 = vpow.pop %v3396
        %v3398 = vmul.f32 %v3321, 1.442695
        %v3399 = vpow.pop %v3398
        %v3400 = vmul.f32 %v3322, 1.442695
        %v3401 = vpow.pop %v3400
        %v3402 = vmul.f32 %v3323, 1.442695
        %v3403 = vpow.pop %v3402
        %v3404 = vmul.f32 %v3324, 1.442695
        %v3405 = vpow.pop %v3404
        %v3406 = vmul.f32 %v3325, 1.442695
        %v3407 = vpow.pop %v3406
        %v3408 = vmul.f32 %v3326, 1.442695
        %v3409 = vpow.pop %v3408
        %v3410 = vmul.f32 %v3327, 1.442695
        %v3411 = vpow.pop %v3410
        %v3412 = vmul.f32 %v3328, 1.442695
        %v3413 = vpow.pop %v3412
        %v3414 = vmul.f32 %v3329, 1.442695
        %v3415 = vpow.pop %v3414
        %v3416 = vmul.f32 %v3330, 1.442695
        %v3417 = vpow.pop %v3416
        %v3418 = vmul.f32 %v3331, 1.442695
        %v3419 = vpow.pop %v3418
        %v3420 = vmul.f32 %v3332, 1.442695
        %v3421 = vpow.pop %v3420
        %v3422 = vmul.f32 %v3333, 1.442695
        %v3423 = vpow.pop %v3422
        %v3424 = vmul.f32 %v3334, 1.442695
        %v3425 = vpow.pop %v3424
        %v3426 = vmul.f32 %v3335, 1.442695
        %v3427 = vpow.pop %v3426
        %v3428 = vmul.f32 %v3336, 1.442695
        %v3429 = vpow.pop %v3428
        %v3430 = vmul.f32 %v3337, 1.442695
        %v3431 = vpow.pop %v3430
        %v3432 = vmul.f32 %v3338, 1.442695
        %v3433 = vpow.pop %v3432
        %v3434 = vmul.f32 %v3339, 1.442695
        %v3435 = vpow.pop %v3434
        %v3436 = vmul.f32 %v3340, 1.442695
        %v3437 = vpow.pop %v3436
        %v3438 = vmul.f32 %v3341, 1.442695
        %v3439 = vpow.pop %v3438
        %v3440 = vmul.f32 %v3342, 1.442695
        %v3441 = vpow.pop %v3440
        %v3442 = vmul.f32 %v3343, 1.442695
        %v3443 = vpow.pop %v3442
        %v3444 = vmul.f32 %v3344, 1.442695
        %v3445 = vpow.pop %v3444
        %v3446 = vmul.f32 %v3345, 1.442695
        %v3447 = vpow.pop %v3446
        %v3448 = vmul.f32 %v3346, 1.442695
        %v3449 = vpow.pop %v3448
        %v3450 = vmul.f32 %v3347, 1.442695
        %v3451 = vpow.pop %v3450
        %v3452 = vmul.f32 %v3348, 1.442695
        %v3453 = vpow.pop %v3452
        %v3454 = vmul.f32 %v3349, 1.442695
        %v3455 = vpow.pop %v3454
        %v3456 = vmul.f32 %v3350, 1.442695
        %v3457 = vpow.pop %v3456
        %v3458 = vmul.f32 %v3351, 1.442695
        %v3459 = vpow.pop %v3458
        %v3460 = vmul.f32 %v3352, 1.442695
        %v3461 = vpow.pop %v3460
        %v3462 = vmul.f32 %v3353, 1.442695
        %v3463 = vpow.pop %v3462
        %v3464 = vmul.f32 %v3354, 1.442695
        %v3465 = vpow.pop %v3464
        %v3466 = vmul.f32 %v3355, 1.442695
        %v3467 = vpow.pop %v3466
        %v3468 = vmul.f32 %v3356, 1.442695
        %v3469 = vpow.pop %v3468
        %v3470 = vmul.f32 %v3357, 1.442695
        %v3471 = vpow.pop %v3470
        %v3472 = vmul.f32 %v3358, 1.442695
        %v3473 = vpow.pop %v3472
        %v3474 = vmul.f32 %v3359, 1.442695
        %v3475 = vpow.pop %v3474
        %v3476 = vmul.f32 %v3360, 1.442695
        %v3477 = vpow.pop %v3476
        %v3478 = vmul.f32 %v3361, 1.442695
        %v3479 = vpow.pop %v3478
        %v3480 = vmul.f32 %v3362, 1.442695
        %v3481 = vpow.pop %v3480
        %v3482 = vmul.f32 %v3363, 1.442695
        %v3483 = vpow.pop %v3482
        %v3484 = vmul.f32 %v3364, 1.442695
        %v3485 = vpow.pop %v3484
        %v3486 = vmul.f32 %v3365, 1.442695
        %v3487 = vpow.pop %v3486
        %v3488 = vmul.f32 %v3366, 1.442695
        %v3489 = vpow.pop %v3488
        %v3490 = vmul.f32 %v3367, 1.442695
        %v3491 = vpow.pop %v3490
        %v3492 = vmul.f32 %v3368, 1.442695
        %v3493 = vpow.pop %v3492
        %v3494 = vmul.f32 %v3369, 1.442695
        %v3495 = vpow.pop %v3494
        %v3496 = vmul.f32 %v3370, 1.442695
        %v3497 = vpow.pop %v3496
        %v3498 = vmul.f32 %v3371, 1.442695
        %v3499 = vpow.pop %v3498
        %v3500 = vsel %vm3115, %v3373, 0.0
        %3501 = vadd.xlane.f32.xlu0 %v3500
        %v3502 = vpop.xlane.xlu0 %3501
        %v3503 = vsel %vm3115, %v3375, 0.0
        %3504 = vadd.xlane.f32.xlu0 %v3503
        %v3505 = vpop.xlane.xlu0 %3504
        %v3506 = vsel %vm3115, %v3377, 0.0
        %3507 = vadd.xlane.f32.xlu0 %v3506
        %v3508 = vpop.xlane.xlu0 %3507
        %v3509 = vsel %vm3115, %v3379, 0.0
        %3510 = vadd.xlane.f32.xlu0 %v3509
        %v3511 = vpop.xlane.xlu0 %3510
        %v3512 = vsel %vm3115, %v3381, 0.0
        %3513 = vadd.xlane.f32.xlu0 %v3512
        %v3514 = vpop.xlane.xlu0 %3513
        %v3515 = vsel %vm3115, %v3383, 0.0
        %3516 = vadd.xlane.f32.xlu0 %v3515
        %v3517 = vpop.xlane.xlu0 %3516
        %v3518 = vsel %vm3115, %v3385, 0.0
        %3519 = vadd.xlane.f32.xlu0 %v3518
        %v3520 = vpop.xlane.xlu0 %3519
        %v3521 = vsel %vm3115, %v3387, 0.0
        %3522 = vadd.xlane.f32.xlu0 %v3521
        %v3523 = vpop.xlane.xlu0 %3522
        %v3524 = vsel %vm3115, %v3389, 0.0
        %3525 = vadd.xlane.f32.xlu0 %v3524
        %v3526 = vpop.xlane.xlu0 %3525
        %v3527 = vsel %vm3115, %v3391, 0.0
        %3528 = vadd.xlane.f32.xlu0 %v3527
        %v3529 = vpop.xlane.xlu0 %3528
        %v3530 = vsel %vm3115, %v3393, 0.0
        %3531 = vadd.xlane.f32.xlu0 %v3530
        %v3532 = vpop.xlane.xlu0 %3531
        %v3533 = vsel %vm3115, %v3395, 0.0
        %3534 = vadd.xlane.f32.xlu0 %v3533
        %v3535 = vpop.xlane.xlu0 %3534
        %v3536 = vsel %vm3115, %v3397, 0.0
        %3537 = vadd.xlane.f32.xlu0 %v3536
        %v3538 = vpop.xlane.xlu0 %3537
        %v3539 = vsel %vm3115, %v3399, 0.0
        %3540 = vadd.xlane.f32.xlu0 %v3539
        %v3541 = vpop.xlane.xlu0 %3540
        %v3542 = vsel %vm3115, %v3401, 0.0
        %3543 = vadd.xlane.f32.xlu0 %v3542
        %v3544 = vpop.xlane.xlu0 %3543
        %v3545 = vsel %vm3115, %v3403, 0.0
        %3546 = vadd.xlane.f32.xlu0 %v3545
        %v3547 = vpop.xlane.xlu0 %3546
        %v3548 = vsel %vm3115, %v3405, 0.0
        %3549 = vadd.xlane.f32.xlu0 %v3548
        %v3550 = vpop.xlane.xlu0 %3549
        %v3551 = vsel %vm3115, %v3407, 0.0
        %3552 = vadd.xlane.f32.xlu0 %v3551
        %v3553 = vpop.xlane.xlu0 %3552
        %v3554 = vsel %vm3115, %v3409, 0.0
        %3555 = vadd.xlane.f32.xlu0 %v3554
        %v3556 = vpop.xlane.xlu0 %3555
        %v3557 = vsel %vm3115, %v3411, 0.0
        %3558 = vadd.xlane.f32.xlu0 %v3557
        %v3559 = vpop.xlane.xlu0 %3558
        %v3560 = vsel %vm3115, %v3413, 0.0
        %3561 = vadd.xlane.f32.xlu0 %v3560
        %v3562 = vpop.xlane.xlu0 %3561
        %v3563 = vsel %vm3115, %v3415, 0.0
        %3564 = vadd.xlane.f32.xlu0 %v3563
        %v3565 = vpop.xlane.xlu0 %3564
        %v3566 = vsel %vm3115, %v3417, 0.0
        %3567 = vadd.xlane.f32.xlu0 %v3566
        %v3568 = vpop.xlane.xlu0 %3567
        %v3569 = vsel %vm3115, %v3419, 0.0
        %3570 = vadd.xlane.f32.xlu0 %v3569
        %v3571 = vpop.xlane.xlu0 %3570
        %v3572 = vsel %vm3115, %v3421, 0.0
        %3573 = vadd.xlane.f32.xlu0 %v3572
        %v3574 = vpop.xlane.xlu0 %3573
        %v3575 = vsel %vm3115, %v3423, 0.0
        %3576 = vadd.xlane.f32.xlu0 %v3575
        %v3577 = vpop.xlane.xlu0 %3576
        %v3578 = vsel %vm3115, %v3425, 0.0
        %3579 = vadd.xlane.f32.xlu0 %v3578
        %v3580 = vpop.xlane.xlu0 %3579
        %v3581 = vsel %vm3115, %v3427, 0.0
        %3582 = vadd.xlane.f32.xlu0 %v3581
        %v3583 = vpop.xlane.xlu0 %3582
        %v3584 = vsel %vm3115, %v3429, 0.0
        %3585 = vadd.xlane.f32.xlu0 %v3584
        %v3586 = vpop.xlane.xlu0 %3585
        %v3587 = vsel %vm3115, %v3431, 0.0
        %3588 = vadd.xlane.f32.xlu0 %v3587
        %v3589 = vpop.xlane.xlu0 %3588
        %v3590 = vsel %vm3115, %v3433, 0.0
        %3591 = vadd.xlane.f32.xlu0 %v3590
        %v3592 = vpop.xlane.xlu0 %3591
        %v3593 = vsel %vm3115, %v3435, 0.0
        %3594 = vadd.xlane.f32.xlu0 %v3593
        %v3595 = vpop.xlane.xlu0 %3594
        %v3596 = vsel %vm3115, %v3437, 0.0
        %3597 = vadd.xlane.f32.xlu0 %v3596
        %v3598 = vpop.xlane.xlu0 %3597
        %v3599 = vsel %vm3115, %v3439, 0.0
        %3600 = vadd.xlane.f32.xlu0 %v3599
        %v3601 = vpop.xlane.xlu0 %3600
        %v3602 = vsel %vm3115, %v3441, 0.0
        %3603 = vadd.xlane.f32.xlu0 %v3602
        %v3604 = vpop.xlane.xlu0 %3603
        %v3605 = vsel %vm3115, %v3443, 0.0
        %3606 = vadd.xlane.f32.xlu0 %v3605
        %v3607 = vpop.xlane.xlu0 %3606
        %v3608 = vsel %vm3115, %v3445, 0.0
        %3609 = vadd.xlane.f32.xlu0 %v3608
        %v3610 = vpop.xlane.xlu0 %3609
        %v3611 = vsel %vm3115, %v3447, 0.0
        %3612 = vadd.xlane.f32.xlu0 %v3611
        %v3613 = vpop.xlane.xlu0 %3612
        %v3614 = vsel %vm3115, %v3449, 0.0
        %3615 = vadd.xlane.f32.xlu0 %v3614
        %v3616 = vpop.xlane.xlu0 %3615
        %v3617 = vsel %vm3115, %v3451, 0.0
        %3618 = vadd.xlane.f32.xlu0 %v3617
        %v3619 = vpop.xlane.xlu0 %3618
        %v3620 = vsel %vm3115, %v3453, 0.0
        %3621 = vadd.xlane.f32.xlu0 %v3620
        %v3622 = vpop.xlane.xlu0 %3621
        %v3623 = vsel %vm3115, %v3455, 0.0
        %3624 = vadd.xlane.f32.xlu0 %v3623
        %v3625 = vpop.xlane.xlu0 %3624
        %v3626 = vsel %vm3115, %v3457, 0.0
        %3627 = vadd.xlane.f32.xlu0 %v3626
        %v3628 = vpop.xlane.xlu0 %3627
        %v3629 = vsel %vm3115, %v3459, 0.0
        %3630 = vadd.xlane.f32.xlu0 %v3629
        %v3631 = vpop.xlane.xlu0 %3630
        %v3632 = vsel %vm3115, %v3461, 0.0
        %3633 = vadd.xlane.f32.xlu0 %v3632
        %v3634 = vpop.xlane.xlu0 %3633
        %v3635 = vsel %vm3115, %v3463, 0.0
        %3636 = vadd.xlane.f32.xlu0 %v3635
        %v3637 = vpop.xlane.xlu0 %3636
        %v3638 = vsel %vm3115, %v3465, 0.0
        %3639 = vadd.xlane.f32.xlu0 %v3638
        %v3640 = vpop.xlane.xlu0 %3639
        %v3641 = vsel %vm3115, %v3467, 0.0
        %3642 = vadd.xlane.f32.xlu0 %v3641
        %v3643 = vpop.xlane.xlu0 %3642
        %v3644 = vsel %vm3115, %v3469, 0.0
        %3645 = vadd.xlane.f32.xlu0 %v3644
        %v3646 = vpop.xlane.xlu0 %3645
        %v3647 = vsel %vm3115, %v3471, 0.0
        %3648 = vadd.xlane.f32.xlu0 %v3647
        %v3649 = vpop.xlane.xlu0 %3648
        %v3650 = vsel %vm3115, %v3473, 0.0
        %3651 = vadd.xlane.f32.xlu0 %v3650
        %v3652 = vpop.xlane.xlu0 %3651
        %v3653 = vsel %vm3115, %v3475, 0.0
        %3654 = vadd.xlane.f32.xlu0 %v3653
        %v3655 = vpop.xlane.xlu0 %3654
        %v3656 = vsel %vm3115, %v3477, 0.0
        %3657 = vadd.xlane.f32.xlu0 %v3656
        %v3658 = vpop.xlane.xlu0 %3657
        %v3659 = vsel %vm3115, %v3479, 0.0
        %3660 = vadd.xlane.f32.xlu0 %v3659
        %v3661 = vpop.xlane.xlu0 %3660
        %v3662 = vsel %vm3115, %v3481, 0.0
        %3663 = vadd.xlane.f32.xlu0 %v3662
        %v3664 = vpop.xlane.xlu0 %3663
        %v3665 = vsel %vm3115, %v3483, 0.0
        %3666 = vadd.xlane.f32.xlu0 %v3665
        %v3667 = vpop.xlane.xlu0 %3666
        %v3668 = vsel %vm3115, %v3485, 0.0
        %3669 = vadd.xlane.f32.xlu0 %v3668
        %v3670 = vpop.xlane.xlu0 %3669
        %v3671 = vsel %vm3115, %v3487, 0.0
        %3672 = vadd.xlane.f32.xlu0 %v3671
        %v3673 = vpop.xlane.xlu0 %3672
        %v3674 = vsel %vm3115, %v3489, 0.0
        %3675 = vadd.xlane.f32.xlu0 %v3674
        %v3676 = vpop.xlane.xlu0 %3675
        %v3677 = vsel %vm3115, %v3491, 0.0
        %3678 = vadd.xlane.f32.xlu0 %v3677
        %v3679 = vpop.xlane.xlu0 %3678
        %v3680 = vsel %vm3115, %v3493, 0.0
        %3681 = vadd.xlane.f32.xlu0 %v3680
        %v3682 = vpop.xlane.xlu0 %3681
        %v3683 = vsel %vm3115, %v3495, 0.0
        %3684 = vadd.xlane.f32.xlu0 %v3683
        %v3685 = vpop.xlane.xlu0 %3684
        %v3686 = vsel %vm3115, %v3497, 0.0
        %3687 = vadd.xlane.f32.xlu0 %v3686
        %v3688 = vpop.xlane.xlu0 %3687
        %v3689 = vsel %vm3115, %v3499, 0.0
        %3690 = vadd.xlane.f32.xlu0 %v3689
        %v3691 = vpop.xlane.xlu0 %3690
        %v3692 = vrcp.pop %v3502
        %v3693 = vrcp.pop %v3505
        %v3694 = vrcp.pop %v3508
        %v3695 = vrcp.pop %v3511
        %v3696 = vrcp.pop %v3514
        %v3697 = vrcp.pop %v3517
        %v3698 = vrcp.pop %v3520
        %v3699 = vrcp.pop %v3523
        %v3700 = vrcp.pop %v3526
        %v3701 = vrcp.pop %v3529
        %v3702 = vrcp.pop %v3532
        %v3703 = vrcp.pop %v3535
        %v3704 = vrcp.pop %v3538
        %v3705 = vrcp.pop %v3541
        %v3706 = vrcp.pop %v3544
        %v3707 = vrcp.pop %v3547
        %v3708 = vrcp.pop %v3550
        %v3709 = vrcp.pop %v3553
        %v3710 = vrcp.pop %v3556
        %v3711 = vrcp.pop %v3559
        %v3712 = vrcp.pop %v3562
        %v3713 = vrcp.pop %v3565
        %v3714 = vrcp.pop %v3568
        %v3715 = vrcp.pop %v3571
        %v3716 = vrcp.pop %v3574
        %v3717 = vrcp.pop %v3577
        %v3718 = vrcp.pop %v3580
        %v3719 = vrcp.pop %v3583
        %v3720 = vrcp.pop %v3586
        %v3721 = vrcp.pop %v3589
        %v3722 = vrcp.pop %v3592
        %v3723 = vrcp.pop %v3595
        %v3724 = vrcp.pop %v3598
        %v3725 = vrcp.pop %v3601
        %v3726 = vrcp.pop %v3604
        %v3727 = vrcp.pop %v3607
        %v3728 = vrcp.pop %v3610
        %v3729 = vrcp.pop %v3613
        %v3730 = vrcp.pop %v3616
        %v3731 = vrcp.pop %v3619
        %v3732 = vrcp.pop %v3622
        %v3733 = vrcp.pop %v3625
        %v3734 = vrcp.pop %v3628
        %v3735 = vrcp.pop %v3631
        %v3736 = vrcp.pop %v3634
        %v3737 = vrcp.pop %v3637
        %v3738 = vrcp.pop %v3640
        %v3739 = vrcp.pop %v3643
        %v3740 = vrcp.pop %v3646
        %v3741 = vrcp.pop %v3649
        %v3742 = vrcp.pop %v3652
        %v3743 = vrcp.pop %v3655
        %v3744 = vrcp.pop %v3658
        %v3745 = vrcp.pop %v3661
        %v3746 = vrcp.pop %v3664
        %v3747 = vrcp.pop %v3667
        %v3748 = vrcp.pop %v3670
        %v3749 = vrcp.pop %v3673
        %v3750 = vrcp.pop %v3676
        %v3751 = vrcp.pop %v3679
        %v3752 = vrcp.pop %v3682
        %v3753 = vrcp.pop %v3685
        %v3754 = vrcp.pop %v3688
        %v3755 = vrcp.pop %v3691
        %v3756 = vmul.f32 %v3373, %v3692
        %v3757 = vmul.f32 %v3375, %v3693
        %v3758 = vmul.f32 %v3377, %v3694
        %v3759 = vmul.f32 %v3379, %v3695
        %v3760 = vmul.f32 %v3381, %v3696
        %v3761 = vmul.f32 %v3383, %v3697
        %v3762 = vmul.f32 %v3385, %v3698
        %v3763 = vmul.f32 %v3387, %v3699
        %v3764 = vmul.f32 %v3389, %v3700
        %v3765 = vmul.f32 %v3391, %v3701
        %v3766 = vmul.f32 %v3393, %v3702
        %v3767 = vmul.f32 %v3395, %v3703
        %v3768 = vmul.f32 %v3397, %v3704
        %v3769 = vmul.f32 %v3399, %v3705
        %v3770 = vmul.f32 %v3401, %v3706
        %v3771 = vmul.f32 %v3403, %v3707
        %v3772 = vmul.f32 %v3405, %v3708
        %v3773 = vmul.f32 %v3407, %v3709
        %v3774 = vmul.f32 %v3409, %v3710
        %v3775 = vmul.f32 %v3411, %v3711
        %v3776 = vmul.f32 %v3413, %v3712
        %v3777 = vmul.f32 %v3415, %v3713
        %v3778 = vmul.f32 %v3417, %v3714
        %v3779 = vmul.f32 %v3419, %v3715
        %v3780 = vmul.f32 %v3421, %v3716
        %v3781 = vmul.f32 %v3423, %v3717
        %v3782 = vmul.f32 %v3425, %v3718
        %v3783 = vmul.f32 %v3427, %v3719
        %v3784 = vmul.f32 %v3429, %v3720
        %v3785 = vmul.f32 %v3431, %v3721
        %v3786 = vmul.f32 %v3433, %v3722
        %v3787 = vmul.f32 %v3435, %v3723
        %v3788 = vmul.f32 %v3437, %v3724
        %v3789 = vmul.f32 %v3439, %v3725
        %v3790 = vmul.f32 %v3441, %v3726
        %v3791 = vmul.f32 %v3443, %v3727
        %v3792 = vmul.f32 %v3445, %v3728
        %v3793 = vmul.f32 %v3447, %v3729
        %v3794 = vmul.f32 %v3449, %v3730
        %v3795 = vmul.f32 %v3451, %v3731
        %v3796 = vmul.f32 %v3453, %v3732
        %v3797 = vmul.f32 %v3455, %v3733
        %v3798 = vmul.f32 %v3457, %v3734
        %v3799 = vmul.f32 %v3459, %v3735
        %v3800 = vmul.f32 %v3461, %v3736
        %v3801 = vmul.f32 %v3463, %v3737
        %v3802 = vmul.f32 %v3465, %v3738
        %v3803 = vmul.f32 %v3467, %v3739
        %v3804 = vmul.f32 %v3469, %v3740
        %v3805 = vmul.f32 %v3471, %v3741
        %v3806 = vmul.f32 %v3473, %v3742
        %v3807 = vmul.f32 %v3475, %v3743
        %v3808 = vmul.f32 %v3477, %v3744
        %v3809 = vmul.f32 %v3479, %v3745
        %v3810 = vmul.f32 %v3481, %v3746
        %v3811 = vmul.f32 %v3483, %v3747
        %v3812 = vmul.f32 %v3485, %v3748
        %v3813 = vmul.f32 %v3487, %v3749
        %v3814 = vmul.f32 %v3489, %v3750
        %v3815 = vmul.f32 %v3491, %v3751
        %v3816 = vmul.f32 %v3493, %v3752
        %v3817 = vmul.f32 %v3495, %v3753
        %v3818 = vmul.f32 %v3497, %v3754
        %v3819 = vmul.f32 %v3499, %v3755
        %v3820 = vpack.c.bf16 %v3757, %v3756
        %v3821 = vpack.c.bf16 %v3759, %v3758
        %v3822 = vpack.c.bf16 %v3761, %v3760
        %v3823 = vpack.c.bf16 %v3763, %v3762
        %v3824 = vpack.c.bf16 %v3765, %v3764
        %v3825 = vpack.c.bf16 %v3767, %v3766
        %v3826 = vpack.c.bf16 %v3769, %v3768
        %v3827 = vpack.c.bf16 %v3771, %v3770
        %v3828 = vpack.c.bf16 %v3773, %v3772
        %v3829 = vpack.c.bf16 %v3775, %v3774
        %v3830 = vpack.c.bf16 %v3777, %v3776
        %v3831 = vpack.c.bf16 %v3779, %v3778
        %v3832 = vpack.c.bf16 %v3781, %v3780
        %v3833 = vpack.c.bf16 %v3783, %v3782
        %v3834 = vpack.c.bf16 %v3785, %v3784
        %v3835 = vpack.c.bf16 %v3787, %v3786
        %v3836 = vpack.c.bf16 %v3789, %v3788
        %v3837 = vpack.c.bf16 %v3791, %v3790
        %v3838 = vpack.c.bf16 %v3793, %v3792
        %v3839 = vpack.c.bf16 %v3795, %v3794
        %v3840 = vpack.c.bf16 %v3797, %v3796
        %v3841 = vpack.c.bf16 %v3799, %v3798
        %v3842 = vpack.c.bf16 %v3801, %v3800
        %v3843 = vpack.c.bf16 %v3803, %v3802
        %v3844 = vpack.c.bf16 %v3805, %v3804
        %v3845 = vpack.c.bf16 %v3807, %v3806
        %v3846 = vpack.c.bf16 %v3809, %v3808
        %v3847 = vpack.c.bf16 %v3811, %v3810
        %v3848 = vpack.c.bf16 %v3813, %v3812
        %v3849 = vpack.c.bf16 %v3815, %v3814
        %v3850 = vpack.c.bf16 %v3817, %v3816
        %v3851 = vpack.c.bf16 %v3819, %v3818
        %v3853 = vsel %vm3115, %v3820, 0
        %3855 = vmatprep.subr.bf16.mxu0 0
        %3856 = vmatpush1.bf16.msra.mxu0 %v1576
        %3857 = vmatprep.subr.bf16.mxu0 0
        %3858 = vmatpush1.bf16.msra.mxu0 0
        %3859 = vmatprep.subr.bf16.mxu0 0
        %3860 = vmatpush1.bf16.msra.mxu0 0
        %3861 = vmatprep.subr.bf16.mxu0 0
        %3862 = vmatpush1.bf16.msra.mxu0 0
        %3863 = vmatprep.subr.bf16.mxu0 0
        %3864 = vmatpush1.bf16.msra.mxu0 0
        %3865 = vmatprep.subr.bf16.mxu0 0
        %3866 = vmatpush1.bf16.msra.mxu0 0
        %3867 = vmatprep.subr.bf16.mxu0 0
        %3868 = vmatpush1.bf16.msra.mxu0 0
        %3869 = vmatprep.subr.bf16.mxu0 0
        %3870 = vmatpush1.bf16.msra.mxu0 0
        %3871 = vmatprep.subr.bf16.mxu0 0
        %3872 = vmatpush1.bf16.msra.mxu0 0
        %3873 = vmatprep.subr.bf16.mxu0 0
        %3874 = vmatpush1.bf16.msra.mxu0 0
        %3875 = vmatprep.subr.bf16.mxu0 0
        %3876 = vmatpush1.bf16.msra.mxu0 0
        %3877 = vmatprep.subr.bf16.mxu0 0
        %3878 = vmatpush1.bf16.msra.mxu0 0
        %3879 = vmatprep.subr.bf16.mxu0 0
        %3880 = vmatpush1.bf16.msra.mxu0 0
        %3881 = vmatprep.subr.bf16.mxu0 0
        %3882 = vmatpush1.bf16.msra.mxu0 0
        %3883 = vmatprep.subr.bf16.mxu0 0
        %3884 = vmatpush1.bf16.msra.mxu0 0
        %3885 = vmatprep.subr.bf16.mxu0 0
        %3886 = vmatpush1.bf16.msra.mxu0 0
        %3887 = vmatprep.mubr.bf16.mxu0 0
        %3888 = vmatmul.mubr.bf16.gmra.mrb[0].mxu0 %v3853
        %v3889 = vpop.f32.mrb[0].mxu0
        %v3890 = vadd.f32 0.0, %v3889
        %v3891 = vpop.f32.mrb[0].mxu0
        %v3892 = vpop.f32.mrb[0].mxu0
        %v3893 = vadd.f32 0.0, %v3892
        %v3894 = vpop.f32.mrb[0].mxu0
        %3895 = vdwg.mxu0
        %v3897 = vsel %vm3115, %v3821, 0
        %3899 = vmatprep.subr.bf16.mxu0 0
        %3900 = vmatpush1.bf16.msra.mxu0 %v1577
        %3901 = vmatprep.subr.bf16.mxu0 0
        %3902 = vmatpush1.bf16.msra.mxu0 0
        %3903 = vmatprep.subr.bf16.mxu0 0
        %3904 = vmatpush1.bf16.msra.mxu0 0
        %3905 = vmatprep.subr.bf16.mxu0 0
        %3906 = vmatpush1.bf16.msra.mxu0 0
        %3907 = vmatprep.subr.bf16.mxu0 0
        %3908 = vmatpush1.bf16.msra.mxu0 0
        %3909 = vmatprep.subr.bf16.mxu0 0
        %3910 = vmatpush1.bf16.msra.mxu0 0
        %3911 = vmatprep.subr.bf16.mxu0 0
        %3912 = vmatpush1.bf16.msra.mxu0 0
        %3913 = vmatprep.subr.bf16.mxu0 0
        %3914 = vmatpush1.bf16.msra.mxu0 0
        %3915 = vmatprep.subr.bf16.mxu0 0
        %3916 = vmatpush1.bf16.msra.mxu0 0
        %3917 = vmatprep.subr.bf16.mxu0 0
        %3918 = vmatpush1.bf16.msra.mxu0 0
        %3919 = vmatprep.subr.bf16.mxu0 0
        %3920 = vmatpush1.bf16.msra.mxu0 0
        %3921 = vmatprep.subr.bf16.mxu0 0
        %3922 = vmatpush1.bf16.msra.mxu0 0
        %3923 = vmatprep.subr.bf16.mxu0 0
        %3924 = vmatpush1.bf16.msra.mxu0 0
        %3925 = vmatprep.subr.bf16.mxu0 0
        %3926 = vmatpush1.bf16.msra.mxu0 0
        %3927 = vmatprep.subr.bf16.mxu0 0
        %3928 = vmatpush1.bf16.msra.mxu0 0
        %3929 = vmatprep.subr.bf16.mxu0 0
        %3930 = vmatpush1.bf16.msra.mxu0 0
        %3931 = vmatprep.mubr.bf16.mxu0 0
        %3932 = vmatmul.mubr.bf16.gmra.mrb[0].mxu0 %v3897
        %v3933 = vpop.f32.mrb[0].mxu0
        %v3934 = vadd.f32 0.0, %v3933
        %v3935 = vpop.f32.mrb[0].mxu0
        %v3936 = vpop.f32.mrb[0].mxu0
        %v3937 = vadd.f32 0.0, %v3936
        %v3938 = vpop.f32.mrb[0].mxu0
        %3939 = vdwg.mxu0
        %v3941 = vsel %vm3115, %v3822, 0
        %3943 = vmatprep.subr.bf16.mxu0 0
        %3944 = vmatpush1.bf16.msra.mxu0 %v1578
        %3945 = vmatprep.subr.bf16.mxu0 0
        %3946 = vmatpush1.bf16.msra.mxu0 0
        %3947 = vmatprep.subr.bf16.mxu0 0
        %3948 = vmatpush1.bf16.msra.mxu0 0
        %3949 = vmatprep.subr.bf16.mxu0 0
        %3950 = vmatpush1.bf16.msra.mxu0 0
        %3951 = vmatprep.subr.bf16.mxu0 0
        %3952 = vmatpush1.bf16.msra.mxu0 0
        %3953 = vmatprep.subr.bf16.mxu0 0
        %3954 = vmatpush1.bf16.msra.mxu0 0
        %3955 = vmatprep.subr.bf16.mxu0 0
        %3956 = vmatpush1.bf16.msra.mxu0 0
        %3957 = vmatprep.subr.bf16.mxu0 0
        %3958 = vmatpush1.bf16.msra.mxu0 0
        %3959 = vmatprep.subr.bf16.mxu0 0
        %3960 = vmatpush1.bf16.msra.mxu0 0
        %3961 = vmatprep.subr.bf16.mxu0 0
        %3962 = vmatpush1.bf16.msra.mxu0 0
        %3963 = vmatprep.subr.bf16.mxu0 0
        %3964 = vmatpush1.bf16.msra.mxu0 0
        %3965 = vmatprep.subr.bf16.mxu0 0
        %3966 = vmatpush1.bf16.msra.mxu0 0
        %3967 = vmatprep.subr.bf16.mxu0 0
        %3968 = vmatpush1.bf16.msra.mxu0 0
        %3969 = vmatprep.subr.bf16.mxu0 0
        %3970 = vmatpush1.bf16.msra.mxu0 0
        %3971 = vmatprep.subr.bf16.mxu0 0
        %3972 = vmatpush1.bf16.msra.mxu0 0
        %3973 = vmatprep.subr.bf16.mxu0 0
        %3974 = vmatpush1.bf16.msra.mxu0 0
        %3975 = vmatprep.mubr.bf16.mxu0 0
        %3976 = vmatmul.mubr.bf16.gmra.mrb[0].mxu0 %v3941
        %v3977 = vpop.f32.mrb[0].mxu0
        %v3978 = vadd.f32 0.0, %v3977
        %v3979 = vpop.f32.mrb[0].mxu0
        %v3980 = vpop.f32.mrb[0].mxu0
        %v3981 = vadd.f32 0.0, %v3980
        %v3982 = vpop.f32.mrb[0].mxu0
        %3983 = vdwg.mxu0
        %v3985 = vsel %vm3115, %v3823, 0
        %3987 = vmatprep.subr.bf16.mxu0 0
        %3988 = vmatpush1.bf16.msra.mxu0 %v1579
        %3989 = vmatprep.subr.bf16.mxu0 0
        %3990 = vmatpush1.bf16.msra.mxu0 0
        %3991 = vmatprep.subr.bf16.mxu0 0
        %3992 = vmatpush1.bf16.msra.mxu0 0
        %3993 = vmatprep.subr.bf16.mxu0 0
        %3994 = vmatpush1.bf16.msra.mxu0 0
        %3995 = vmatprep.subr.bf16.mxu0 0
        %3996 = vmatpush1.bf16.msra.mxu0 0
        %3997 = vmatprep.subr.bf16.mxu0 0
        %3998 = vmatpush1.bf16.msra.mxu0 0
        %3999 = vmatprep.subr.bf16.mxu0 0
        %4000 = vmatpush1.bf16.msra.mxu0 0
        %4001 = vmatprep.subr.bf16.mxu0 0
        %4002 = vmatpush1.bf16.msra.mxu0 0
        %4003 = vmatprep.subr.bf16.mxu0 0
        %4004 = vmatpush1.bf16.msra.mxu0 0
        %4005 = vmatprep.subr.bf16.mxu0 0
        %4006 = vmatpush1.bf16.msra.mxu0 0
        %4007 = vmatprep.subr.bf16.mxu0 0
        %4008 = vmatpush1.bf16.msra.mxu0 0
        %4009 = vmatprep.subr.bf16.mxu0 0
        %4010 = vmatpush1.bf16.msra.mxu0 0
        %4011 = vmatprep.subr.bf16.mxu0 0
        %4012 = vmatpush1.bf16.msra.mxu0 0
        %4013 = vmatprep.subr.bf16.mxu0 0
        %4014 = vmatpush1.bf16.msra.mxu0 0
        %4015 = vmatprep.subr.bf16.mxu0 0
        %4016 = vmatpush1.bf16.msra.mxu0 0
        %4017 = vmatprep.subr.bf16.mxu0 0
        %4018 = vmatpush1.bf16.msra.mxu0 0
        %4019 = vmatprep.mubr.bf16.mxu0 0
        %4020 = vmatmul.mubr.bf16.gmra.mrb[0].mxu0 %v3985
        %v4021 = vpop.f32.mrb[0].mxu0
        %v4022 = vadd.f32 0.0, %v4021
        %v4023 = vpop.f32.mrb[0].mxu0
        %v4024 = vpop.f32.mrb[0].mxu0
        %v4025 = vadd.f32 0.0, %v4024
        %v4026 = vpop.f32.mrb[0].mxu0
        %4027 = vdwg.mxu0
        %v4029 = vsel %vm3115, %v3824, 0
        %4031 = vmatprep.subr.bf16.mxu0 0
        %4032 = vmatpush1.bf16.msra.mxu0 %v1580
        %4033 = vmatprep.subr.bf16.mxu0 0
        %4034 = vmatpush1.bf16.msra.mxu0 0
        %4035 = vmatprep.subr.bf16.mxu0 0
        %4036 = vmatpush1.bf16.msra.mxu0 0
        %4037 = vmatprep.subr.bf16.mxu0 0
        %4038 = vmatpush1.bf16.msra.mxu0 0
        %4039 = vmatprep.subr.bf16.mxu0 0
        %4040 = vmatpush1.bf16.msra.mxu0 0
        %4041 = vmatprep.subr.bf16.mxu0 0
        %4042 = vmatpush1.bf16.msra.mxu0 0
        %4043 = vmatprep.subr.bf16.mxu0 0
        %4044 = vmatpush1.bf16.msra.mxu0 0
        %4045 = vmatprep.subr.bf16.mxu0 0
        %4046 = vmatpush1.bf16.msra.mxu0 0
        %4047 = vmatprep.subr.bf16.mxu0 0
        %4048 = vmatpush1.bf16.msra.mxu0 0
        %4049 = vmatprep.subr.bf16.mxu0 0
        %4050 = vmatpush1.bf16.msra.mxu0 0
        %4051 = vmatprep.subr.bf16.mxu0 0
        %4052 = vmatpush1.bf16.msra.mxu0 0
        %4053 = vmatprep.subr.bf16.mxu0 0
        %4054 = vmatpush1.bf16.msra.mxu0 0
        %4055 = vmatprep.subr.bf16.mxu0 0
        %4056 = vmatpush1.bf16.msra.mxu0 0
        %4057 = vmatprep.subr.bf16.mxu0 0
        %4058 = vmatpush1.bf16.msra.mxu0 0
        %4059 = vmatprep.subr.bf16.mxu0 0
        %4060 = vmatpush1.bf16.msra.mxu0 0
        %4061 = vmatprep.subr.bf16.mxu0 0
        %4062 = vmatpush1.bf16.msra.mxu0 0
        %4063 = vmatprep.mubr.bf16.mxu0 0
        %4064 = vmatmul.mubr.bf16.gmra.mrb[0].mxu0 %v4029
        %v4065 = vpop.f32.mrb[0].mxu0
        %v4066 = vadd.f32 0.0, %v4065
        %v4067 = vpop.f32.mrb[0].mxu0
        %v4068 = vpop.f32.mrb[0].mxu0
        %v4069 = vadd.f32 0.0, %v4068
        %v4070 = vpop.f32.mrb[0].mxu0
        %4071 = vdwg.mxu0
        %v4073 = vsel %vm3115, %v3825, 0
        %4075 = vmatprep.subr.bf16.mxu0 0
        %4076 = vmatpush1.bf16.msra.mxu0 %v1581
        %4077 = vmatprep.subr.bf16.mxu0 0
        %4078 = vmatpush1.bf16.msra.mxu0 0
        %4079 = vmatprep.subr.bf16.mxu0 0
        %4080 = vmatpush1.bf16.msra.mxu0 0
        %4081 = vmatprep.subr.bf16.mxu0 0
        %4082 = vmatpush1.bf16.msra.mxu0 0
        %4083 = vmatprep.subr.bf16.mxu0 0
        %4084 = vmatpush1.bf16.msra.mxu0 0
        %4085 = vmatprep.subr.bf16.mxu0 0
        %4086 = vmatpush1.bf16.msra.mxu0 0
        %4087 = vmatprep.subr.bf16.mxu0 0
        %4088 = vmatpush1.bf16.msra.mxu0 0
        %4089 = vmatprep.subr.bf16.mxu0 0
        %4090 = vmatpush1.bf16.msra.mxu0 0
        %4091 = vmatprep.subr.bf16.mxu0 0
        %4092 = vmatpush1.bf16.msra.mxu0 0
        %4093 = vmatprep.subr.bf16.mxu0 0
        %4094 = vmatpush1.bf16.msra.mxu0 0
        %4095 = vmatprep.subr.bf16.mxu0 0
        %4096 = vmatpush1.bf16.msra.mxu0 0
        %4097 = vmatprep.subr.bf16.mxu0 0
        %4098 = vmatpush1.bf16.msra.mxu0 0
        %4099 = vmatprep.subr.bf16.mxu0 0
        %4100 = vmatpush1.bf16.msra.mxu0 0
        %4101 = vmatprep.subr.bf16.mxu0 0
        %4102 = vmatpush1.bf16.msra.mxu0 0
        %4103 = vmatprep.subr.bf16.mxu0 0
        %4104 = vmatpush1.bf16.msra.mxu0 0
        %4105 = vmatprep.subr.bf16.mxu0 0
        %4106 = vmatpush1.bf16.msra.mxu0 0
        %4107 = vmatprep.mubr.bf16.mxu0 0
        %4108 = vmatmul.mubr.bf16.gmra.mrb[0].mxu0 %v4073
        %v4109 = vpop.f32.mrb[0].mxu0
        %v4110 = vadd.f32 0.0, %v4109
        %v4111 = vpop.f32.mrb[0].mxu0
        %v4112 = vpop.f32.mrb[0].mxu0
        %v4113 = vadd.f32 0.0, %v4112
        %v4114 = vpop.f32.mrb[0].mxu0
        %4115 = vdwg.mxu0
        %v4117 = vsel %vm3115, %v3826, 0
        %4119 = vmatprep.subr.bf16.mxu0 0
        %4120 = vmatpush1.bf16.msra.mxu0 %v1582
        %4121 = vmatprep.subr.bf16.mxu0 0
        %4122 = vmatpush1.bf16.msra.mxu0 0
        %4123 = vmatprep.subr.bf16.mxu0 0
        %4124 = vmatpush1.bf16.msra.mxu0 0
        %4125 = vmatprep.subr.bf16.mxu0 0
        %4126 = vmatpush1.bf16.msra.mxu0 0
        %4127 = vmatprep.subr.bf16.mxu0 0
        %4128 = vmatpush1.bf16.msra.mxu0 0
        %4129 = vmatprep.subr.bf16.mxu0 0
        %4130 = vmatpush1.bf16.msra.mxu0 0
        %4131 = vmatprep.subr.bf16.mxu0 0
        %4132 = vmatpush1.bf16.msra.mxu0 0
        %4133 = vmatprep.subr.bf16.mxu0 0
        %4134 = vmatpush1.bf16.msra.mxu0 0
        %4135 = vmatprep.subr.bf16.mxu0 0
        %4136 = vmatpush1.bf16.msra.mxu0 0
        %4137 = vmatprep.subr.bf16.mxu0 0
        %4138 = vmatpush1.bf16.msra.mxu0 0
        %4139 = vmatprep.subr.bf16.mxu0 0
        %4140 = vmatpush1.bf16.msra.mxu0 0
        %4141 = vmatprep.subr.bf16.mxu0 0
        %4142 = vmatpush1.bf16.msra.mxu0 0
        %4143 = vmatprep.subr.bf16.mxu0 0
        %4144 = vmatpush1.bf16.msra.mxu0 0
        %4145 = vmatprep.subr.bf16.mxu0 0
        %4146 = vmatpush1.bf16.msra.mxu0 0
        %4147 = vmatprep.subr.bf16.mxu0 0
        %4148 = vmatpush1.bf16.msra.mxu0 0
        %4149 = vmatprep.subr.bf16.mxu0 0
        %4150 = vmatpush1.bf16.msra.mxu0 0
        %4151 = vmatprep.mubr.bf16.mxu0 0
        %4152 = vmatmul.mubr.bf16.gmra.mrb[0].mxu0 %v4117
        %v4153 = vpop.f32.mrb[0].mxu0
        %v4154 = vadd.f32 0.0, %v4153
        %v4155 = vpop.f32.mrb[0].mxu0
        %v4156 = vpop.f32.mrb[0].mxu0
        %v4157 = vadd.f32 0.0, %v4156
        %v4158 = vpop.f32.mrb[0].mxu0
        %4159 = vdwg.mxu0
        %v4161 = vsel %vm3115, %v3827, 0
        %4163 = vmatprep.subr.bf16.mxu0 0
        %4164 = vmatpush1.bf16.msra.mxu0 %v1583
        %4165 = vmatprep.subr.bf16.mxu0 0
        %4166 = vmatpush1.bf16.msra.mxu0 0
        %4167 = vmatprep.subr.bf16.mxu0 0
        %4168 = vmatpush1.bf16.msra.mxu0 0
        %4169 = vmatprep.subr.bf16.mxu0 0
        %4170 = vmatpush1.bf16.msra.mxu0 0
        %4171 = vmatprep.subr.bf16.mxu0 0
        %4172 = vmatpush1.bf16.msra.mxu0 0
        %4173 = vmatprep.subr.bf16.mxu0 0
        %4174 = vmatpush1.bf16.msra.mxu0 0
        %4175 = vmatprep.subr.bf16.mxu0 0
        %4176 = vmatpush1.bf16.msra.mxu0 0
        %4177 = vmatprep.subr.bf16.mxu0 0
        %4178 = vmatpush1.bf16.msra.mxu0 0
        %4179 = vmatprep.subr.bf16.mxu0 0
        %4180 = vmatpush1.bf16.msra.mxu0 0
        %4181 = vmatprep.subr.bf16.mxu0 0
        %4182 = vmatpush1.bf16.msra.mxu0 0
        %4183 = vmatprep.subr.bf16.mxu0 0
        %4184 = vmatpush1.bf16.msra.mxu0 0
        %4185 = vmatprep.subr.bf16.mxu0 0
        %4186 = vmatpush1.bf16.msra.mxu0 0
        %4187 = vmatprep.subr.bf16.mxu0 0
        %4188 = vmatpush1.bf16.msra.mxu0 0
        %4189 = vmatprep.subr.bf16.mxu0 0
        %4190 = vmatpush1.bf16.msra.mxu0 0
        %4191 = vmatprep.subr.bf16.mxu0 0
        %4192 = vmatpush1.bf16.msra.mxu0 0
        %4193 = vmatprep.subr.bf16.mxu0 0
        %4194 = vmatpush1.bf16.msra.mxu0 0
        %4195 = vmatprep.mubr.bf16.mxu0 0
        %4196 = vmatmul.mubr.bf16.gmra.mrb[0].mxu0 %v4161
        %v4197 = vpop.f32.mrb[0].mxu0
        %v4198 = vadd.f32 0.0, %v4197
        %v4199 = vpop.f32.mrb[0].mxu0
        %v4200 = vpop.f32.mrb[0].mxu0
        %v4201 = vadd.f32 0.0, %v4200
        %v4202 = vpop.f32.mrb[0].mxu0
        %4203 = vdwg.mxu0
        %v4205 = vsel %vm3115, %v3828, 0
        %4207 = vmatprep.subr.bf16.mxu0 0
        %4208 = vmatpush1.bf16.msra.mxu0 %v1584
        %4209 = vmatprep.subr.bf16.mxu0 0
        %4210 = vmatpush1.bf16.msra.mxu0 0
        %4211 = vmatprep.subr.bf16.mxu0 0
        %4212 = vmatpush1.bf16.msra.mxu0 0
        %4213 = vmatprep.subr.bf16.mxu0 0
        %4214 = vmatpush1.bf16.msra.mxu0 0
        %4215 = vmatprep.subr.bf16.mxu0 0
        %4216 = vmatpush1.bf16.msra.mxu0 0
        %4217 = vmatprep.subr.bf16.mxu0 0
        %4218 = vmatpush1.bf16.msra.mxu0 0
        %4219 = vmatprep.subr.bf16.mxu0 0
        %4220 = vmatpush1.bf16.msra.mxu0 0
        %4221 = vmatprep.subr.bf16.mxu0 0
        %4222 = vmatpush1.bf16.msra.mxu0 0
        %4223 = vmatprep.subr.bf16.mxu0 0
        %4224 = vmatpush1.bf16.msra.mxu0 0
        %4225 = vmatprep.subr.bf16.mxu0 0
        %4226 = vmatpush1.bf16.msra.mxu0 0
        %4227 = vmatprep.subr.bf16.mxu0 0
        %4228 = vmatpush1.bf16.msra.mxu0 0
        %4229 = vmatprep.subr.bf16.mxu0 0
        %4230 = vmatpush1.bf16.msra.mxu0 0
        %4231 = vmatprep.subr.bf16.mxu0 0
        %4232 = vmatpush1.bf16.msra.mxu0 0
        %4233 = vmatprep.subr.bf16.mxu0 0
        %4234 = vmatpush1.bf16.msra.mxu0 0
        %4235 = vmatprep.subr.bf16.mxu0 0
        %4236 = vmatpush1.bf16.msra.mxu0 0
        %4237 = vmatprep.subr.bf16.mxu0 0
        %4238 = vmatpush1.bf16.msra.mxu0 0
        %4239 = vmatprep.mubr.bf16.mxu0 0
        %4240 = vmatmul.mubr.bf16.gmra.mrb[0].mxu0 %v4205
        %v4241 = vpop.f32.mrb[0].mxu0
        %v4242 = vadd.f32 0.0, %v4241
        %v4243 = vpop.f32.mrb[0].mxu0
        %v4244 = vpop.f32.mrb[0].mxu0
        %v4245 = vadd.f32 0.0, %v4244
        %v4246 = vpop.f32.mrb[0].mxu0
        %4247 = vdwg.mxu0
        %v4249 = vsel %vm3115, %v3829, 0
        %4251 = vmatprep.subr.bf16.mxu0 0
        %4252 = vmatpush1.bf16.msra.mxu0 %v1585
        %4253 = vmatprep.subr.bf16.mxu0 0
        %4254 = vmatpush1.bf16.msra.mxu0 0
        %4255 = vmatprep.subr.bf16.mxu0 0
        %4256 = vmatpush1.bf16.msra.mxu0 0
        %4257 = vmatprep.subr.bf16.mxu0 0
        %4258 = vmatpush1.bf16.msra.mxu0 0
        %4259 = vmatprep.subr.bf16.mxu0 0
        %4260 = vmatpush1.bf16.msra.mxu0 0
        %4261 = vmatprep.subr.bf16.mxu0 0
        %4262 = vmatpush1.bf16.msra.mxu0 0
        %4263 = vmatprep.subr.bf16.mxu0 0
        %4264 = vmatpush1.bf16.msra.mxu0 0
        %4265 = vmatprep.subr.bf16.mxu0 0
        %4266 = vmatpush1.bf16.msra.mxu0 0
        %4267 = vmatprep.subr.bf16.mxu0 0
        %4268 = vmatpush1.bf16.msra.mxu0 0
        %4269 = vmatprep.subr.bf16.mxu0 0
        %4270 = vmatpush1.bf16.msra.mxu0 0
        %4271 = vmatprep.subr.bf16.mxu0 0
        %4272 = vmatpush1.bf16.msra.mxu0 0
        %4273 = vmatprep.subr.bf16.mxu0 0
        %4274 = vmatpush1.bf16.msra.mxu0 0
        %4275 = vmatprep.subr.bf16.mxu0 0
        %4276 = vmatpush1.bf16.msra.mxu0 0
        %4277 = vmatprep.subr.bf16.mxu0 0
        %4278 = vmatpush1.bf16.msra.mxu0 0
        %4279 = vmatprep.subr.bf16.mxu0 0
        %4280 = vmatpush1.bf16.msra.mxu0 0
        %4281 = vmatprep.subr.bf16.mxu0 0
        %4282 = vmatpush1.bf16.msra.mxu0 0
        %4283 = vmatprep.mubr.bf16.mxu0 0
        %4284 = vmatmul.mubr.bf16.gmra.mrb[0].mxu0 %v4249
        %v4285 = vpop.f32.mrb[0].mxu0
        %v4286 = vadd.f32 0.0, %v4285
        %v4287 = vpop.f32.mrb[0].mxu0
        %v4288 = vpop.f32.mrb[0].mxu0
        %v4289 = vadd.f32 0.0, %v4288
        %v4290 = vpop.f32.mrb[0].mxu0
        %4291 = vdwg.mxu0
        %v4293 = vsel %vm3115, %v3830, 0
        %4295 = vmatprep.subr.bf16.mxu0 0
        %4296 = vmatpush1.bf16.msra.mxu0 %v1586
        %4297 = vmatprep.subr.bf16.mxu0 0
        %4298 = vmatpush1.bf16.msra.mxu0 0
        %4299 = vmatprep.subr.bf16.mxu0 0
        %4300 = vmatpush1.bf16.msra.mxu0 0
        %4301 = vmatprep.subr.bf16.mxu0 0
        %4302 = vmatpush1.bf16.msra.mxu0 0
        %4303 = vmatprep.subr.bf16.mxu0 0
        %4304 = vmatpush1.bf16.msra.mxu0 0
        %4305 = vmatprep.subr.bf16.mxu0 0
        %4306 = vmatpush1.bf16.msra.mxu0 0
        %4307 = vmatprep.subr.bf16.mxu0 0
        %4308 = vmatpush1.bf16.msra.mxu0 0
        %4309 = vmatprep.subr.bf16.mxu0 0
        %4310 = vmatpush1.bf16.msra.mxu0 0
        %4311 = vmatprep.subr.bf16.mxu0 0
        %4312 = vmatpush1.bf16.msra.mxu0 0
        %4313 = vmatprep.subr.bf16.mxu0 0
        %4314 = vmatpush1.bf16.msra.mxu0 0
        %4315 = vmatprep.subr.bf16.mxu0 0
        %4316 = vmatpush1.bf16.msra.mxu0 0
        %4317 = vmatprep.subr.bf16.mxu0 0
        %4318 = vmatpush1.bf16.msra.mxu0 0
        %4319 = vmatprep.subr.bf16.mxu0 0
        %4320 = vmatpush1.bf16.msra.mxu0 0
        %4321 = vmatprep.subr.bf16.mxu0 0
        %4322 = vmatpush1.bf16.msra.mxu0 0
        %4323 = vmatprep.subr.bf16.mxu0 0
        %4324 = vmatpush1.bf16.msra.mxu0 0
        %4325 = vmatprep.subr.bf16.mxu0 0
        %4326 = vmatpush1.bf16.msra.mxu0 0
        %4327 = vmatprep.mubr.bf16.mxu0 0
        %4328 = vmatmul.mubr.bf16.gmra.mrb[0].mxu0 %v4293
        %v4329 = vpop.f32.mrb[0].mxu0
        %v4330 = vadd.f32 0.0, %v4329
        %v4331 = vpop.f32.mrb[0].mxu0
        %v4332 = vpop.f32.mrb[0].mxu0
        %v4333 = vadd.f32 0.0, %v4332
        %v4334 = vpop.f32.mrb[0].mxu0
        %4335 = vdwg.mxu0
        %v4337 = vsel %vm3115, %v3831, 0
        %4339 = vmatprep.subr.bf16.mxu0 0
        %4340 = vmatpush1.bf16.msra.mxu0 %v1587
        %4341 = vmatprep.subr.bf16.mxu0 0
        %4342 = vmatpush1.bf16.msra.mxu0 0
        %4343 = vmatprep.subr.bf16.mxu0 0
        %4344 = vmatpush1.bf16.msra.mxu0 0
        %4345 = vmatprep.subr.bf16.mxu0 0
        %4346 = vmatpush1.bf16.msra.mxu0 0
        %4347 = vmatprep.subr.bf16.mxu0 0
        %4348 = vmatpush1.bf16.msra.mxu0 0
        %4349 = vmatprep.subr.bf16.mxu0 0
        %4350 = vmatpush1.bf16.msra.mxu0 0
        %4351 = vmatprep.subr.bf16.mxu0 0
        %4352 = vmatpush1.bf16.msra.mxu0 0
        %4353 = vmatprep.subr.bf16.mxu0 0
        %4354 = vmatpush1.bf16.msra.mxu0 0
        %4355 = vmatprep.subr.bf16.mxu0 0
        %4356 = vmatpush1.bf16.msra.mxu0 0
        %4357 = vmatprep.subr.bf16.mxu0 0
        %4358 = vmatpush1.bf16.msra.mxu0 0
        %4359 = vmatprep.subr.bf16.mxu0 0
        %4360 = vmatpush1.bf16.msra.mxu0 0
        %4361 = vmatprep.subr.bf16.mxu0 0
        %4362 = vmatpush1.bf16.msra.mxu0 0
        %4363 = vmatprep.subr.bf16.mxu0 0
        %4364 = vmatpush1.bf16.msra.mxu0 0
        %4365 = vmatprep.subr.bf16.mxu0 0
        %4366 = vmatpush1.bf16.msra.mxu0 0
        %4367 = vmatprep.subr.bf16.mxu0 0
        %4368 = vmatpush1.bf16.msra.mxu0 0
        %4369 = vmatprep.subr.bf16.mxu0 0
        %4370 = vmatpush1.bf16.msra.mxu0 0
        %4371 = vmatprep.mubr.bf16.mxu0 0
        %4372 = vmatmul.mubr.bf16.gmra.mrb[0].mxu0 %v4337
        %v4373 = vpop.f32.mrb[0].mxu0
        %v4374 = vadd.f32 0.0, %v4373
        %v4375 = vpop.f32.mrb[0].mxu0
        %v4376 = vpop.f32.mrb[0].mxu0
        %v4377 = vadd.f32 0.0, %v4376
        %v4378 = vpop.f32.mrb[0].mxu0
        %4379 = vdwg.mxu0
        %v4381 = vsel %vm3115, %v3832, 0
        %4383 = vmatprep.subr.bf16.mxu0 0
        %4384 = vmatpush1.bf16.msra.mxu0 %v1588
        %4385 = vmatprep.subr.bf16.mxu0 0
        %4386 = vmatpush1.bf16.msra.mxu0 0
        %4387 = vmatprep.subr.bf16.mxu0 0
        %4388 = vmatpush1.bf16.msra.mxu0 0
        %4389 = vmatprep.subr.bf16.mxu0 0
        %4390 = vmatpush1.bf16.msra.mxu0 0
        %4391 = vmatprep.subr.bf16.mxu0 0
        %4392 = vmatpush1.bf16.msra.mxu0 0
        %4393 = vmatprep.subr.bf16.mxu0 0
        %4394 = vmatpush1.bf16.msra.mxu0 0
        %4395 = vmatprep.subr.bf16.mxu0 0
        %4396 = vmatpush1.bf16.msra.mxu0 0
        %4397 = vmatprep.subr.bf16.mxu0 0
        %4398 = vmatpush1.bf16.msra.mxu0 0
        %4399 = vmatprep.subr.bf16.mxu0 0
        %4400 = vmatpush1.bf16.msra.mxu0 0
        %4401 = vmatprep.subr.bf16.mxu0 0
        %4402 = vmatpush1.bf16.msra.mxu0 0
        %4403 = vmatprep.subr.bf16.mxu0 0
        %4404 = vmatpush1.bf16.msra.mxu0 0
        %4405 = vmatprep.subr.bf16.mxu0 0
        %4406 = vmatpush1.bf16.msra.mxu0 0
        %4407 = vmatprep.subr.bf16.mxu0 0
        %4408 = vmatpush1.bf16.msra.mxu0 0
        %4409 = vmatprep.subr.bf16.mxu0 0
        %4410 = vmatpush1.bf16.msra.mxu0 0
        %4411 = vmatprep.subr.bf16.mxu0 0
        %4412 = vmatpush1.bf16.msra.mxu0 0
        %4413 = vmatprep.subr.bf16.mxu0 0
        %4414 = vmatpush1.bf16.msra.mxu0 0
        %4415 = vmatprep.mubr.bf16.mxu0 0
        %4416 = vmatmul.mubr.bf16.gmra.mrb[0].mxu0 %v4381
        %v4417 = vpop.f32.mrb[0].mxu0
        %v4418 = vadd.f32 0.0, %v4417
        %v4419 = vpop.f32.mrb[0].mxu0
        %v4420 = vpop.f32.mrb[0].mxu0
        %v4421 = vadd.f32 0.0, %v4420
        %v4422 = vpop.f32.mrb[0].mxu0
        %4423 = vdwg.mxu0
        %v4425 = vsel %vm3115, %v3833, 0
        %4427 = vmatprep.subr.bf16.mxu0 0
        %4428 = vmatpush1.bf16.msra.mxu0 %v1589
        %4429 = vmatprep.subr.bf16.mxu0 0
        %4430 = vmatpush1.bf16.msra.mxu0 0
        %4431 = vmatprep.subr.bf16.mxu0 0
        %4432 = vmatpush1.bf16.msra.mxu0 0
        %4433 = vmatprep.subr.bf16.mxu0 0
        %4434 = vmatpush1.bf16.msra.mxu0 0
        %4435 = vmatprep.subr.bf16.mxu0 0
        %4436 = vmatpush1.bf16.msra.mxu0 0
        %4437 = vmatprep.subr.bf16.mxu0 0
        %4438 = vmatpush1.bf16.msra.mxu0 0
        %4439 = vmatprep.subr.bf16.mxu0 0
        %4440 = vmatpush1.bf16.msra.mxu0 0
        %4441 = vmatprep.subr.bf16.mxu0 0
        %4442 = vmatpush1.bf16.msra.mxu0 0
        %4443 = vmatprep.subr.bf16.mxu0 0
        %4444 = vmatpush1.bf16.msra.mxu0 0
        %4445 = vmatprep.subr.bf16.mxu0 0
        %4446 = vmatpush1.bf16.msra.mxu0 0
        %4447 = vmatprep.subr.bf16.mxu0 0
        %4448 = vmatpush1.bf16.msra.mxu0 0
        %4449 = vmatprep.subr.bf16.mxu0 0
        %4450 = vmatpush1.bf16.msra.mxu0 0
        %4451 = vmatprep.subr.bf16.mxu0 0
        %4452 = vmatpush1.bf16.msra.mxu0 0
        %4453 = vmatprep.subr.bf16.mxu0 0
        %4454 = vmatpush1.bf16.msra.mxu0 0
        %4455 = vmatprep.subr.bf16.mxu0 0
        %4456 = vmatpush1.bf16.msra.mxu0 0
        %4457 = vmatprep.subr.bf16.mxu0 0
        %4458 = vmatpush1.bf16.msra.mxu0 0
        %4459 = vmatprep.mubr.bf16.mxu0 0
        %4460 = vmatmul.mubr.bf16.gmra.mrb[0].mxu0 %v4425
        %v4461 = vpop.f32.mrb[0].mxu0
        %v4462 = vadd.f32 0.0, %v4461
        %v4463 = vpop.f32.mrb[0].mxu0
        %v4464 = vpop.f32.mrb[0].mxu0
        %v4465 = vadd.f32 0.0, %v4464
        %v4466 = vpop.f32.mrb[0].mxu0
        %4467 = vdwg.mxu0
        %v4469 = vsel %vm3115, %v3834, 0
        %4471 = vmatprep.subr.bf16.mxu0 0
        %4472 = vmatpush1.bf16.msra.mxu0 %v1590
        %4473 = vmatprep.subr.bf16.mxu0 0
        %4474 = vmatpush1.bf16.msra.mxu0 0
        %4475 = vmatprep.subr.bf16.mxu0 0
        %4476 = vmatpush1.bf16.msra.mxu0 0
        %4477 = vmatprep.subr.bf16.mxu0 0
        %4478 = vmatpush1.bf16.msra.mxu0 0
        %4479 = vmatprep.subr.bf16.mxu0 0
        %4480 = vmatpush1.bf16.msra.mxu0 0
        %4481 = vmatprep.subr.bf16.mxu0 0
        %4482 = vmatpush1.bf16.msra.mxu0 0
        %4483 = vmatprep.subr.bf16.mxu0 0
        %4484 = vmatpush1.bf16.msra.mxu0 0
        %4485 = vmatprep.subr.bf16.mxu0 0
        %4486 = vmatpush1.bf16.msra.mxu0 0
        %4487 = vmatprep.subr.bf16.mxu0 0
        %4488 = vmatpush1.bf16.msra.mxu0 0
        %4489 = vmatprep.subr.bf16.mxu0 0
        %4490 = vmatpush1.bf16.msra.mxu0 0
        %4491 = vmatprep.subr.bf16.mxu0 0
        %4492 = vmatpush1.bf16.msra.mxu0 0
        %4493 = vmatprep.subr.bf16.mxu0 0
        %4494 = vmatpush1.bf16.msra.mxu0 0
        %4495 = vmatprep.subr.bf16.mxu0 0
        %4496 = vmatpush1.bf16.msra.mxu0 0
        %4497 = vmatprep.subr.bf16.mxu0 0
        %4498 = vmatpush1.bf16.msra.mxu0 0
        %4499 = vmatprep.subr.bf16.mxu0 0
        %4500 = vmatpush1.bf16.msra.mxu0 0
        %4501 = vmatprep.subr.bf16.mxu0 0
        %4502 = vmatpush1.bf16.msra.mxu0 0
        %4503 = vmatprep.mubr.bf16.mxu0 0
        %4504 = vmatmul.mubr.bf16.gmra.mrb[0].mxu0 %v4469
        %v4505 = vpop.f32.mrb[0].mxu0
        %v4506 = vadd.f32 0.0, %v4505
        %v4507 = vpop.f32.mrb[0].mxu0
        %v4508 = vpop.f32.mrb[0].mxu0
        %v4509 = vadd.f32 0.0, %v4508
        %v4510 = vpop.f32.mrb[0].mxu0
        %4511 = vdwg.mxu0
        %v4513 = vsel %vm3115, %v3835, 0
        %4515 = vmatprep.subr.bf16.mxu0 0
        %4516 = vmatpush1.bf16.msra.mxu0 %v1591
        %4517 = vmatprep.subr.bf16.mxu0 0
        %4518 = vmatpush1.bf16.msra.mxu0 0
        %4519 = vmatprep.subr.bf16.mxu0 0
        %4520 = vmatpush1.bf16.msra.mxu0 0
        %4521 = vmatprep.subr.bf16.mxu0 0
        %4522 = vmatpush1.bf16.msra.mxu0 0
        %4523 = vmatprep.subr.bf16.mxu0 0
        %4524 = vmatpush1.bf16.msra.mxu0 0
        %4525 = vmatprep.subr.bf16.mxu0 0
        %4526 = vmatpush1.bf16.msra.mxu0 0
        %4527 = vmatprep.subr.bf16.mxu0 0
        %4528 = vmatpush1.bf16.msra.mxu0 0
        %4529 = vmatprep.subr.bf16.mxu0 0
        %4530 = vmatpush1.bf16.msra.mxu0 0
        %4531 = vmatprep.subr.bf16.mxu0 0
        %4532 = vmatpush1.bf16.msra.mxu0 0
        %4533 = vmatprep.subr.bf16.mxu0 0
        %4534 = vmatpush1.bf16.msra.mxu0 0
        %4535 = vmatprep.subr.bf16.mxu0 0
        %4536 = vmatpush1.bf16.msra.mxu0 0
        %4537 = vmatprep.subr.bf16.mxu0 0
        %4538 = vmatpush1.bf16.msra.mxu0 0
        %4539 = vmatprep.subr.bf16.mxu0 0
        %4540 = vmatpush1.bf16.msra.mxu0 0
        %4541 = vmatprep.subr.bf16.mxu0 0
        %4542 = vmatpush1.bf16.msra.mxu0 0
        %4543 = vmatprep.subr.bf16.mxu0 0
        %4544 = vmatpush1.bf16.msra.mxu0 0
        %4545 = vmatprep.subr.bf16.mxu0 0
        %4546 = vmatpush1.bf16.msra.mxu0 0
        %4547 = vmatprep.mubr.bf16.mxu0 0
        %4548 = vmatmul.mubr.bf16.gmra.mrb[0].mxu0 %v4513
        %v4549 = vpop.f32.mrb[0].mxu0
        %v4550 = vadd.f32 0.0, %v4549
        %v4551 = vpop.f32.mrb[0].mxu0
        %v4552 = vpop.f32.mrb[0].mxu0
        %v4553 = vadd.f32 0.0, %v4552
        %v4554 = vpop.f32.mrb[0].mxu0
        %4555 = vdwg.mxu0
        %v4557 = vsel %vm3115, %v3836, 0
        %4559 = vmatprep.subr.bf16.mxu0 0
        %4560 = vmatpush1.bf16.msra.mxu0 %v1592
        %4561 = vmatprep.subr.bf16.mxu0 0
        %4562 = vmatpush1.bf16.msra.mxu0 0
        %4563 = vmatprep.subr.bf16.mxu0 0
        %4564 = vmatpush1.bf16.msra.mxu0 0
        %4565 = vmatprep.subr.bf16.mxu0 0
        %4566 = vmatpush1.bf16.msra.mxu0 0
        %4567 = vmatprep.subr.bf16.mxu0 0
        %4568 = vmatpush1.bf16.msra.mxu0 0
        %4569 = vmatprep.subr.bf16.mxu0 0
        %4570 = vmatpush1.bf16.msra.mxu0 0
        %4571 = vmatprep.subr.bf16.mxu0 0
        %4572 = vmatpush1.bf16.msra.mxu0 0
        %4573 = vmatprep.subr.bf16.mxu0 0
        %4574 = vmatpush1.bf16.msra.mxu0 0
        %4575 = vmatprep.subr.bf16.mxu0 0
        %4576 = vmatpush1.bf16.msra.mxu0 0
        %4577 = vmatprep.subr.bf16.mxu0 0
        %4578 = vmatpush1.bf16.msra.mxu0 0
        %4579 = vmatprep.subr.bf16.mxu0 0
        %4580 = vmatpush1.bf16.msra.mxu0 0
        %4581 = vmatprep.subr.bf16.mxu0 0
        %4582 = vmatpush1.bf16.msra.mxu0 0
        %4583 = vmatprep.subr.bf16.mxu0 0
        %4584 = vmatpush1.bf16.msra.mxu0 0
        %4585 = vmatprep.subr.bf16.mxu0 0
        %4586 = vmatpush1.bf16.msra.mxu0 0
        %4587 = vmatprep.subr.bf16.mxu0 0
        %4588 = vmatpush1.bf16.msra.mxu0 0
        %4589 = vmatprep.subr.bf16.mxu0 0
        %4590 = vmatpush1.bf16.msra.mxu0 0
        %4591 = vmatprep.mubr.bf16.mxu0 0
        %4592 = vmatmul.mubr.bf16.gmra.mrb[0].mxu0 %v4557
        %v4593 = vpop.f32.mrb[0].mxu0
        %v4594 = vadd.f32 0.0, %v4593
        %v4595 = vpop.f32.mrb[0].mxu0
        %v4596 = vpop.f32.mrb[0].mxu0
        %v4597 = vadd.f32 0.0, %v4596
        %v4598 = vpop.f32.mrb[0].mxu0
        %4599 = vdwg.mxu0
        %v4601 = vsel %vm3115, %v3837, 0
        %4603 = vmatprep.subr.bf16.mxu0 0
        %4604 = vmatpush1.bf16.msra.mxu0 %v1593
        %4605 = vmatprep.subr.bf16.mxu0 0
        %4606 = vmatpush1.bf16.msra.mxu0 0
        %4607 = vmatprep.subr.bf16.mxu0 0
        %4608 = vmatpush1.bf16.msra.mxu0 0
        %4609 = vmatprep.subr.bf16.mxu0 0
        %4610 = vmatpush1.bf16.msra.mxu0 0
        %4611 = vmatprep.subr.bf16.mxu0 0
        %4612 = vmatpush1.bf16.msra.mxu0 0
        %4613 = vmatprep.subr.bf16.mxu0 0
        %4614 = vmatpush1.bf16.msra.mxu0 0
        %4615 = vmatprep.subr.bf16.mxu0 0
        %4616 = vmatpush1.bf16.msra.mxu0 0
        %4617 = vmatprep.subr.bf16.mxu0 0
        %4618 = vmatpush1.bf16.msra.mxu0 0
        %4619 = vmatprep.subr.bf16.mxu0 0
        %4620 = vmatpush1.bf16.msra.mxu0 0
        %4621 = vmatprep.subr.bf16.mxu0 0
        %4622 = vmatpush1.bf16.msra.mxu0 0
        %4623 = vmatprep.subr.bf16.mxu0 0
        %4624 = vmatpush1.bf16.msra.mxu0 0
        %4625 = vmatprep.subr.bf16.mxu0 0
        %4626 = vmatpush1.bf16.msra.mxu0 0
        %4627 = vmatprep.subr.bf16.mxu0 0
        %4628 = vmatpush1.bf16.msra.mxu0 0
        %4629 = vmatprep.subr.bf16.mxu0 0
        %4630 = vmatpush1.bf16.msra.mxu0 0
        %4631 = vmatprep.subr.bf16.mxu0 0
        %4632 = vmatpush1.bf16.msra.mxu0 0
        %4633 = vmatprep.subr.bf16.mxu0 0
        %4634 = vmatpush1.bf16.msra.mxu0 0
        %4635 = vmatprep.mubr.bf16.mxu0 0
        %4636 = vmatmul.mubr.bf16.gmra.mrb[0].mxu0 %v4601
        %v4637 = vpop.f32.mrb[0].mxu0
        %v4638 = vadd.f32 0.0, %v4637
        %v4639 = vpop.f32.mrb[0].mxu0
        %v4640 = vpop.f32.mrb[0].mxu0
        %v4641 = vadd.f32 0.0, %v4640
        %v4642 = vpop.f32.mrb[0].mxu0
        %4643 = vdwg.mxu0
        %v4645 = vsel %vm3115, %v3838, 0
        %4647 = vmatprep.subr.bf16.mxu0 0
        %4648 = vmatpush1.bf16.msra.mxu0 %v1594
        %4649 = vmatprep.subr.bf16.mxu0 0
        %4650 = vmatpush1.bf16.msra.mxu0 0
        %4651 = vmatprep.subr.bf16.mxu0 0
        %4652 = vmatpush1.bf16.msra.mxu0 0
        %4653 = vmatprep.subr.bf16.mxu0 0
        %4654 = vmatpush1.bf16.msra.mxu0 0
        %4655 = vmatprep.subr.bf16.mxu0 0
        %4656 = vmatpush1.bf16.msra.mxu0 0
        %4657 = vmatprep.subr.bf16.mxu0 0
        %4658 = vmatpush1.bf16.msra.mxu0 0
        %4659 = vmatprep.subr.bf16.mxu0 0
        %4660 = vmatpush1.bf16.msra.mxu0 0
        %4661 = vmatprep.subr.bf16.mxu0 0
        %4662 = vmatpush1.bf16.msra.mxu0 0
        %4663 = vmatprep.subr.bf16.mxu0 0
        %4664 = vmatpush1.bf16.msra.mxu0 0
        %4665 = vmatprep.subr.bf16.mxu0 0
        %4666 = vmatpush1.bf16.msra.mxu0 0
        %4667 = vmatprep.subr.bf16.mxu0 0
        %4668 = vmatpush1.bf16.msra.mxu0 0
        %4669 = vmatprep.subr.bf16.mxu0 0
        %4670 = vmatpush1.bf16.msra.mxu0 0
        %4671 = vmatprep.subr.bf16.mxu0 0
        %4672 = vmatpush1.bf16.msra.mxu0 0
        %4673 = vmatprep.subr.bf16.mxu0 0
        %4674 = vmatpush1.bf16.msra.mxu0 0
        %4675 = vmatprep.subr.bf16.mxu0 0
        %4676 = vmatpush1.bf16.msra.mxu0 0
        %4677 = vmatprep.subr.bf16.mxu0 0
        %4678 = vmatpush1.bf16.msra.mxu0 0
        %4679 = vmatprep.mubr.bf16.mxu0 0
        %4680 = vmatmul.mubr.bf16.gmra.mrb[0].mxu0 %v4645
        %v4681 = vpop.f32.mrb[0].mxu0
        %v4682 = vadd.f32 0.0, %v4681
        %v4683 = vpop.f32.mrb[0].mxu0
        %v4684 = vpop.f32.mrb[0].mxu0
        %v4685 = vadd.f32 0.0, %v4684
        %v4686 = vpop.f32.mrb[0].mxu0
        %4687 = vdwg.mxu0
        %v4689 = vsel %vm3115, %v3839, 0
        %4691 = vmatprep.subr.bf16.mxu0 0
        %4692 = vmatpush1.bf16.msra.mxu0 %v1595
        %4693 = vmatprep.subr.bf16.mxu0 0
        %4694 = vmatpush1.bf16.msra.mxu0 0
        %4695 = vmatprep.subr.bf16.mxu0 0
        %4696 = vmatpush1.bf16.msra.mxu0 0
        %4697 = vmatprep.subr.bf16.mxu0 0
        %4698 = vmatpush1.bf16.msra.mxu0 0
        %4699 = vmatprep.subr.bf16.mxu0 0
        %4700 = vmatpush1.bf16.msra.mxu0 0
        %4701 = vmatprep.subr.bf16.mxu0 0
        %4702 = vmatpush1.bf16.msra.mxu0 0
        %4703 = vmatprep.subr.bf16.mxu0 0
        %4704 = vmatpush1.bf16.msra.mxu0 0
        %4705 = vmatprep.subr.bf16.mxu0 0
        %4706 = vmatpush1.bf16.msra.mxu0 0
        %4707 = vmatprep.subr.bf16.mxu0 0
        %4708 = vmatpush1.bf16.msra.mxu0 0
        %4709 = vmatprep.subr.bf16.mxu0 0
        %4710 = vmatpush1.bf16.msra.mxu0 0
        %4711 = vmatprep.subr.bf16.mxu0 0
        %4712 = vmatpush1.bf16.msra.mxu0 0
        %4713 = vmatprep.subr.bf16.mxu0 0
        %4714 = vmatpush1.bf16.msra.mxu0 0
        %4715 = vmatprep.subr.bf16.mxu0 0
        %4716 = vmatpush1.bf16.msra.mxu0 0
        %4717 = vmatprep.subr.bf16.mxu0 0
        %4718 = vmatpush1.bf16.msra.mxu0 0
        %4719 = vmatprep.subr.bf16.mxu0 0
        %4720 = vmatpush1.bf16.msra.mxu0 0
        %4721 = vmatprep.subr.bf16.mxu0 0
        %4722 = vmatpush1.bf16.msra.mxu0 0
        %4723 = vmatprep.mubr.bf16.mxu0 0
        %4724 = vmatmul.mubr.bf16.gmra.mrb[0].mxu0 %v4689
        %v4725 = vpop.f32.mrb[0].mxu0
        %v4726 = vadd.f32 0.0, %v4725
        %v4727 = vpop.f32.mrb[0].mxu0
        %v4728 = vpop.f32.mrb[0].mxu0
        %v4729 = vadd.f32 0.0, %v4728
        %v4730 = vpop.f32.mrb[0].mxu0
        %4731 = vdwg.mxu0
        %v4733 = vsel %vm3115, %v3840, 0
        %4735 = vmatprep.subr.bf16.mxu0 0
        %4736 = vmatpush1.bf16.msra.mxu0 %v1596
        %4737 = vmatprep.subr.bf16.mxu0 0
        %4738 = vmatpush1.bf16.msra.mxu0 0
        %4739 = vmatprep.subr.bf16.mxu0 0
        %4740 = vmatpush1.bf16.msra.mxu0 0
        %4741 = vmatprep.subr.bf16.mxu0 0
        %4742 = vmatpush1.bf16.msra.mxu0 0
        %4743 = vmatprep.subr.bf16.mxu0 0
        %4744 = vmatpush1.bf16.msra.mxu0 0
        %4745 = vmatprep.subr.bf16.mxu0 0
        %4746 = vmatpush1.bf16.msra.mxu0 0
        %4747 = vmatprep.subr.bf16.mxu0 0
        %4748 = vmatpush1.bf16.msra.mxu0 0
        %4749 = vmatprep.subr.bf16.mxu0 0
        %4750 = vmatpush1.bf16.msra.mxu0 0
        %4751 = vmatprep.subr.bf16.mxu0 0
        %4752 = vmatpush1.bf16.msra.mxu0 0
        %4753 = vmatprep.subr.bf16.mxu0 0
        %4754 = vmatpush1.bf16.msra.mxu0 0
        %4755 = vmatprep.subr.bf16.mxu0 0
        %4756 = vmatpush1.bf16.msra.mxu0 0
        %4757 = vmatprep.subr.bf16.mxu0 0
        %4758 = vmatpush1.bf16.msra.mxu0 0
        %4759 = vmatprep.subr.bf16.mxu0 0
        %4760 = vmatpush1.bf16.msra.mxu0 0
        %4761 = vmatprep.subr.bf16.mxu0 0
        %4762 = vmatpush1.bf16.msra.mxu0 0
        %4763 = vmatprep.subr.bf16.mxu0 0
        %4764 = vmatpush1.bf16.msra.mxu0 0
        %4765 = vmatprep.subr.bf16.mxu0 0
        %4766 = vmatpush1.bf16.msra.mxu0 0
        %4767 = vmatprep.mubr.bf16.mxu0 0
        %4768 = vmatmul.mubr.bf16.gmra.mrb[0].mxu0 %v4733
        %v4769 = vpop.f32.mrb[0].mxu0
        %v4770 = vadd.f32 0.0, %v4769
        %v4771 = vpop.f32.mrb[0].mxu0
        %v4772 = vpop.f32.mrb[0].mxu0
        %v4773 = vadd.f32 0.0, %v4772
        %v4774 = vpop.f32.mrb[0].mxu0
        %4775 = vdwg.mxu0
        %v4777 = vsel %vm3115, %v3841, 0
        %4779 = vmatprep.subr.bf16.mxu0 0
        %4780 = vmatpush1.bf16.msra.mxu0 %v1597
        %4781 = vmatprep.subr.bf16.mxu0 0
        %4782 = vmatpush1.bf16.msra.mxu0 0
        %4783 = vmatprep.subr.bf16.mxu0 0
        %4784 = vmatpush1.bf16.msra.mxu0 0
        %4785 = vmatprep.subr.bf16.mxu0 0
        %4786 = vmatpush1.bf16.msra.mxu0 0
        %4787 = vmatprep.subr.bf16.mxu0 0
        %4788 = vmatpush1.bf16.msra.mxu0 0
        %4789 = vmatprep.subr.bf16.mxu0 0
        %4790 = vmatpush1.bf16.msra.mxu0 0
        %4791 = vmatprep.subr.bf16.mxu0 0
        %4792 = vmatpush1.bf16.msra.mxu0 0
        %4793 = vmatprep.subr.bf16.mxu0 0
        %4794 = vmatpush1.bf16.msra.mxu0 0
        %4795 = vmatprep.subr.bf16.mxu0 0
        %4796 = vmatpush1.bf16.msra.mxu0 0
        %4797 = vmatprep.subr.bf16.mxu0 0
        %4798 = vmatpush1.bf16.msra.mxu0 0
        %4799 = vmatprep.subr.bf16.mxu0 0
        %4800 = vmatpush1.bf16.msra.mxu0 0
        %4801 = vmatprep.subr.bf16.mxu0 0
        %4802 = vmatpush1.bf16.msra.mxu0 0
        %4803 = vmatprep.subr.bf16.mxu0 0
        %4804 = vmatpush1.bf16.msra.mxu0 0
        %4805 = vmatprep.subr.bf16.mxu0 0
        %4806 = vmatpush1.bf16.msra.mxu0 0
        %4807 = vmatprep.subr.bf16.mxu0 0
        %4808 = vmatpush1.bf16.msra.mxu0 0
        %4809 = vmatprep.subr.bf16.mxu0 0
        %4810 = vmatpush1.bf16.msra.mxu0 0
        %4811 = vmatprep.mubr.bf16.mxu0 0
        %4812 = vmatmul.mubr.bf16.gmra.mrb[0].mxu0 %v4777
        %v4813 = vpop.f32.mrb[0].mxu0
        %v4814 = vadd.f32 0.0, %v4813
        %v4815 = vpop.f32.mrb[0].mxu0
        %v4816 = vpop.f32.mrb[0].mxu0
        %v4817 = vadd.f32 0.0, %v4816
        %v4818 = vpop.f32.mrb[0].mxu0
        %4819 = vdwg.mxu0
        %v4821 = vsel %vm3115, %v3842, 0
        %4823 = vmatprep.subr.bf16.mxu0 0
        %4824 = vmatpush1.bf16.msra.mxu0 %v1598
        %4825 = vmatprep.subr.bf16.mxu0 0
        %4826 = vmatpush1.bf16.msra.mxu0 0
        %4827 = vmatprep.subr.bf16.mxu0 0
        %4828 = vmatpush1.bf16.msra.mxu0 0
        %4829 = vmatprep.subr.bf16.mxu0 0
        %4830 = vmatpush1.bf16.msra.mxu0 0
        %4831 = vmatprep.subr.bf16.mxu0 0
        %4832 = vmatpush1.bf16.msra.mxu0 0
        %4833 = vmatprep.subr.bf16.mxu0 0
        %4834 = vmatpush1.bf16.msra.mxu0 0
        %4835 = vmatprep.subr.bf16.mxu0 0
        %4836 = vmatpush1.bf16.msra.mxu0 0
        %4837 = vmatprep.subr.bf16.mxu0 0
        %4838 = vmatpush1.bf16.msra.mxu0 0
        %4839 = vmatprep.subr.bf16.mxu0 0
        %4840 = vmatpush1.bf16.msra.mxu0 0
        %4841 = vmatprep.subr.bf16.mxu0 0
        %4842 = vmatpush1.bf16.msra.mxu0 0
        %4843 = vmatprep.subr.bf16.mxu0 0
        %4844 = vmatpush1.bf16.msra.mxu0 0
        %4845 = vmatprep.subr.bf16.mxu0 0
        %4846 = vmatpush1.bf16.msra.mxu0 0
        %4847 = vmatprep.subr.bf16.mxu0 0
        %4848 = vmatpush1.bf16.msra.mxu0 0
        %4849 = vmatprep.subr.bf16.mxu0 0
        %4850 = vmatpush1.bf16.msra.mxu0 0
        %4851 = vmatprep.subr.bf16.mxu0 0
        %4852 = vmatpush1.bf16.msra.mxu0 0
        %4853 = vmatprep.subr.bf16.mxu0 0
        %4854 = vmatpush1.bf16.msra.mxu0 0
        %4855 = vmatprep.mubr.bf16.mxu0 0
        %4856 = vmatmul.mubr.bf16.gmra.mrb[0].mxu0 %v4821
        %v4857 = vpop.f32.mrb[0].mxu0
        %v4858 = vadd.f32 0.0, %v4857
        %v4859 = vpop.f32.mrb[0].mxu0
        %v4860 = vpop.f32.mrb[0].mxu0
        %v4861 = vadd.f32 0.0, %v4860
        %v4862 = vpop.f32.mrb[0].mxu0
        %4863 = vdwg.mxu0
        %v4865 = vsel %vm3115, %v3843, 0
        %4867 = vmatprep.subr.bf16.mxu0 0
        %4868 = vmatpush1.bf16.msra.mxu0 %v1599
        %4869 = vmatprep.subr.bf16.mxu0 0
        %4870 = vmatpush1.bf16.msra.mxu0 0
        %4871 = vmatprep.subr.bf16.mxu0 0
        %4872 = vmatpush1.bf16.msra.mxu0 0
        %4873 = vmatprep.subr.bf16.mxu0 0
        %4874 = vmatpush1.bf16.msra.mxu0 0
        %4875 = vmatprep.subr.bf16.mxu0 0
        %4876 = vmatpush1.bf16.msra.mxu0 0
        %4877 = vmatprep.subr.bf16.mxu0 0
        %4878 = vmatpush1.bf16.msra.mxu0 0
        %4879 = vmatprep.subr.bf16.mxu0 0
        %4880 = vmatpush1.bf16.msra.mxu0 0
        %4881 = vmatprep.subr.bf16.mxu0 0
        %4882 = vmatpush1.bf16.msra.mxu0 0
        %4883 = vmatprep.subr.bf16.mxu0 0
        %4884 = vmatpush1.bf16.msra.mxu0 0
        %4885 = vmatprep.subr.bf16.mxu0 0
        %4886 = vmatpush1.bf16.msra.mxu0 0
        %4887 = vmatprep.subr.bf16.mxu0 0
        %4888 = vmatpush1.bf16.msra.mxu0 0
        %4889 = vmatprep.subr.bf16.mxu0 0
        %4890 = vmatpush1.bf16.msra.mxu0 0
        %4891 = vmatprep.subr.bf16.mxu0 0
        %4892 = vmatpush1.bf16.msra.mxu0 0
        %4893 = vmatprep.subr.bf16.mxu0 0
        %4894 = vmatpush1.bf16.msra.mxu0 0
        %4895 = vmatprep.subr.bf16.mxu0 0
        %4896 = vmatpush1.bf16.msra.mxu0 0
        %4897 = vmatprep.subr.bf16.mxu0 0
        %4898 = vmatpush1.bf16.msra.mxu0 0
        %4899 = vmatprep.mubr.bf16.mxu0 0
        %4900 = vmatmul.mubr.bf16.gmra.mrb[0].mxu0 %v4865
        %v4901 = vpop.f32.mrb[0].mxu0
        %v4902 = vadd.f32 0.0, %v4901
        %v4903 = vpop.f32.mrb[0].mxu0
        %v4904 = vpop.f32.mrb[0].mxu0
        %v4905 = vadd.f32 0.0, %v4904
        %v4906 = vpop.f32.mrb[0].mxu0
        %4907 = vdwg.mxu0
        %v4909 = vsel %vm3115, %v3844, 0
        %4911 = vmatprep.subr.bf16.mxu0 0
        %4912 = vmatpush1.bf16.msra.mxu0 %v1600
        %4913 = vmatprep.subr.bf16.mxu0 0
        %4914 = vmatpush1.bf16.msra.mxu0 0
        %4915 = vmatprep.subr.bf16.mxu0 0
        %4916 = vmatpush1.bf16.msra.mxu0 0
        %4917 = vmatprep.subr.bf16.mxu0 0
        %4918 = vmatpush1.bf16.msra.mxu0 0
        %4919 = vmatprep.subr.bf16.mxu0 0
        %4920 = vmatpush1.bf16.msra.mxu0 0
        %4921 = vmatprep.subr.bf16.mxu0 0
        %4922 = vmatpush1.bf16.msra.mxu0 0
        %4923 = vmatprep.subr.bf16.mxu0 0
        %4924 = vmatpush1.bf16.msra.mxu0 0
        %4925 = vmatprep.subr.bf16.mxu0 0
        %4926 = vmatpush1.bf16.msra.mxu0 0
        %4927 = vmatprep.subr.bf16.mxu0 0
        %4928 = vmatpush1.bf16.msra.mxu0 0
        %4929 = vmatprep.subr.bf16.mxu0 0
        %4930 = vmatpush1.bf16.msra.mxu0 0
        %4931 = vmatprep.subr.bf16.mxu0 0
        %4932 = vmatpush1.bf16.msra.mxu0 0
        %4933 = vmatprep.subr.bf16.mxu0 0
        %4934 = vmatpush1.bf16.msra.mxu0 0
        %4935 = vmatprep.subr.bf16.mxu0 0
        %4936 = vmatpush1.bf16.msra.mxu0 0
        %4937 = vmatprep.subr.bf16.mxu0 0
        %4938 = vmatpush1.bf16.msra.mxu0 0
        %4939 = vmatprep.subr.bf16.mxu0 0
        %4940 = vmatpush1.bf16.msra.mxu0 0
        %4941 = vmatprep.subr.bf16.mxu0 0
        %4942 = vmatpush1.bf16.msra.mxu0 0
        %4943 = vmatprep.mubr.bf16.mxu0 0
        %4944 = vmatmul.mubr.bf16.gmra.mrb[0].mxu0 %v4909
        %v4945 = vpop.f32.mrb[0].mxu0
        %v4946 = vadd.f32 0.0, %v4945
        %v4947 = vpop.f32.mrb[0].mxu0
        %v4948 = vpop.f32.mrb[0].mxu0
        %v4949 = vadd.f32 0.0, %v4948
        %v4950 = vpop.f32.mrb[0].mxu0
        %4951 = vdwg.mxu0
        %v4953 = vsel %vm3115, %v3845, 0
        %4955 = vmatprep.subr.bf16.mxu0 0
        %4956 = vmatpush1.bf16.msra.mxu0 %v1601
        %4957 = vmatprep.subr.bf16.mxu0 0
        %4958 = vmatpush1.bf16.msra.mxu0 0
        %4959 = vmatprep.subr.bf16.mxu0 0
        %4960 = vmatpush1.bf16.msra.mxu0 0
        %4961 = vmatprep.subr.bf16.mxu0 0
        %4962 = vmatpush1.bf16.msra.mxu0 0
        %4963 = vmatprep.subr.bf16.mxu0 0
        %4964 = vmatpush1.bf16.msra.mxu0 0
        %4965 = vmatprep.subr.bf16.mxu0 0
        %4966 = vmatpush1.bf16.msra.mxu0 0
        %4967 = vmatprep.subr.bf16.mxu0 0
        %4968 = vmatpush1.bf16.msra.mxu0 0
        %4969 = vmatprep.subr.bf16.mxu0 0
        %4970 = vmatpush1.bf16.msra.mxu0 0
        %4971 = vmatprep.subr.bf16.mxu0 0
        %4972 = vmatpush1.bf16.msra.mxu0 0
        %4973 = vmatprep.subr.bf16.mxu0 0
        %4974 = vmatpush1.bf16.msra.mxu0 0
        %4975 = vmatprep.subr.bf16.mxu0 0
        %4976 = vmatpush1.bf16.msra.mxu0 0
        %4977 = vmatprep.subr.bf16.mxu0 0
        %4978 = vmatpush1.bf16.msra.mxu0 0
        %4979 = vmatprep.subr.bf16.mxu0 0
        %4980 = vmatpush1.bf16.msra.mxu0 0
        %4981 = vmatprep.subr.bf16.mxu0 0
        %4982 = vmatpush1.bf16.msra.mxu0 0
        %4983 = vmatprep.subr.bf16.mxu0 0
        %4984 = vmatpush1.bf16.msra.mxu0 0
        %4985 = vmatprep.subr.bf16.mxu0 0
        %4986 = vmatpush1.bf16.msra.mxu0 0
        %4987 = vmatprep.mubr.bf16.mxu0 0
        %4988 = vmatmul.mubr.bf16.gmra.mrb[0].mxu0 %v4953
        %v4989 = vpop.f32.mrb[0].mxu0
        %v4990 = vadd.f32 0.0, %v4989
        %v4991 = vpop.f32.mrb[0].mxu0
        %v4992 = vpop.f32.mrb[0].mxu0
        %v4993 = vadd.f32 0.0, %v4992
        %v4994 = vpop.f32.mrb[0].mxu0
        %4995 = vdwg.mxu0
        %v4997 = vsel %vm3115, %v3846, 0
        %4999 = vmatprep.subr.bf16.mxu0 0
        %5000 = vmatpush1.bf16.msra.mxu0 %v1602
        %5001 = vmatprep.subr.bf16.mxu0 0
        %5002 = vmatpush1.bf16.msra.mxu0 0
        %5003 = vmatprep.subr.bf16.mxu0 0
        %5004 = vmatpush1.bf16.msra.mxu0 0
        %5005 = vmatprep.subr.bf16.mxu0 0
        %5006 = vmatpush1.bf16.msra.mxu0 0
        %5007 = vmatprep.subr.bf16.mxu0 0
        %5008 = vmatpush1.bf16.msra.mxu0 0
        %5009 = vmatprep.subr.bf16.mxu0 0
        %5010 = vmatpush1.bf16.msra.mxu0 0
        %5011 = vmatprep.subr.bf16.mxu0 0
        %5012 = vmatpush1.bf16.msra.mxu0 0
        %5013 = vmatprep.subr.bf16.mxu0 0
        %5014 = vmatpush1.bf16.msra.mxu0 0
        %5015 = vmatprep.subr.bf16.mxu0 0
        %5016 = vmatpush1.bf16.msra.mxu0 0
        %5017 = vmatprep.subr.bf16.mxu0 0
        %5018 = vmatpush1.bf16.msra.mxu0 0
        %5019 = vmatprep.subr.bf16.mxu0 0
        %5020 = vmatpush1.bf16.msra.mxu0 0
        %5021 = vmatprep.subr.bf16.mxu0 0
        %5022 = vmatpush1.bf16.msra.mxu0 0
        %5023 = vmatprep.subr.bf16.mxu0 0
        %5024 = vmatpush1.bf16.msra.mxu0 0
        %5025 = vmatprep.subr.bf16.mxu0 0
        %5026 = vmatpush1.bf16.msra.mxu0 0
        %5027 = vmatprep.subr.bf16.mxu0 0
        %5028 = vmatpush1.bf16.msra.mxu0 0
        %5029 = vmatprep.subr.bf16.mxu0 0
        %5030 = vmatpush1.bf16.msra.mxu0 0
        %5031 = vmatprep.mubr.bf16.mxu0 0
        %5032 = vmatmul.mubr.bf16.gmra.mrb[0].mxu0 %v4997
        %v5033 = vpop.f32.mrb[0].mxu0
        %v5034 = vadd.f32 0.0, %v5033
        %v5035 = vpop.f32.mrb[0].mxu0
        %v5036 = vpop.f32.mrb[0].mxu0
        %v5037 = vadd.f32 0.0, %v5036
        %v5038 = vpop.f32.mrb[0].mxu0
        %5039 = vdwg.mxu0
        %v5041 = vsel %vm3115, %v3847, 0
        %5043 = vmatprep.subr.bf16.mxu0 0
        %5044 = vmatpush1.bf16.msra.mxu0 %v1603
        %5045 = vmatprep.subr.bf16.mxu0 0
        %5046 = vmatpush1.bf16.msra.mxu0 0
        %5047 = vmatprep.subr.bf16.mxu0 0
        %5048 = vmatpush1.bf16.msra.mxu0 0
        %5049 = vmatprep.subr.bf16.mxu0 0
        %5050 = vmatpush1.bf16.msra.mxu0 0
        %5051 = vmatprep.subr.bf16.mxu0 0
        %5052 = vmatpush1.bf16.msra.mxu0 0
        %5053 = vmatprep.subr.bf16.mxu0 0
        %5054 = vmatpush1.bf16.msra.mxu0 0
        %5055 = vmatprep.subr.bf16.mxu0 0
        %5056 = vmatpush1.bf16.msra.mxu0 0
        %5057 = vmatprep.subr.bf16.mxu0 0
        %5058 = vmatpush1.bf16.msra.mxu0 0
        %5059 = vmatprep.subr.bf16.mxu0 0
        %5060 = vmatpush1.bf16.msra.mxu0 0
        %5061 = vmatprep.subr.bf16.mxu0 0
        %5062 = vmatpush1.bf16.msra.mxu0 0
        %5063 = vmatprep.subr.bf16.mxu0 0
        %5064 = vmatpush1.bf16.msra.mxu0 0
        %5065 = vmatprep.subr.bf16.mxu0 0
        %5066 = vmatpush1.bf16.msra.mxu0 0
        %5067 = vmatprep.subr.bf16.mxu0 0
        %5068 = vmatpush1.bf16.msra.mxu0 0
        %5069 = vmatprep.subr.bf16.mxu0 0
        %5070 = vmatpush1.bf16.msra.mxu0 0
        %5071 = vmatprep.subr.bf16.mxu0 0
        %5072 = vmatpush1.bf16.msra.mxu0 0
        %5073 = vmatprep.subr.bf16.mxu0 0
        %5074 = vmatpush1.bf16.msra.mxu0 0
        %5075 = vmatprep.mubr.bf16.mxu0 0
        %5076 = vmatmul.mubr.bf16.gmra.mrb[0].mxu0 %v5041
        %v5077 = vpop.f32.mrb[0].mxu0
        %v5078 = vadd.f32 0.0, %v5077
        %v5079 = vpop.f32.mrb[0].mxu0
        %v5080 = vpop.f32.mrb[0].mxu0
        %v5081 = vadd.f32 0.0, %v5080
        %v5082 = vpop.f32.mrb[0].mxu0
        %5083 = vdwg.mxu0
        %v5085 = vsel %vm3115, %v3848, 0
        %5087 = vmatprep.subr.bf16.mxu0 0
        %5088 = vmatpush1.bf16.msra.mxu0 %v1604
        %5089 = vmatprep.subr.bf16.mxu0 0
        %5090 = vmatpush1.bf16.msra.mxu0 0
        %5091 = vmatprep.subr.bf16.mxu0 0
        %5092 = vmatpush1.bf16.msra.mxu0 0
        %5093 = vmatprep.subr.bf16.mxu0 0
        %5094 = vmatpush1.bf16.msra.mxu0 0
        %5095 = vmatprep.subr.bf16.mxu0 0
        %5096 = vmatpush1.bf16.msra.mxu0 0
        %5097 = vmatprep.subr.bf16.mxu0 0
        %5098 = vmatpush1.bf16.msra.mxu0 0
        %5099 = vmatprep.subr.bf16.mxu0 0
        %5100 = vmatpush1.bf16.msra.mxu0 0
        %5101 = vmatprep.subr.bf16.mxu0 0
        %5102 = vmatpush1.bf16.msra.mxu0 0
        %5103 = vmatprep.subr.bf16.mxu0 0
        %5104 = vmatpush1.bf16.msra.mxu0 0
        %5105 = vmatprep.subr.bf16.mxu0 0
        %5106 = vmatpush1.bf16.msra.mxu0 0
        %5107 = vmatprep.subr.bf16.mxu0 0
        %5108 = vmatpush1.bf16.msra.mxu0 0
        %5109 = vmatprep.subr.bf16.mxu0 0
        %5110 = vmatpush1.bf16.msra.mxu0 0
        %5111 = vmatprep.subr.bf16.mxu0 0
        %5112 = vmatpush1.bf16.msra.mxu0 0
        %5113 = vmatprep.subr.bf16.mxu0 0
        %5114 = vmatpush1.bf16.msra.mxu0 0
        %5115 = vmatprep.subr.bf16.mxu0 0
        %5116 = vmatpush1.bf16.msra.mxu0 0
        %5117 = vmatprep.subr.bf16.mxu0 0
        %5118 = vmatpush1.bf16.msra.mxu0 0
        %5119 = vmatprep.mubr.bf16.mxu0 0
        %5120 = vmatmul.mubr.bf16.gmra.mrb[0].mxu0 %v5085
        %v5121 = vpop.f32.mrb[0].mxu0
        %v5122 = vadd.f32 0.0, %v5121
        %v5123 = vpop.f32.mrb[0].mxu0
        %v5124 = vpop.f32.mrb[0].mxu0
        %v5125 = vadd.f32 0.0, %v5124
        %v5126 = vpop.f32.mrb[0].mxu0
        %5127 = vdwg.mxu0
        %v5129 = vsel %vm3115, %v3849, 0
        %5131 = vmatprep.subr.bf16.mxu0 0
        %5132 = vmatpush1.bf16.msra.mxu0 %v1605
        %5133 = vmatprep.subr.bf16.mxu0 0
        %5134 = vmatpush1.bf16.msra.mxu0 0
        %5135 = vmatprep.subr.bf16.mxu0 0
        %5136 = vmatpush1.bf16.msra.mxu0 0
        %5137 = vmatprep.subr.bf16.mxu0 0
        %5138 = vmatpush1.bf16.msra.mxu0 0
        %5139 = vmatprep.subr.bf16.mxu0 0
        %5140 = vmatpush1.bf16.msra.mxu0 0
        %5141 = vmatprep.subr.bf16.mxu0 0
        %5142 = vmatpush1.bf16.msra.mxu0 0
        %5143 = vmatprep.subr.bf16.mxu0 0
        %5144 = vmatpush1.bf16.msra.mxu0 0
        %5145 = vmatprep.subr.bf16.mxu0 0
        %5146 = vmatpush1.bf16.msra.mxu0 0
        %5147 = vmatprep.subr.bf16.mxu0 0
        %5148 = vmatpush1.bf16.msra.mxu0 0
        %5149 = vmatprep.subr.bf16.mxu0 0
        %5150 = vmatpush1.bf16.msra.mxu0 0
        %5151 = vmatprep.subr.bf16.mxu0 0
        %5152 = vmatpush1.bf16.msra.mxu0 0
        %5153 = vmatprep.subr.bf16.mxu0 0
        %5154 = vmatpush1.bf16.msra.mxu0 0
        %5155 = vmatprep.subr.bf16.mxu0 0
        %5156 = vmatpush1.bf16.msra.mxu0 0
        %5157 = vmatprep.subr.bf16.mxu0 0
        %5158 = vmatpush1.bf16.msra.mxu0 0
        %5159 = vmatprep.subr.bf16.mxu0 0
        %5160 = vmatpush1.bf16.msra.mxu0 0
        %5161 = vmatprep.subr.bf16.mxu0 0
        %5162 = vmatpush1.bf16.msra.mxu0 0
        %5163 = vmatprep.mubr.bf16.mxu0 0
        %5164 = vmatmul.mubr.bf16.gmra.mrb[0].mxu0 %v5129
        %v5165 = vpop.f32.mrb[0].mxu0
        %v5166 = vadd.f32 0.0, %v5165
        %v5167 = vpop.f32.mrb[0].mxu0
        %v5168 = vpop.f32.mrb[0].mxu0
        %v5169 = vadd.f32 0.0, %v5168
        %v5170 = vpop.f32.mrb[0].mxu0
        %5171 = vdwg.mxu0
        %v5173 = vsel %vm3115, %v3850, 0
        %5175 = vmatprep.subr.bf16.mxu0 0
        %5176 = vmatpush1.bf16.msra.mxu0 %v1606
        %5177 = vmatprep.subr.bf16.mxu0 0
        %5178 = vmatpush1.bf16.msra.mxu0 0
        %5179 = vmatprep.subr.bf16.mxu0 0
        %5180 = vmatpush1.bf16.msra.mxu0 0
        %5181 = vmatprep.subr.bf16.mxu0 0
        %5182 = vmatpush1.bf16.msra.mxu0 0
        %5183 = vmatprep.subr.bf16.mxu0 0
        %5184 = vmatpush1.bf16.msra.mxu0 0
        %5185 = vmatprep.subr.bf16.mxu0 0
        %5186 = vmatpush1.bf16.msra.mxu0 0
        %5187 = vmatprep.subr.bf16.mxu0 0
        %5188 = vmatpush1.bf16.msra.mxu0 0
        %5189 = vmatprep.subr.bf16.mxu0 0
        %5190 = vmatpush1.bf16.msra.mxu0 0
        %5191 = vmatprep.subr.bf16.mxu0 0
        %5192 = vmatpush1.bf16.msra.mxu0 0
        %5193 = vmatprep.subr.bf16.mxu0 0
        %5194 = vmatpush1.bf16.msra.mxu0 0
        %5195 = vmatprep.subr.bf16.mxu0 0
        %5196 = vmatpush1.bf16.msra.mxu0 0
        %5197 = vmatprep.subr.bf16.mxu0 0
        %5198 = vmatpush1.bf16.msra.mxu0 0
        %5199 = vmatprep.subr.bf16.mxu0 0
        %5200 = vmatpush1.bf16.msra.mxu0 0
        %5201 = vmatprep.subr.bf16.mxu0 0
        %5202 = vmatpush1.bf16.msra.mxu0 0
        %5203 = vmatprep.subr.bf16.mxu0 0
        %5204 = vmatpush1.bf16.msra.mxu0 0
        %5205 = vmatprep.subr.bf16.mxu0 0
        %5206 = vmatpush1.bf16.msra.mxu0 0
        %5207 = vmatprep.mubr.bf16.mxu0 0
        %5208 = vmatmul.mubr.bf16.gmra.mrb[0].mxu0 %v5173
        %v5209 = vpop.f32.mrb[0].mxu0
        %v5210 = vadd.f32 0.0, %v5209
        %v5211 = vpop.f32.mrb[0].mxu0
        %v5212 = vpop.f32.mrb[0].mxu0
        %v5213 = vadd.f32 0.0, %v5212
        %v5214 = vpop.f32.mrb[0].mxu0
        %5215 = vdwg.mxu0
        %v5217 = vsel %vm3115, %v3851, 0
        %5219 = vmatprep.subr.bf16.mxu0 0
        %5220 = vmatpush1.bf16.msra.mxu0 %v1607
        %5221 = vmatprep.subr.bf16.mxu0 0
        %5222 = vmatpush1.bf16.msra.mxu0 0
        %5223 = vmatprep.subr.bf16.mxu0 0
        %5224 = vmatpush1.bf16.msra.mxu0 0
        %5225 = vmatprep.subr.bf16.mxu0 0
        %5226 = vmatpush1.bf16.msra.mxu0 0
        %5227 = vmatprep.subr.bf16.mxu0 0
        %5228 = vmatpush1.bf16.msra.mxu0 0
        %5229 = vmatprep.subr.bf16.mxu0 0
        %5230 = vmatpush1.bf16.msra.mxu0 0
        %5231 = vmatprep.subr.bf16.mxu0 0
        %5232 = vmatpush1.bf16.msra.mxu0 0
        %5233 = vmatprep.subr.bf16.mxu0 0
        %5234 = vmatpush1.bf16.msra.mxu0 0
        %5235 = vmatprep.subr.bf16.mxu0 0
        %5236 = vmatpush1.bf16.msra.mxu0 0
        %5237 = vmatprep.subr.bf16.mxu0 0
        %5238 = vmatpush1.bf16.msra.mxu0 0
        %5239 = vmatprep.subr.bf16.mxu0 0
        %5240 = vmatpush1.bf16.msra.mxu0 0
        %5241 = vmatprep.subr.bf16.mxu0 0
        %5242 = vmatpush1.bf16.msra.mxu0 0
        %5243 = vmatprep.subr.bf16.mxu0 0
        %5244 = vmatpush1.bf16.msra.mxu0 0
        %5245 = vmatprep.subr.bf16.mxu0 0
        %5246 = vmatpush1.bf16.msra.mxu0 0
        %5247 = vmatprep.subr.bf16.mxu0 0
        %5248 = vmatpush1.bf16.msra.mxu0 0
        %5249 = vmatprep.subr.bf16.mxu0 0
        %5250 = vmatpush1.bf16.msra.mxu0 0
        %5251 = vmatprep.mubr.bf16.mxu0 0
        %5252 = vmatmul.mubr.bf16.gmra.mrb[0].mxu0 %v5217
        %v5253 = vpop.f32.mrb[0].mxu0
        %v5254 = vadd.f32 0.0, %v5253
        %v5255 = vpop.f32.mrb[0].mxu0
        %v5256 = vpop.f32.mrb[0].mxu0
        %v5257 = vadd.f32 0.0, %v5256
        %v5258 = vpop.f32.mrb[0].mxu0
        %5259 = vdwg.mxu0
        %5276 = vrot.lane.b32.xlu0 %v4242, 8
        %v5277 = vpop.permute.xlu0 %5276
        %5278 = vrot.lane.b32.xlu0 %v4245, 8
        %v5279 = vpop.permute.xlu0 %5278
        %5280 = vrot.lane.b32.xlu0 %v4286, 8
        %v5281 = vpop.permute.xlu0 %5280
        %5282 = vrot.lane.b32.xlu0 %v4289, 8
        %v5283 = vpop.permute.xlu0 %5282
        %5284 = vrot.lane.b32.xlu0 %v4330, 8
        %v5285 = vpop.permute.xlu0 %5284
        %5286 = vrot.lane.b32.xlu0 %v4333, 8
        %v5287 = vpop.permute.xlu0 %5286
        %5288 = vrot.lane.b32.xlu0 %v4374, 8
        %v5289 = vpop.permute.xlu0 %5288
        %5290 = vrot.lane.b32.xlu0 %v4377, 8
        %v5291 = vpop.permute.xlu0 %5290
        %5292 = vrot.lane.b32.xlu0 %v4418, 8
        %v5293 = vpop.permute.xlu0 %5292
        %5294 = vrot.lane.b32.xlu0 %v4421, 8
        %v5295 = vpop.permute.xlu0 %5294
        %5296 = vrot.lane.b32.xlu0 %v4462, 8
        %v5297 = vpop.permute.xlu0 %5296
        %5298 = vrot.lane.b32.xlu0 %v4465, 8
        %v5299 = vpop.permute.xlu0 %5298
        %5300 = vrot.lane.b32.xlu0 %v4506, 8
        %v5301 = vpop.permute.xlu0 %5300
        %5302 = vrot.lane.b32.xlu0 %v4509, 8
        %v5303 = vpop.permute.xlu0 %5302
        %5304 = vrot.lane.b32.xlu0 %v4550, 8
        %v5305 = vpop.permute.xlu0 %5304
        %5306 = vrot.lane.b32.xlu0 %v4553, 8
        %v5307 = vpop.permute.xlu0 %5306
        %5340 = vrot.lane.b32.xlu0 %v4594, 16
        %v5341 = vpop.permute.xlu0 %5340
        %5342 = vrot.lane.b32.xlu0 %v4597, 16
        %v5343 = vpop.permute.xlu0 %5342
        %5344 = vrot.lane.b32.xlu0 %v4638, 16
        %v5345 = vpop.permute.xlu0 %5344
        %5346 = vrot.lane.b32.xlu0 %v4641, 16
        %v5347 = vpop.permute.xlu0 %5346
        %5348 = vrot.lane.b32.xlu0 %v4682, 16
        %v5349 = vpop.permute.xlu0 %5348
        %5350 = vrot.lane.b32.xlu0 %v4685, 16
        %v5351 = vpop.permute.xlu0 %5350
        %5352 = vrot.lane.b32.xlu0 %v4726, 16
        %v5353 = vpop.permute.xlu0 %5352
        %5354 = vrot.lane.b32.xlu0 %v4729, 16
        %v5355 = vpop.permute.xlu0 %5354
        %5356 = vrot.lane.b32.xlu0 %v4770, 16
        %v5357 = vpop.permute.xlu0 %5356
        %5358 = vrot.lane.b32.xlu0 %v4773, 16
        %v5359 = vpop.permute.xlu0 %5358
        %5360 = vrot.lane.b32.xlu0 %v4814, 16
        %v5361 = vpop.permute.xlu0 %5360
        %5362 = vrot.lane.b32.xlu0 %v4817, 16
        %v5363 = vpop.permute.xlu0 %5362
        %5364 = vrot.lane.b32.xlu0 %v4858, 16
        %v5365 = vpop.permute.xlu0 %5364
        %5366 = vrot.lane.b32.xlu0 %v4861, 16
        %v5367 = vpop.permute.xlu0 %5366
        %5368 = vrot.lane.b32.xlu0 %v4902, 16
        %v5369 = vpop.permute.xlu0 %5368
        %5370 = vrot.lane.b32.xlu0 %v4905, 16
        %v5371 = vpop.permute.xlu0 %5370
        %5404 = vrot.lane.b32.xlu0 %v4946, 24
        %v5405 = vpop.permute.xlu0 %5404
        %5406 = vrot.lane.b32.xlu0 %v4949, 24
        %v5407 = vpop.permute.xlu0 %5406
        %5408 = vrot.lane.b32.xlu0 %v4990, 24
        %v5409 = vpop.permute.xlu0 %5408
        %5410 = vrot.lane.b32.xlu0 %v4993, 24
        %v5411 = vpop.permute.xlu0 %5410
        %5412 = vrot.lane.b32.xlu0 %v5034, 24
        %v5413 = vpop.permute.xlu0 %5412
        %5414 = vrot.lane.b32.xlu0 %v5037, 24
        %v5415 = vpop.permute.xlu0 %5414
        %5416 = vrot.lane.b32.xlu0 %v5078, 24
        %v5417 = vpop.permute.xlu0 %5416
        %5418 = vrot.lane.b32.xlu0 %v5081, 24
        %v5419 = vpop.permute.xlu0 %5418
        %5420 = vrot.lane.b32.xlu0 %v5122, 24
        %v5421 = vpop.permute.xlu0 %5420
        %5422 = vrot.lane.b32.xlu0 %v5125, 24
        %v5423 = vpop.permute.xlu0 %5422
        %5424 = vrot.lane.b32.xlu0 %v5166, 24
        %v5425 = vpop.permute.xlu0 %5424
        %5426 = vrot.lane.b32.xlu0 %v5169, 24
        %v5427 = vpop.permute.xlu0 %5426
        %5428 = vrot.lane.b32.xlu0 %v5210, 24
        %v5429 = vpop.permute.xlu0 %5428
        %5430 = vrot.lane.b32.xlu0 %v5213, 24
        %v5431 = vpop.permute.xlu0 %5430
        %5432 = vrot.lane.b32.xlu0 %v5254, 24
        %v5433 = vpop.permute.xlu0 %5432
        %5434 = vrot.lane.b32.xlu0 %v5257, 24
        %v5435 = vpop.permute.xlu0 %5434
        %v5452 = vsel %vm1610, %v3890, %v5277
        %v5453 = vsel %vm1610, %v3893, %v5279
        %v5454 = vsel %vm1610, %v3934, %v5281
        %v5455 = vsel %vm1610, %v3937, %v5283
        %v5456 = vsel %vm1610, %v3978, %v5285
        %v5457 = vsel %vm1610, %v3981, %v5287
        %v5458 = vsel %vm1610, %v4022, %v5289
        %v5459 = vsel %vm1610, %v4025, %v5291
        %v5460 = vsel %vm1610, %v4066, %v5293
        %v5461 = vsel %vm1610, %v4069, %v5295
        %v5462 = vsel %vm1610, %v4110, %v5297
        %v5463 = vsel %vm1610, %v4113, %v5299
        %v5464 = vsel %vm1610, %v4154, %v5301
        %v5465 = vsel %vm1610, %v4157, %v5303
        %v5466 = vsel %vm1610, %v4198, %v5305
        %v5467 = vsel %vm1610, %v4201, %v5307
        %v5468 = vsel %vm3115, %v5452, %v5341
        %v5469 = vsel %vm3115, %v5453, %v5343
        %v5470 = vsel %vm3115, %v5454, %v5345
        %v5471 = vsel %vm3115, %v5455, %v5347
        %v5472 = vsel %vm3115, %v5456, %v5349
        %v5473 = vsel %vm3115, %v5457, %v5351
        %v5474 = vsel %vm3115, %v5458, %v5353
        %v5475 = vsel %vm3115, %v5459, %v5355
        %v5476 = vsel %vm3115, %v5460, %v5357
        %v5477 = vsel %vm3115, %v5461, %v5359
        %v5478 = vsel %vm3115, %v5462, %v5361
        %v5479 = vsel %vm3115, %v5463, %v5363
        %v5480 = vsel %vm3115, %v5464, %v5365
        %v5481 = vsel %vm3115, %v5465, %v5367
        %v5482 = vsel %vm3115, %v5466, %v5369
        %v5483 = vsel %vm3115, %v5467, %v5371
        %vm5484 = vcmask 195584
        %v5485 = vsel %vm5484, %v5468, %v5405
        %v5486 = vsel %vm5484, %v5469, %v5407
        %v5487 = vsel %vm5484, %v5470, %v5409
        %v5488 = vsel %vm5484, %v5471, %v5411
        %v5489 = vsel %vm5484, %v5472, %v5413
        %v5490 = vsel %vm5484, %v5473, %v5415
        %v5491 = vsel %vm5484, %v5474, %v5417
        %v5492 = vsel %vm5484, %v5475, %v5419
        %v5493 = vsel %vm5484, %v5476, %v5421
        %v5494 = vsel %vm5484, %v5477, %v5423
        %v5495 = vsel %vm5484, %v5478, %v5425
        %v5496 = vsel %vm5484, %v5479, %v5427
        %v5497 = vsel %vm5484, %v5480, %v5429
        %v5498 = vsel %vm5484, %v5481, %v5431
        %v5499 = vsel %vm5484, %v5482, %v5433
        %v5500 = vsel %vm5484, %v5483, %v5435
        %v5501 = vpack.c.bf16 %v5486, %v5485
        %v5502 = vpack.c.bf16 %v5488, %v5487
        %v5503 = vpack.c.bf16 %v5490, %v5489
        %v5504 = vpack.c.bf16 %v5492, %v5491
        %v5505 = vpack.c.bf16 %v5494, %v5493
        %v5506 = vpack.c.bf16 %v5496, %v5495
        %v5507 = vpack.c.bf16 %v5498, %v5497
        %v5508 = vpack.c.bf16 %v5500, %v5499
        %v5509 = vld [vmem:[#allocation13] sm:$0xf]
        %v5510 = vld [vmem:[#allocation13 + $0x4] sm:$0xf]
        %v5511 = vld [vmem:[#allocation13 + $0x8] sm:$0xf]
        %v5512 = vld [vmem:[#allocation13 + $0xc] sm:$0xf]
        %v5513 = vld [vmem:[%s8] sm:$0x1]
        %v5515 = vlaneseq
        %v5516 = vshrl.u32 %v5515, 7
        %v5517 = vsub.s32 0, %v5516
        %v5518 = vrot.slane %v5513, %v5517
        %v5524 = vunpack.c.l.b16 %v5509
        %v5525 = vunpack.c.l.b16 %v5510
        %v5526 = vunpack.c.l.b16 %v5511
        %v5527 = vunpack.c.l.b16 %v5512
        %v5528 = vpack.c.b16 %v5525, %v5524
        %v5529 = vpack.c.b16 %v5527, %v5526
        %v5533 = vsel %vm620, %v5501, 0
        %v5536 = vsel %vm620, %v5502, 0
        %v5539 = vsel %vm620, %v5503, 0
        %v5542 = vsel %vm620, %v5504, 0
        %v5545 = vsel %vm620, %v5505, 0
        %v5548 = vsel %vm620, %v5506, 0
        %v5551 = vsel %vm620, %v5507, 0
        %v5554 = vsel %vm620, %v5508, 0
        %5556 = vmatprep.subr.bf16.mxu0 0
        %5557 = vmatpush1.bf16.msra.mxu0 %v5528
        %5558 = vmatprep.subr.bf16.mxu0 0
        %5559 = vmatpush1.bf16.msra.mxu0 %v5529
        %5560 = vmatprep.subr.bf16.mxu0 0
        %5561 = vmatpush1.bf16.msra.mxu0 0
        %5562 = vmatprep.subr.bf16.mxu0 0
        %5563 = vmatpush1.bf16.msra.mxu0 0
        %5564 = vmatprep.subr.bf16.mxu0 0
        %5565 = vmatpush1.bf16.msra.mxu0 0
        %5566 = vmatprep.subr.bf16.mxu0 0
        %5567 = vmatpush1.bf16.msra.mxu0 0
        %5568 = vmatprep.subr.bf16.mxu0 0
        %5569 = vmatpush1.bf16.msra.mxu0 0
        %5570 = vmatprep.subr.bf16.mxu0 0
        %5571 = vmatpush1.bf16.msra.mxu0 0
        %5572 = vmatprep.subr.bf16.mxu0 0
        %5573 = vmatpush1.bf16.msra.mxu0 0
        %5574 = vmatprep.subr.bf16.mxu0 0
        %5575 = vmatpush1.bf16.msra.mxu0 0
        %5576 = vmatprep.subr.bf16.mxu0 0
        %5577 = vmatpush1.bf16.msra.mxu0 0
        %5578 = vmatprep.subr.bf16.mxu0 0
        %5579 = vmatpush1.bf16.msra.mxu0 0
        %5580 = vmatprep.subr.bf16.mxu0 0
        %5581 = vmatpush1.bf16.msra.mxu0 0
        %5582 = vmatprep.subr.bf16.mxu0 0
        %5583 = vmatpush1.bf16.msra.mxu0 0
        %5584 = vmatprep.subr.bf16.mxu0 0
        %5585 = vmatpush1.bf16.msra.mxu0 0
        %5586 = vmatprep.subr.bf16.mxu0 0
        %5587 = vmatpush1.bf16.msra.mxu0 0
        %5588 = vmatprep.mubr.bf16.mxu0 0
        %5589 = vmatmul.mubr.bf16.gmra.mrb[0].mxu0 %v5533
        %v5590 = vpop.f32.mrb[0].mxu0
        %v5591 = vadd.f32 %v5518, %v5590
        %v5592 = vpop.f32.mrb[0].mxu0
        %v5593 = vpop.f32.mrb[0].mxu0
        %v5594 = vadd.f32 %v5518, %v5593
        %v5595 = vpop.f32.mrb[0].mxu0
        %5596 = vmatprep.mubr.bf16.mxu0 0
        %5597 = vmatmul.mubr.bf16.gmra.mrb[0].mxu0 %v5536
        %v5598 = vpop.f32.mrb[0].mxu0
        %v5599 = vadd.f32 %v5518, %v5598
        %v5600 = vpop.f32.mrb[0].mxu0
        %v5601 = vpop.f32.mrb[0].mxu0
        %v5602 = vadd.f32 %v5518, %v5601
        %v5603 = vpop.f32.mrb[0].mxu0
        %5604 = vmatprep.mubr.bf16.mxu0 0
        %5605 = vmatmul.mubr.bf16.gmra.mrb[0].mxu0 %v5539
        %v5606 = vpop.f32.mrb[0].mxu0
        %v5607 = vadd.f32 %v5518, %v5606
        %v5608 = vpop.f32.mrb[0].mxu0
        %v5609 = vpop.f32.mrb[0].mxu0
        %v5610 = vadd.f32 %v5518, %v5609
        %v5611 = vpop.f32.mrb[0].mxu0
        %5612 = vmatprep.mubr.bf16.mxu0 0
        %5613 = vmatmul.mubr.bf16.gmra.mrb[0].mxu0 %v5542
        %v5614 = vpop.f32.mrb[0].mxu0
        %v5615 = vadd.f32 %v5518, %v5614
        %v5616 = vpop.f32.mrb[0].mxu0
        %v5617 = vpop.f32.mrb[0].mxu0
        %v5618 = vadd.f32 %v5518, %v5617
        %v5619 = vpop.f32.mrb[0].mxu0
        %5620 = vmatprep.mubr.bf16.mxu0 0
        %5621 = vmatmul.mubr.bf16.gmra.mrb[0].mxu0 %v5545
        %v5622 = vpop.f32.mrb[0].mxu0
        %v5623 = vadd.f32 %v5518, %v5622
        %v5624 = vpop.f32.mrb[0].mxu0
        %v5625 = vpop.f32.mrb[0].mxu0
        %v5626 = vadd.f32 %v5518, %v5625
        %v5627 = vpop.f32.mrb[0].mxu0
        %5628 = vmatprep.mubr.bf16.mxu0 0
        %5629 = vmatmul.mubr.bf16.gmra.mrb[0].mxu0 %v5548
        %v5630 = vpop.f32.mrb[0].mxu0
        %v5631 = vadd.f32 %v5518, %v5630
        %v5632 = vpop.f32.mrb[0].mxu0
        %v5633 = vpop.f32.mrb[0].mxu0
        %v5634 = vadd.f32 %v5518, %v5633
        %v5635 = vpop.f32.mrb[0].mxu0
        %5636 = vmatprep.mubr.bf16.mxu0 0
        %5637 = vmatmul.mubr.bf16.gmra.mrb[0].mxu0 %v5551
        %v5638 = vpop.f32.mrb[0].mxu0
        %v5639 = vadd.f32 %v5518, %v5638
        %v5640 = vpop.f32.mrb[0].mxu0
        %v5641 = vpop.f32.mrb[0].mxu0
        %v5642 = vadd.f32 %v5518, %v5641
        %v5643 = vpop.f32.mrb[0].mxu0
        %5644 = vmatprep.mubr.bf16.mxu0 0
        %5645 = vmatmul.mubr.bf16.gmra.mrb[0].mxu0 %v5554
        %v5646 = vpop.f32.mrb[0].mxu0
        %v5647 = vadd.f32 %v5518, %v5646
        %v5648 = vpop.f32.mrb[0].mxu0
        %v5649 = vpop.f32.mrb[0].mxu0
        %v5650 = vadd.f32 %v5518, %v5649
        %v5651 = vpop.f32.mrb[0].mxu0
        %5652 = vdwg.mxu0
        %v5653 = vadd.f32 %v548, %v5591
        %v5654 = vadd.f32 %v549, %v5594
        %v5655 = vadd.f32 %v550, %v5599
        %v5656 = vadd.f32 %v551, %v5602
        %v5657 = vadd.f32 %v552, %v5607
        %v5658 = vadd.f32 %v553, %v5610
        %v5659 = vadd.f32 %v554, %v5615
        %v5660 = vadd.f32 %v555, %v5618
        %v5661 = vadd.f32 %v556, %v5623
        %v5662 = vadd.f32 %v557, %v5626
        %v5663 = vadd.f32 %v558, %v5631
        %v5664 = vadd.f32 %v559, %v5634
        %v5665 = vadd.f32 %v560, %v5639
        %v5666 = vadd.f32 %v561, %v5642
        %v5667 = vadd.f32 %v562, %v5647
        %v5668 = vadd.f32 %v563, %v5650
        %v5669 = vsel %vm620, %v5653, 0.0
        %5670 = vadd.xlane.f32.xlu0 %v5669
        %v5671 = vpop.xlane.xlu0 %5670
        %v5672 = vsel %vm620, %v5654, 0.0
        %5673 = vadd.xlane.f32.xlu0 %v5672
        %v5674 = vpop.xlane.xlu0 %5673
        %v5675 = vsel %vm620, %v5655, 0.0
        %5676 = vadd.xlane.f32.xlu0 %v5675
        %v5677 = vpop.xlane.xlu0 %5676
        %v5678 = vsel %vm620, %v5656, 0.0
        %5679 = vadd.xlane.f32.xlu0 %v5678
        %v5680 = vpop.xlane.xlu0 %5679
        %v5681 = vsel %vm620, %v5657, 0.0
        %5682 = vadd.xlane.f32.xlu0 %v5681
        %v5683 = vpop.xlane.xlu0 %5682
        %v5684 = vsel %vm620, %v5658, 0.0
        %5685 = vadd.xlane.f32.xlu0 %v5684
        %v5686 = vpop.xlane.xlu0 %5685
        %v5687 = vsel %vm620, %v5659, 0.0
        %5688 = vadd.xlane.f32.xlu0 %v5687
        %v5689 = vpop.xlane.xlu0 %5688
        %v5690 = vsel %vm620, %v5660, 0.0
        %5691 = vadd.xlane.f32.xlu0 %v5690
        %v5692 = vpop.xlane.xlu0 %5691
        %v5693 = vsel %vm620, %v5661, 0.0
        %5694 = vadd.xlane.f32.xlu0 %v5693
        %v5695 = vpop.xlane.xlu0 %5694
        %v5696 = vsel %vm620, %v5662, 0.0
        %5697 = vadd.xlane.f32.xlu0 %v5696
        %v5698 = vpop.xlane.xlu0 %5697
        %v5699 = vsel %vm620, %v5663, 0.0
        %5700 = vadd.xlane.f32.xlu0 %v5699
        %v5701 = vpop.xlane.xlu0 %5700
        %v5702 = vsel %vm620, %v5664, 0.0
        %5703 = vadd.xlane.f32.xlu0 %v5702
        %v5704 = vpop.xlane.xlu0 %5703
        %v5705 = vsel %vm620, %v5665, 0.0
        %5706 = vadd.xlane.f32.xlu0 %v5705
        %v5707 = vpop.xlane.xlu0 %5706
        %v5708 = vsel %vm620, %v5666, 0.0
        %5709 = vadd.xlane.f32.xlu0 %v5708
        %v5710 = vpop.xlane.xlu0 %5709
        %v5711 = vsel %vm620, %v5667, 0.0
        %5712 = vadd.xlane.f32.xlu0 %v5711
        %v5713 = vpop.xlane.xlu0 %5712
        %v5714 = vsel %vm620, %v5668, 0.0
        %5715 = vadd.xlane.f32.xlu0 %v5714
        %v5716 = vpop.xlane.xlu0 %5715
        %v5717 = vrcp.pop 32.0
        %v5718 = vmul.f32 %v5671, %v5717
        %v5719 = vmul.f32 %v5674, %v5717
        %v5720 = vmul.f32 %v5677, %v5717
        %v5721 = vmul.f32 %v5680, %v5717
        %v5722 = vmul.f32 %v5683, %v5717
        %v5723 = vmul.f32 %v5686, %v5717
        %v5724 = vmul.f32 %v5689, %v5717
        %v5725 = vmul.f32 %v5692, %v5717
        %v5726 = vmul.f32 %v5695, %v5717
        %v5727 = vmul.f32 %v5698, %v5717
        %v5728 = vmul.f32 %v5701, %v5717
        %v5729 = vmul.f32 %v5704, %v5717
        %v5730 = vmul.f32 %v5707, %v5717
        %v5731 = vmul.f32 %v5710, %v5717
        %v5732 = vmul.f32 %v5713, %v5717
        %v5733 = vmul.f32 %v5716, %v5717
        %v5734 = vsub.f32 %v5653, %v5718
        %v5735 = vsub.f32 %v5654, %v5719
        %v5736 = vsub.f32 %v5655, %v5720
        %v5737 = vsub.f32 %v5656, %v5721
        %v5738 = vsub.f32 %v5657, %v5722
        %v5739 = vsub.f32 %v5658, %v5723
        %v5740 = vsub.f32 %v5659, %v5724
        %v5741 = vsub.f32 %v5660, %v5725
        %v5742 = vsub.f32 %v5661, %v5726
        %v5743 = vsub.f32 %v5662, %v5727
        %v5744 = vsub.f32 %v5663, %v5728
        %v5745 = vsub.f32 %v5664, %v5729
        %v5746 = vsub.f32 %v5665, %v5730
        %v5747 = vsub.f32 %v5666, %v5731
        %v5748 = vsub.f32 %v5667, %v5732
        %v5749 = vsub.f32 %v5668, %v5733
        %v5750 = vmul.f32 %v5734, %v5734
        %v5751 = vmul.f32 %v5735, %v5735
        %v5752 = vmul.f32 %v5736, %v5736
        %v5753 = vmul.f32 %v5737, %v5737
        %v5754 = vmul.f32 %v5738, %v5738
        %v5755 = vmul.f32 %v5739, %v5739
        %v5756 = vmul.f32 %v5740, %v5740
        %v5757 = vmul.f32 %v5741, %v5741
        %v5758 = vmul.f32 %v5742, %v5742
        %v5759 = vmul.f32 %v5743, %v5743
        %v5760 = vmul.f32 %v5744, %v5744
        %v5761 = vmul.f32 %v5745, %v5745
        %v5762 = vmul.f32 %v5746, %v5746
        %v5763 = vmul.f32 %v5747, %v5747
        %v5764 = vmul.f32 %v5748, %v5748
        %v5765 = vmul.f32 %v5749, %v5749
        %v5766 = vsel %vm620, %v5750, 0.0
        %5767 = vadd.xlane.f32.xlu0 %v5766
        %v5768 = vpop.xlane.xlu0 %5767
        %v5769 = vsel %vm620, %v5751, 0.0
        %5770 = vadd.xlane.f32.xlu0 %v5769
        %v5771 = vpop.xlane.xlu0 %5770
        %v5772 = vsel %vm620, %v5752, 0.0
        %5773 = vadd.xlane.f32.xlu0 %v5772
        %v5774 = vpop.xlane.xlu0 %5773
        %v5775 = vsel %vm620, %v5753, 0.0
        %5776 = vadd.xlane.f32.xlu0 %v5775
        %v5777 = vpop.xlane.xlu0 %5776
        %v5778 = vsel %vm620, %v5754, 0.0
        %5779 = vadd.xlane.f32.xlu0 %v5778
        %v5780 = vpop.xlane.xlu0 %5779
        %v5781 = vsel %vm620, %v5755, 0.0
        %5782 = vadd.xlane.f32.xlu0 %v5781
        %v5783 = vpop.xlane.xlu0 %5782
        %v5784 = vsel %vm620, %v5756, 0.0
        %5785 = vadd.xlane.f32.xlu0 %v5784
        %v5786 = vpop.xlane.xlu0 %5785
        %v5787 = vsel %vm620, %v5757, 0.0
        %5788 = vadd.xlane.f32.xlu0 %v5787
        %v5789 = vpop.xlane.xlu0 %5788
        %v5790 = vsel %vm620, %v5758, 0.0
        %5791 = vadd.xlane.f32.xlu0 %v5790
        %v5792 = vpop.xlane.xlu0 %5791
        %v5793 = vsel %vm620, %v5759, 0.0
        %5794 = vadd.xlane.f32.xlu0 %v5793
        %v5795 = vpop.xlane.xlu0 %5794
        %v5796 = vsel %vm620, %v5760, 0.0
        %5797 = vadd.xlane.f32.xlu0 %v5796
        %v5798 = vpop.xlane.xlu0 %5797
        %v5799 = vsel %vm620, %v5761, 0.0
        %5800 = vadd.xlane.f32.xlu0 %v5799
        %v5801 = vpop.xlane.xlu0 %5800
        %v5802 = vsel %vm620, %v5762, 0.0
        %5803 = vadd.xlane.f32.xlu0 %v5802
        %v5804 = vpop.xlane.xlu0 %5803
        %v5805 = vsel %vm620, %v5763, 0.0
        %5806 = vadd.xlane.f32.xlu0 %v5805
        %v5807 = vpop.xlane.xlu0 %5806
        %v5808 = vsel %vm620, %v5764, 0.0
        %5809 = vadd.xlane.f32.xlu0 %v5808
        %v5810 = vpop.xlane.xlu0 %5809
        %v5811 = vsel %vm620, %v5765, 0.0
        %5812 = vadd.xlane.f32.xlu0 %v5811
        %v5813 = vpop.xlane.xlu0 %5812
        %v5814 = vmul.f32 %v5768, %v5717
        %v5815 = vmul.f32 %v5771, %v5717
        %v5816 = vmul.f32 %v5774, %v5717
        %v5817 = vmul.f32 %v5777, %v5717
        %v5818 = vmul.f32 %v5780, %v5717
        %v5819 = vmul.f32 %v5783, %v5717
        %v5820 = vmul.f32 %v5786, %v5717
        %v5821 = vmul.f32 %v5789, %v5717
        %v5822 = vmul.f32 %v5792, %v5717
        %v5823 = vmul.f32 %v5795, %v5717
        %v5824 = vmul.f32 %v5798, %v5717
        %v5825 = vmul.f32 %v5801, %v5717
        %v5826 = vmul.f32 %v5804, %v5717
        %v5827 = vmul.f32 %v5807, %v5717
        %v5828 = vmul.f32 %v5810, %v5717
        %v5829 = vmul.f32 %v5813, %v5717
        %v5830 = vadd.f32 %v5814, 1e-06
        %v5831 = vadd.f32 %v5815, 1e-06
        %v5832 = vadd.f32 %v5816, 1e-06
        %v5833 = vadd.f32 %v5817, 1e-06
        %v5834 = vadd.f32 %v5818, 1e-06
        %v5835 = vadd.f32 %v5819, 1e-06
        %v5836 = vadd.f32 %v5820, 1e-06
        %v5837 = vadd.f32 %v5821, 1e-06
        %v5838 = vadd.f32 %v5822, 1e-06
        %v5839 = vadd.f32 %v5823, 1e-06
        %v5840 = vadd.f32 %v5824, 1e-06
        %v5841 = vadd.f32 %v5825, 1e-06
        %v5842 = vadd.f32 %v5826, 1e-06
        %v5843 = vadd.f32 %v5827, 1e-06
        %v5844 = vadd.f32 %v5828, 1e-06
        %v5845 = vadd.f32 %v5829, 1e-06
        %v5846 = vrsqrt.pop %v5830
        %v5847 = vrsqrt.pop %v5831
        %v5848 = vrsqrt.pop %v5832
        %v5849 = vrsqrt.pop %v5833
        %v5850 = vrsqrt.pop %v5834
        %v5851 = vrsqrt.pop %v5835
        %v5852 = vrsqrt.pop %v5836
        %v5853 = vrsqrt.pop %v5837
        %v5854 = vrsqrt.pop %v5838
        %v5855 = vrsqrt.pop %v5839
        %v5856 = vrsqrt.pop %v5840
        %v5857 = vrsqrt.pop %v5841
        %v5858 = vrsqrt.pop %v5842
        %v5859 = vrsqrt.pop %v5843
        %v5860 = vrsqrt.pop %v5844
        %v5861 = vrsqrt.pop %v5845
        %v5862 = vmul.f32 %v5734, %v5846
        %v5863 = vmul.f32 %v5735, %v5847
        %v5864 = vmul.f32 %v5736, %v5848
        %v5865 = vmul.f32 %v5737, %v5849
        %v5866 = vmul.f32 %v5738, %v5850
        %v5867 = vmul.f32 %v5739, %v5851
        %v5868 = vmul.f32 %v5740, %v5852
        %v5869 = vmul.f32 %v5741, %v5853
        %v5870 = vmul.f32 %v5742, %v5854
        %v5871 = vmul.f32 %v5743, %v5855
        %v5872 = vmul.f32 %v5744, %v5856
        %v5873 = vmul.f32 %v5745, %v5857
        %v5874 = vmul.f32 %v5746, %v5858
        %v5875 = vmul.f32 %v5747, %v5859
        %v5876 = vmul.f32 %v5748, %v5860
        %v5877 = vmul.f32 %v5749, %v5861
        %v5878 = vld [vmem:[%s9] sm:$0x1]
        %v5880 = vlaneseq
        %v5881 = vshrl.u32 %v5880, 7
        %v5882 = vsub.s32 0, %v5881
        %v5883 = vrot.slane %v5878, %v5882
        %v5885 = vmul.f32 %v5862, %v5883
        %v5886 = vmul.f32 %v5863, %v5883
        %v5887 = vmul.f32 %v5864, %v5883
        %v5888 = vmul.f32 %v5865, %v5883
        %v5889 = vmul.f32 %v5866, %v5883
        %v5890 = vmul.f32 %v5867, %v5883
        %v5891 = vmul.f32 %v5868, %v5883
        %v5892 = vmul.f32 %v5869, %v5883
        %v5893 = vmul.f32 %v5870, %v5883
        %v5894 = vmul.f32 %v5871, %v5883
        %v5895 = vmul.f32 %v5872, %v5883
        %v5896 = vmul.f32 %v5873, %v5883
        %v5897 = vmul.f32 %v5874, %v5883
        %v5898 = vmul.f32 %v5875, %v5883
        %v5899 = vmul.f32 %v5876, %v5883
        %v5900 = vmul.f32 %v5877, %v5883
        %v5901 = vld [vmem:[%s10] sm:$0x1]
        %v5903 = vlaneseq
        %v5904 = vshrl.u32 %v5903, 7
        %v5905 = vsub.s32 0, %v5904
        %v5906 = vrot.slane %v5901, %v5905
        %v5908 = vadd.f32 %v5885, %v5906
        %v5909 = vadd.f32 %v5886, %v5906
        %v5910 = vadd.f32 %v5887, %v5906
        %v5911 = vadd.f32 %v5888, %v5906
        %v5912 = vadd.f32 %v5889, %v5906
        %v5913 = vadd.f32 %v5890, %v5906
        %v5914 = vadd.f32 %v5891, %v5906
        %v5915 = vadd.f32 %v5892, %v5906
        %v5916 = vadd.f32 %v5893, %v5906
        %v5917 = vadd.f32 %v5894, %v5906
        %v5918 = vadd.f32 %v5895, %v5906
        %v5919 = vadd.f32 %v5896, %v5906
        %v5920 = vadd.f32 %v5897, %v5906
        %v5921 = vadd.f32 %v5898, %v5906
        %v5922 = vadd.f32 %v5899, %v5906
        %v5923 = vadd.f32 %v5900, %v5906
        %5924 = vst.msk [vmem:[%s542] sm:$0xff] %vm620, %v5908
        %5925 = vst.msk [vmem:[%s542 + $0x8] sm:$0xff] %vm620, %v5909
        %5926 = vst.msk [vmem:[%s542 + $0x10] sm:$0xff] %vm620, %v5910
        %5927 = vst.msk [vmem:[%s542 + $0x18] sm:$0xff] %vm620, %v5911
        %5928 = vst.msk [vmem:[%s542 + $0x20] sm:$0xff] %vm620, %v5912
        %5929 = vst.msk [vmem:[%s542 + $0x28] sm:$0xff] %vm620, %v5913
        %5930 = vst.msk [vmem:[%s542 + $0x30] sm:$0xff] %vm620, %v5914
        %5931 = vst.msk [vmem:[%s542 + $0x38] sm:$0xff] %vm620, %v5915
        %5932 = vst.msk [vmem:[%s542 + $0x40] sm:$0xff] %vm620, %v5916
        %5933 = vst.msk [vmem:[%s542 + $0x48] sm:$0xff] %vm620, %v5917
        %5934 = vst.msk [vmem:[%s542 + $0x50] sm:$0xff] %vm620, %v5918
        %5935 = vst.msk [vmem:[%s542 + $0x58] sm:$0xff] %vm620, %v5919
        %5936 = vst.msk [vmem:[%s542 + $0x60] sm:$0xff] %vm620, %v5920
        %5937 = vst.msk [vmem:[%s542 + $0x68] sm:$0xff] %vm620, %v5921
        %5938 = vst.msk [vmem:[%s542 + $0x70] sm:$0xff] %vm620, %v5922
        %5939 = vst.msk [vmem:[%s542 + $0x78] sm:$0xff] %vm620, %v5923
        %s5940 = sand.u32 %s287, 1
        %s5941 = scalar_lea.sflag [#allocation4], %s5940
        %s5942 = sand.u32 %s287, 1
        %s5943 = smul.addr %s5942, 128
        %s5944 = scalar_lea.vmem [#allocation14], %s5943
        // Predicated region
        $region93: #{tpu_custom_call.1} parent=63 // pred_check
          %p5945 = pneg %p297
        $region94: #{tpu_custom_call.1} parent=63 // pred_check_branch
          %5947 = sbr.rel (%p5945) target = $region96
        $region95: #{tpu_custom_call.1} parent=63 // pred_region
          %s5948 = smul.u32 8, %s33
          %s5950 = ssub.s32 2048, 2048
          %5951 = vsyncadd %s5941, %s5950
          %s5952 = smul.addr %s5948, 2
          %s5953 = smul.addr %s5952, 128
          %s5954 = scalar_lea.hbm %s11, %s5953
          %s5955 = sshll.u32 %s5944, 4
          %s5956 = int_to_ptr.vmem [resolvable:$true] %s5955
          %5961 = dma.vmem_to_hbm [thread:$0]  %s5956, 2048, %s5954, %s5941, 128, 128, 8
        $region96: #{tpu_custom_call.1} parent=63 // pred_fallthru
          _
      $region64: #{tpu_custom_call.1} parent=5 // pred_fallthru
        _
      %p5962 = scmp.le.s32.totalorder 2, %s28
      // Predicated region
      $region97: #{tpu_custom_call.1} parent=5 // pred_check
        %p5963 = pneg %p5962
      $region98: #{tpu_custom_call.1} parent=5 // pred_check_branch
        %5965 = sbr.rel (%p5963) target = $region100
      $region99: #{tpu_custom_call.1} parent=5 // pred_region
        %s5966 = ssub.s32 %s28, 2
        // Predicated region
        $region101: #{tpu_custom_call.1} parent=99 // pred_check
          %p5967 = pneg %p303
        $region102: #{tpu_custom_call.1} parent=99 // pred_check_branch
          %5969 = sbr.rel (%p5967) target = $region104
        $region103: #{tpu_custom_call.1} parent=99 // pred_region
          %s5970 = sand.u32 %s288, 1
          %s5971 = scalar_lea.sflag [#allocation4], %s5970
          %s5972 = sand.u32 %s288, 1
          %s5973 = smul.addr %s5972, 128
          %s5974 = scalar_lea.vmem [#allocation14], %s5973
          %5975 = dma.done %s5971, 2048
        $region104: #{tpu_custom_call.1} parent=99 // pred_fallthru
          _
      $region100: #{tpu_custom_call.1} parent=5 // pred_fallthru
        _
    $region6: #{tpu_custom_call.1} parent=1 // loop_footer
      %s32 = sadd.s32 1, %s28
    $region7: #{tpu_custom_call.1} parent=1 // loop_footer_branch
      %27 = sbr.rel target = $region3
    $region8: #{tpu_custom_call.1} parent=1 // loop_exit
      _
    %5976 = vsyncpa [#allocation3], 1
    %s5977 = scalar_lea.sflag [#allocation3], 1
    %5978 = vsyncpa %s5977, 1
    %5979 = vsyncpa [#allocation6], 1
    %s5980 = scalar_lea.sflag [#allocation6], 1
    %5981 = vsyncpa %s5980, 1
    %5982 = vsyncpa [#allocation9], 1
    %5983 = vsyncpa [#allocation12], 1
    %5984 = vsyncpa [#allocation4], 1
    %s5985 = scalar_lea.sflag [#allocation4], 1
    %5986 = vsyncpa %s5985, 1

</llo_original>
